<compile_context>
chip_gen: v7x
topology: tpu7x:2x2x1
jax: 0.10.0
libtpu: 0.0.40
codegen_flags: <defaults>
</compile_context>

<pallas_src>
import functools
import math

import numpy as np

import jax
import jax.numpy as jnp
from jax.experimental import pallas as pl
from jax.experimental.pallas import tpu as pltpu


_VMEM = pl.BlockSpec(memory_space=pltpu.MemorySpace.VMEM)


# ----------------------------------------------------------------------------
# The single fused kernel
# ----------------------------------------------------------------------------
def _vggfc_fused_kernel(
        x_ref,                      # (N*H0, W0*C0) input activation slab
        wb_ref,                     # (9, 64, 128) banded conv weights [3*stage + kh]
        cb_ref,                     # (3, 1, 128)  conv bias rows (tiled over W)
        sh0_ref, sh1_ref, sh2_ref,  # (2, R, R)    row-shift matrices  [up, down]
        rs0_ref, rs1_ref, rs2_ref,  # (2, R/2, R)  pool row selectors  [even, odd]
        cs_ref,                     # (6, 128, 64) pool col selectors  [2*stage + parity]
        rsf_ref,                    # (H3, N, N*H3) classifier row selectors
        wf0_ref,                    # (H3, W3*C3, hidden) fc0 weight slabs (flatten folded in)
        bf0_ref,                    # (1, hidden)
        wf1_ref, bf1_ref,           # (hidden, hidden), (1, hidden)
        wh_ref, bh_ref,             # (hidden, hash_bit), (1, hash_bit)
        o_ref,                      # (N, hash_bit)
        *, scale, n_fc0_slabs):
    def mm(a, b):
        return jnp.dot(a, b, preferred_element_type=jnp.float32)

    sh_refs = (sh0_ref, sh1_ref, sh2_ref)
    rs_refs = (rs0_ref, rs1_ref, rs2_ref)

    a = x_ref[...]                                   # (N*H, W*Cin)
    for s in range(3):
        # --- 3x3 conv (stride 1, pad 1) as banded matmuls: vertical taps via
        #     row-shift matrices, horizontal taps folded into the band. -------
        up = mm(sh_refs[s][0], a)                    # row r <- row r-1 (0 at image top)
        dn = mm(sh_refs[s][1], a)                    # row r <- row r+1 (0 at image bottom)
        y = (mm(up, wb_ref[3 * s + 0])
             + mm(a,  wb_ref[3 * s + 1])
             + mm(dn, wb_ref[3 * s + 2]))
        y = jnp.maximum(y + cb_ref[s], 0.0)          # bias + ReLU        (N*H, W*Cout)

        # --- fused 2x2/2 maxpool: even/odd row & column selections + max. ----
        v = jnp.maximum(mm(rs_refs[s][0], y),
                        mm(rs_refs[s][1], y))                        # (N*H/2, W*Cout)
        a = jnp.maximum(mm(v, cs_ref[2 * s + 0]),
                        mm(v, cs_ref[2 * s + 1]))                    # (N*H/2, W/2*Cout)

    # --- classifier: flatten folded into fc0 (row-select x weight slab), then
    #     fc0+ReLU, fc1+ReLU (Dropout == identity), hash + tanh(scale*y). -----
    acc = mm(mm(rsf_ref[0], a), wf0_ref[0])
    for hh in range(1, n_fc0_slabs):
        acc = acc + mm(mm(rsf_ref[hh], a), wf0_ref[hh])
    h = jnp.maximum(acc + bf0_ref[...], 0.0)
    h = jnp.maximum(mm(h, wf1_ref[...]) + bf1_ref[...], 0.0)
    yh = mm(h, wh_ref[...]) + bh_ref[...]
    o_ref[...] = jnp.tanh(scale * yh).astype(o_ref.dtype)


# ----------------------------------------------------------------------------
# One-time host-side weight / structure preprocessing
# ----------------------------------------------------------------------------
def _banded_conv_weight(w_kh, W, Cin, Cout):
    """w_kh: (3, Cin, Cout) for a fixed kh.  Returns (W*Cin, W*Cout) band."""
    WB = np.zeros((W * Cin, W * Cout), np.float32)
    for w_out in range(W):
        for kw in range(3):
            w_in = w_out + kw - 1
            if 0 <= w_in < W:
                WB[w_in * Cin:(w_in + 1) * Cin,
                   w_out * Cout:(w_out + 1) * Cout] = w_kh[kw]
    return WB


def _row_shift_matrix(N, H, dh):
    """(N*H, N*H) with M[r, r+dh] = 1 when row r+dh is inside the same image."""
    R = N * H
    M = np.zeros((R, R), np.float32)
    for r in range(R):
        h = r % H
        if 0 <= h + dh < H:
            M[r, r + dh] = 1.0
    return M


def _pool_row_select(N, H, parity):
    """(N*H/2, N*H) selecting input row n*H + 2*ho + parity for output row n*Ho+ho."""
    Ho = H // 2
    M = np.zeros((N * Ho, N * H), np.float32)
    for n in range(N):
        for ho in range(Ho):
            M[n * Ho + ho, n * H + 2 * ho + parity] = 1.0
    return M


def _pool_col_select(W, C, parity):
    """(W*C, (W/2)*C) selecting column (2*wo+parity)*C + c for output wo*C + c."""
    Wo = W // 2
    M = np.zeros((W * C, Wo * C), np.float32)
    eye = np.eye(C, dtype=np.float32)
    for wo in range(Wo):
        M[(2 * wo + parity) * C:(2 * wo + parity) * C + C,
          wo * C:wo * C + C] = eye
    return M


def prepare_fused_inputs(params, *, batch, in_hw, chans):
    """One-time weight prep (would be cached alongside the params in real use)."""
    N = batch
    H = W = in_hw
    wb, cbias, shifts, rsels, csels = [], [], [], [], []
    for i in range(len(chans) - 1):
        Cin, Cout = chans[i], chans[i + 1]
        w = np.asarray(params[f"conv{i}_w"], np.float32)   # (3, 3, Cin, Cout)
        b = np.asarray(params[f"conv{i}_b"], np.float32)   # (Cout,)
        for kh in range(3):
            wb.append(_banded_conv_weight(w[kh], W, Cin, Cout))
        cbias.append(np.tile(b, W)[None, :])                               # (1, W*Cout)
        shifts.append(np.stack([_row_shift_matrix(N, H, -1),
                                _row_shift_matrix(N, H, +1)]))             # (2, R, R)
        rsels.append(np.stack([_pool_row_select(N, H, 0),
                               _pool_row_select(N, H, 1)]))                # (2, R/2, R)
        csels.append(_pool_col_select(W, Cout, 0))
        csels.append(_pool_col_select(W, Cout, 1))                         # (W*Cout, W/2*Cout)
        H //= 2
        W //= 2

    # classifier: fold the H*W*C flatten into per-h fc0 weight slabs.
    H3, W3, C3 = H, W, chans[-1]
    slab = W3 * C3
    rsf = np.zeros((H3, N, N * H3), np.float32)
    for hh in range(H3):
        for n in range(N):
            rsf[hh, n, n * H3 + hh] = 1.0
    wfc0 = np.asarray(params["fc0_w"], np.float32)          # (H3*W3*C3, hidden)
    wf0 = np.stack([wfc0[hh * slab:(hh + 1) * slab] for hh in range(H3)])

    args = [
        jnp.asarray(np.stack(wb)),                                   # (9, 64, 128)
        jnp.asarray(np.stack(cbias)),                                # (3, 1, 128)
        jnp.asarray(shifts[0]), jnp.asarray(shifts[1]), jnp.asarray(shifts[2]),
        jnp.asarray(rsels[0]), jnp.asarray(rsels[1]), jnp.asarray(rsels[2]),
        jnp.asarray(np.stack(csels)),                                # (6, 128, 64)
        jnp.asarray(rsf),                                            # (H3, N, N*H3)
        jnp.asarray(wf0),                                            # (H3, slab, hidden)
        jnp.asarray(np.asarray(params["fc0_b"], np.float32)[None, :]),
        jnp.asarray(np.asarray(params["fc1_w"], np.float32)),
        jnp.asarray(np.asarray(params["fc1_b"], np.float32)[None, :]),
        jnp.asarray(np.asarray(params["hash_w"], np.float32)),
        jnp.asarray(np.asarray(params["hash_b"], np.float32)[None, :]),
    ]
    return args, H3


# ----------------------------------------------------------------------------
# VGGFc (scaled-down) — parameter init + forward
# ----------------------------------------------------------------------------
def init_params(key, in_ch=4, hash_bit=16, hidden=32):
    """Deterministic synthetic parameters (stand-in for torchvision pretrained VGG)."""
    ks = jax.random.split(key, 9)
    p = {}
    chans = [in_ch, 8, 16, 32]
    for i in range(3):
        cin, cout = chans[i], chans[i + 1]
        p[f"conv{i}_w"] = 0.2 * jax.random.normal(ks[i], (3, 3, cin, cout), jnp.float32)
        p[f"conv{i}_b"] = 0.1 * jax.random.normal(ks[3 + i], (cout,), jnp.float32)
    feat_dim = chans[-1] * 2 * 2           # 32 * 2 * 2 = 128  (analog of 25088)
    p["fc0_w"] = 0.2 * jax.random.normal(ks[6], (feat_dim, hidden), jnp.float32)
    p["fc0_b"] = 0.05 * jax.random.normal(ks[7], (hidden,), jnp.float32)
    p["fc1_w"] = 0.2 * jax.random.normal(ks[8], (hidden, hidden), jnp.float32)
    p["fc1_b"] = 0.05 * jax.random.normal(jax.random.fold_in(key, 1), (hidden,), jnp.float32)
    # hash_layer: weight ~ N(0, 0.01), bias = 0   (matches the PyTorch init)
    p["hash_w"] = 0.01 * jax.random.normal(jax.random.fold_in(key, 2), (hidden, hash_bit), jnp.float32)
    p["hash_b"] = jnp.zeros((hash_bit,), jnp.float32)
    return p


def vggfc_forward(params, x_nchw, *, iter_num=0, init_scale=1.0, gamma=0.005,
                  power=0.5, step_size=200):
    """Eval-mode forward.  x_nchw: (N, C, H, W) like the PyTorch module."""
    # TODO(synk): training-mode side effects (iter_num increment, Dropout masks)
    # are not modeled; this is the inference path (Dropout == identity).
    n, c, h, w = x_nchw.shape
    chans = [c, 8, 16, 32]
    prep, n_slabs = prepare_fused_inputs(params, batch=n, in_hw=h, chans=chans)

    # scale schedule (iter_num = 0 -> scale = 1.0, as in a fresh module)
    if iter_num % step_size == 0:
        scale = init_scale * math.pow(1.0 + gamma * iter_num, power)
    else:
        scale = init_scale

    # one-time boundary layout change: NCHW -> (N*H, W*C) slab
    x2d = jnp.transpose(x_nchw, (0, 2, 3, 1)).reshape(n * h, w * c)
    hash_bit = params["hash_w"].shape[1]
    inputs = [x2d] + prep

    bytes_accessed = sum(int(a.size) * 4 for a in inputs) + n * hash_bit * 4
    cost = pl.CostEstimate(flops=4_400_000, transcendentals=n * hash_bit,
                           bytes_accessed=bytes_accessed)

    return pl.pallas_call(
        functools.partial(_vggfc_fused_kernel, scale=float(scale),
                          n_fc0_slabs=int(n_slabs)),
        out_shape=jax.ShapeDtypeStruct((n, hash_bit), jnp.float32),
        in_specs=[_VMEM] * len(inputs),
        out_specs=_VMEM,
        cost_estimate=cost,
    )(*inputs)


# ----------------------------------------------------------------------------
# Pure-JAX reference (same semantics, standard lax ops) for in-script checking
# ----------------------------------------------------------------------------
def reference_forward(params, x_nchw, *, iter_num=0, init_scale=1.0, gamma=0.005,
                      power=0.5, step_size=200):
    hi = jax.lax.Precision.HIGHEST
    x = jnp.transpose(x_nchw, (0, 2, 3, 1))          # NCHW -> NHWC
    for i in range(3):
        x = jax.lax.conv_general_dilated(
            x, params[f"conv{i}_w"], window_strides=(1, 1), padding="SAME",
            dimension_numbers=("NHWC", "HWIO", "NHWC"), precision=hi)
        x = jnp.maximum(x + params[f"conv{i}_b"], 0.0)
        x = jax.lax.reduce_window(x, -jnp.inf, jax.lax.max,
                                  (1, 2, 2, 1), (1, 2, 2, 1), "VALID")
    x = x.reshape(x.shape[0], -1)
    x = jnp.maximum(jnp.dot(x, params["fc0_w"], precision=hi) + params["fc0_b"], 0.0)
    x = jnp.maximum(jnp.dot(x, params["fc1_w"], precision=hi) + params["fc1_b"], 0.0)
    if iter_num % step_size == 0:
        scale = init_scale * math.pow(1.0 + gamma * iter_num, power)
    else:
        scale = init_scale
    y = jnp.dot(x, params["hash_w"], precision=hi) + params["hash_b"]
    return jnp.tanh(scale * y)


if __name__ == "__main__":
    key = jax.random.PRNGKey(0)
    k_param, k_x = jax.random.split(key)

    params = init_params(k_param, in_ch=4, hash_bit=16, hidden=32)
    x = jax.random.normal(k_x, (2, 4, 16, 16), jnp.float32)   # NCHW, like PyTorch

    y = vggfc_forward(params, x)
    y = jax.block_until_ready(y)

    assert y.shape == (2, 16), y.shape
    assert bool(jnp.all(jnp.isfinite(y)))
    assert bool(jnp.all(jnp.abs(y) <= 1.0))          # tanh range

    # numerical check against the standard-ops reference
    y_ref = jax.block_until_ready(reference_forward(params, x))
    np.testing.assert_allclose(np.asarray(y), np.asarray(y_ref),
                               rtol=5e-2, atol=1e-2)

    print("KERNEL_OK")
</pallas_src>

<mosaic_0001>
module attributes {stable_mosaic.version = 11 : i64} {
  func.func @_vggfc_fused_kernel(%arg0: memref<32x64xf32, #tpu.memory_space<vmem>>, %arg1: memref<9x64x128xf32, #tpu.memory_space<vmem>>, %arg2: memref<3x1x128xf32, #tpu.memory_space<vmem>>, %arg3: memref<2x32x32xf32, #tpu.memory_space<vmem>>, %arg4: memref<2x16x16xf32, #tpu.memory_space<vmem>>, %arg5: memref<2x8x8xf32, #tpu.memory_space<vmem>>, %arg6: memref<2x16x32xf32, #tpu.memory_space<vmem>>, %arg7: memref<2x8x16xf32, #tpu.memory_space<vmem>>, %arg8: memref<2x4x8xf32, #tpu.memory_space<vmem>>, %arg9: memref<6x128x64xf32, #tpu.memory_space<vmem>>, %arg10: memref<2x2x4xf32, #tpu.memory_space<vmem>>, %arg11: memref<2x64x32xf32, #tpu.memory_space<vmem>>, %arg12: memref<1x32xf32, #tpu.memory_space<vmem>>, %arg13: memref<32x32xf32, #tpu.memory_space<vmem>>, %arg14: memref<1x32xf32, #tpu.memory_space<vmem>>, %arg15: memref<32x16xf32, #tpu.memory_space<vmem>>, %arg16: memref<1x16xf32, #tpu.memory_space<vmem>>, %arg17: memref<2x16xf32, #tpu.memory_space<vmem>>) attributes {dimension_semantics = [], scalar_prefetch = 0 : i64, scratch_operands = 0 : i64, tpu.core_type = #tpu.core_type<tc>} {
    %c0 = arith.constant 0 : index
    %c0_0 = arith.constant 0 : index
    %0 = vector.load %arg0[%c0, %c0_0] : memref<32x64xf32, #tpu.memory_space<vmem>>, vector<32x64xf32>
    %c0_1 = arith.constant 0 : index
    %c0_2 = arith.constant 0 : index
    %c0_3 = arith.constant 0 : index
    %1 = vector.load %arg3[%c0_1, %c0_2, %c0_3] : memref<2x32x32xf32, #tpu.memory_space<vmem>>, vector<1x32x32xf32>
    %2 = vector.shape_cast %1 : vector<1x32x32xf32> to vector<32x32xf32>
    %cst = arith.constant dense<0.000000e+00> : vector<32x64xf32>
    %3 = tpu.matmul %2, %0, %cst {dimension_numbers = #tpu.dot_dimension_numbers<[1], [0], [0], [1], [0, 0, 1, 1], [], []>} : vector<32x32xf32>, vector<32x64xf32>, vector<32x64xf32> -> vector<32x64xf32>
    %c1 = arith.constant 1 : index
    %c0_4 = arith.constant 0 : index
    %c0_5 = arith.constant 0 : index
    %4 = vector.load %arg3[%c1, %c0_4, %c0_5] : memref<2x32x32xf32, #tpu.memory_space<vmem>>, vector<1x32x32xf32>
    %5 = vector.shape_cast %4 : vector<1x32x32xf32> to vector<32x32xf32>
    %cst_6 = arith.constant dense<0.000000e+00> : vector<32x64xf32>
    %6 = tpu.matmul %5, %0, %cst_6 {dimension_numbers = #tpu.dot_dimension_numbers<[1], [0], [0], [1], [0, 0, 1, 1], [], []>} : vector<32x32xf32>, vector<32x64xf32>, vector<32x64xf32> -> vector<32x64xf32>
    %c0_7 = arith.constant 0 : index
    %c0_8 = arith.constant 0 : index
    %c0_9 = arith.constant 0 : index
    %7 = vector.load %arg1[%c0_7, %c0_8, %c0_9] : memref<9x64x128xf32, #tpu.memory_space<vmem>>, vector<1x64x128xf32>
    %8 = vector.shape_cast %7 : vector<1x64x128xf32> to vector<64x128xf32>
    %cst_10 = arith.constant dense<0.000000e+00> : vector<32x128xf32>
    %9 = tpu.matmul %3, %8, %cst_10 {dimension_numbers = #tpu.dot_dimension_numbers<[1], [0], [0], [1], [0, 0, 1, 1], [], []>} : vector<32x64xf32>, vector<64x128xf32>, vector<32x128xf32> -> vector<32x128xf32>
    %c1_11 = arith.constant 1 : index
    %c0_12 = arith.constant 0 : index
    %c0_13 = arith.constant 0 : index
    %10 = vector.load %arg1[%c1_11, %c0_12, %c0_13] : memref<9x64x128xf32, #tpu.memory_space<vmem>>, vector<1x64x128xf32>
    %11 = vector.shape_cast %10 : vector<1x64x128xf32> to vector<64x128xf32>
    %cst_14 = arith.constant dense<0.000000e+00> : vector<32x128xf32>
    %12 = tpu.matmul %0, %11, %cst_14 {dimension_numbers = #tpu.dot_dimension_numbers<[1], [0], [0], [1], [0, 0, 1, 1], [], []>} : vector<32x64xf32>, vector<64x128xf32>, vector<32x128xf32> -> vector<32x128xf32>
    %13 = arith.addf %9, %12 : vector<32x128xf32>
    %c2 = arith.constant 2 : index
    %c0_15 = arith.constant 0 : index
    %c0_16 = arith.constant 0 : index
    %14 = vector.load %arg1[%c2, %c0_15, %c0_16] : memref<9x64x128xf32, #tpu.memory_space<vmem>>, vector<1x64x128xf32>
    %15 = vector.shape_cast %14 : vector<1x64x128xf32> to vector<64x128xf32>
    %cst_17 = arith.constant dense<0.000000e+00> : vector<32x128xf32>
    %16 = tpu.matmul %6, %15, %cst_17 {dimension_numbers = #tpu.dot_dimension_numbers<[1], [0], [0], [1], [0, 0, 1, 1], [], []>} : vector<32x64xf32>, vector<64x128xf32>, vector<32x128xf32> -> vector<32x128xf32>
    %17 = arith.addf %13, %16 : vector<32x128xf32>
    %c0_18 = arith.constant 0 : index
    %c0_19 = arith.constant 0 : index
    %c0_20 = arith.constant 0 : index
    %18 = vector.load %arg2[%c0_18, %c0_19, %c0_20] : memref<3x1x128xf32, #tpu.memory_space<vmem>>, vector<1x1x128xf32>
    %19 = vector.shape_cast %18 : vector<1x1x128xf32> to vector<1x128xf32>
    %20 = vector.broadcast %19 : vector<1x128xf32> to vector<32x128xf32>
    %21 = arith.addf %17, %20 : vector<32x128xf32>
    %cst_21 = arith.constant 0.000000e+00 : f32
    %22 = vector.broadcast %cst_21 : f32 to vector<32x128xf32>
    %23 = arith.maximumf %21, %22 : vector<32x128xf32>
    %c0_22 = arith.constant 0 : index
    %c0_23 = arith.constant 0 : index
    %c0_24 = arith.constant 0 : index
    %24 = vector.load %arg6[%c0_22, %c0_23, %c0_24] : memref<2x16x32xf32, #tpu.memory_space<vmem>>, vector<1x16x32xf32>
    %25 = vector.shape_cast %24 : vector<1x16x32xf32> to vector<16x32xf32>
    %cst_25 = arith.constant dense<0.000000e+00> : vector<16x128xf32>
    %26 = tpu.matmul %25, %23, %cst_25 {dimension_numbers = #tpu.dot_dimension_numbers<[1], [0], [0], [1], [0, 0, 1, 1], [], []>} : vector<16x32xf32>, vector<32x128xf32>, vector<16x128xf32> -> vector<16x128xf32>
    %c1_26 = arith.constant 1 : index
    %c0_27 = arith.constant 0 : index
    %c0_28 = arith.constant 0 : index
    %27 = vector.load %arg6[%c1_26, %c0_27, %c0_28] : memref<2x16x32xf32, #tpu.memory_space<vmem>>, vector<1x16x32xf32>
    %28 = vector.shape_cast %27 : vector<1x16x32xf32> to vector<16x32xf32>
    %cst_29 = arith.constant dense<0.000000e+00> : vector<16x128xf32>
    %29 = tpu.matmul %28, %23, %cst_29 {dimension_numbers = #tpu.dot_dimension_numbers<[1], [0], [0], [1], [0, 0, 1, 1], [], []>} : vector<16x32xf32>, vector<32x128xf32>, vector<16x128xf32> -> vector<16x128xf32>
    %30 = arith.maximumf %26, %29 : vector<16x128xf32>
    %c0_30 = arith.constant 0 : index
    %c0_31 = arith.constant 0 : index
    %c0_32 = arith.constant 0 : index
    %31 = vector.load %arg9[%c0_30, %c0_31, %c0_32] : memref<6x128x64xf32, #tpu.memory_space<vmem>>, vector<1x128x64xf32>
    %32 = vector.shape_cast %31 : vector<1x128x64xf32> to vector<128x64xf32>
    %cst_33 = arith.constant dense<0.000000e+00> : vector<16x64xf32>
    %33 = tpu.matmul %30, %32, %cst_33 {dimension_numbers = #tpu.dot_dimension_numbers<[1], [0], [0], [1], [0, 0, 1, 1], [], []>} : vector<16x128xf32>, vector<128x64xf32>, vector<16x64xf32> -> vector<16x64xf32>
    %c1_34 = arith.constant 1 : index
    %c0_35 = arith.constant 0 : index
    %c0_36 = arith.constant 0 : index
    %34 = vector.load %arg9[%c1_34, %c0_35, %c0_36] : memref<6x128x64xf32, #tpu.memory_space<vmem>>, vector<1x128x64xf32>
    %35 = vector.shape_cast %34 : vector<1x128x64xf32> to vector<128x64xf32>
    %cst_37 = arith.constant dense<0.000000e+00> : vector<16x64xf32>
    %36 = tpu.matmul %30, %35, %cst_37 {dimension_numbers = #tpu.dot_dimension_numbers<[1], [0], [0], [1], [0, 0, 1, 1], [], []>} : vector<16x128xf32>, vector<128x64xf32>, vector<16x64xf32> -> vector<16x64xf32>
    %37 = arith.maximumf %33, %36 : vector<16x64xf32>
    %c0_38 = arith.constant 0 : index
    %c0_39 = arith.constant 0 : index
    %c0_40 = arith.constant 0 : index
    %38 = vector.load %arg4[%c0_38, %c0_39, %c0_40] : memref<2x16x16xf32, #tpu.memory_space<vmem>>, vector<1x16x16xf32>
    %39 = vector.shape_cast %38 : vector<1x16x16xf32> to vector<16x16xf32>
    %cst_41 = arith.constant dense<0.000000e+00> : vector<16x64xf32>
    %40 = tpu.matmul %39, %37, %cst_41 {dimension_numbers = #tpu.dot_dimension_numbers<[1], [0], [0], [1], [0, 0, 1, 1], [], []>} : vector<16x16xf32>, vector<16x64xf32>, vector<16x64xf32> -> vector<16x64xf32>
    %c1_42 = arith.constant 1 : index
    %c0_43 = arith.constant 0 : index
    %c0_44 = arith.constant 0 : index
    %41 = vector.load %arg4[%c1_42, %c0_43, %c0_44] : memref<2x16x16xf32, #tpu.memory_space<vmem>>, vector<1x16x16xf32>
    %42 = vector.shape_cast %41 : vector<1x16x16xf32> to vector<16x16xf32>
    %cst_45 = arith.constant dense<0.000000e+00> : vector<16x64xf32>
    %43 = tpu.matmul %42, %37, %cst_45 {dimension_numbers = #tpu.dot_dimension_numbers<[1], [0], [0], [1], [0, 0, 1, 1], [], []>} : vector<16x16xf32>, vector<16x64xf32>, vector<16x64xf32> -> vector<16x64xf32>
    %c3 = arith.constant 3 : index
    %c0_46 = arith.constant 0 : index
    %c0_47 = arith.constant 0 : index
    %44 = vector.load %arg1[%c3, %c0_46, %c0_47] : memref<9x64x128xf32, #tpu.memory_space<vmem>>, vector<1x64x128xf32>
    %45 = vector.shape_cast %44 : vector<1x64x128xf32> to vector<64x128xf32>
    %cst_48 = arith.constant dense<0.000000e+00> : vector<16x128xf32>
    %46 = tpu.matmul %40, %45, %cst_48 {dimension_numbers = #tpu.dot_dimension_numbers<[1], [0], [0], [1], [0, 0, 1, 1], [], []>} : vector<16x64xf32>, vector<64x128xf32>, vector<16x128xf32> -> vector<16x128xf32>
    %c4 = arith.constant 4 : index
    %c0_49 = arith.constant 0 : index
    %c0_50 = arith.constant 0 : index
    %47 = vector.load %arg1[%c4, %c0_49, %c0_50] : memref<9x64x128xf32, #tpu.memory_space<vmem>>, vector<1x64x128xf32>
    %48 = vector.shape_cast %47 : vector<1x64x128xf32> to vector<64x128xf32>
    %cst_51 = arith.constant dense<0.000000e+00> : vector<16x128xf32>
    %49 = tpu.matmul %37, %48, %cst_51 {dimension_numbers = #tpu.dot_dimension_numbers<[1], [0], [0], [1], [0, 0, 1, 1], [], []>} : vector<16x64xf32>, vector<64x128xf32>, vector<16x128xf32> -> vector<16x128xf32>
    %50 = arith.addf %46, %49 : vector<16x128xf32>
    %c5 = arith.constant 5 : index
    %c0_52 = arith.constant 0 : index
    %c0_53 = arith.constant 0 : index
    %51 = vector.load %arg1[%c5, %c0_52, %c0_53] : memref<9x64x128xf32, #tpu.memory_space<vmem>>, vector<1x64x128xf32>
    %52 = vector.shape_cast %51 : vector<1x64x128xf32> to vector<64x128xf32>
    %cst_54 = arith.constant dense<0.000000e+00> : vector<16x128xf32>
    %53 = tpu.matmul %43, %52, %cst_54 {dimension_numbers = #tpu.dot_dimension_numbers<[1], [0], [0], [1], [0, 0, 1, 1], [], []>} : vector<16x64xf32>, vector<64x128xf32>, vector<16x128xf32> -> vector<16x128xf32>
    %54 = arith.addf %50, %53 : vector<16x128xf32>
    %c1_55 = arith.constant 1 : index
    %c0_56 = arith.constant 0 : index
    %c0_57 = arith.constant 0 : index
    %55 = vector.load %arg2[%c1_55, %c0_56, %c0_57] : memref<3x1x128xf32, #tpu.memory_space<vmem>>, vector<1x1x128xf32>
    %56 = vector.shape_cast %55 : vector<1x1x128xf32> to vector<1x128xf32>
    %57 = vector.broadcast %56 : vector<1x128xf32> to vector<16x128xf32>
    %58 = arith.addf %54, %57 : vector<16x128xf32>
    %cst_58 = arith.constant 0.000000e+00 : f32
    %59 = vector.broadcast %cst_58 : f32 to vector<16x128xf32>
    %60 = arith.maximumf %58, %59 : vector<16x128xf32>
    %c0_59 = arith.constant 0 : index
    %c0_60 = arith.constant 0 : index
    %c0_61 = arith.constant 0 : index
    %61 = vector.load %arg7[%c0_59, %c0_60, %c0_61] : memref<2x8x16xf32, #tpu.memory_space<vmem>>, vector<1x8x16xf32>
    %62 = vector.shape_cast %61 : vector<1x8x16xf32> to vector<8x16xf32>
    %cst_62 = arith.constant dense<0.000000e+00> : vector<8x128xf32>
    %63 = tpu.matmul %62, %60, %cst_62 {dimension_numbers = #tpu.dot_dimension_numbers<[1], [0], [0], [1], [0, 0, 1, 1], [], []>} : vector<8x16xf32>, vector<16x128xf32>, vector<8x128xf32> -> vector<8x128xf32>
    %c1_63 = arith.constant 1 : index
    %c0_64 = arith.constant 0 : index
    %c0_65 = arith.constant 0 : index
    %64 = vector.load %arg7[%c1_63, %c0_64, %c0_65] : memref<2x8x16xf32, #tpu.memory_space<vmem>>, vector<1x8x16xf32>
    %65 = vector.shape_cast %64 : vector<1x8x16xf32> to vector<8x16xf32>
    %cst_66 = arith.constant dense<0.000000e+00> : vector<8x128xf32>
    %66 = tpu.matmul %65, %60, %cst_66 {dimension_numbers = #tpu.dot_dimension_numbers<[1], [0], [0], [1], [0, 0, 1, 1], [], []>} : vector<8x16xf32>, vector<16x128xf32>, vector<8x128xf32> -> vector<8x128xf32>
    %67 = arith.maximumf %63, %66 : vector<8x128xf32>
    %c2_67 = arith.constant 2 : index
    %c0_68 = arith.constant 0 : index
    %c0_69 = arith.constant 0 : index
    %68 = vector.load %arg9[%c2_67, %c0_68, %c0_69] : memref<6x128x64xf32, #tpu.memory_space<vmem>>, vector<1x128x64xf32>
    %69 = vector.shape_cast %68 : vector<1x128x64xf32> to vector<128x64xf32>
    %cst_70 = arith.constant dense<0.000000e+00> : vector<8x64xf32>
    %70 = tpu.matmul %67, %69, %cst_70 {dimension_numbers = #tpu.dot_dimension_numbers<[1], [0], [0], [1], [0, 0, 1, 1], [], []>} : vector<8x128xf32>, vector<128x64xf32>, vector<8x64xf32> -> vector<8x64xf32>
    %c3_71 = arith.constant 3 : index
    %c0_72 = arith.constant 0 : index
    %c0_73 = arith.constant 0 : index
    %71 = vector.load %arg9[%c3_71, %c0_72, %c0_73] : memref<6x128x64xf32, #tpu.memory_space<vmem>>, vector<1x128x64xf32>
    %72 = vector.shape_cast %71 : vector<1x128x64xf32> to vector<128x64xf32>
    %cst_74 = arith.constant dense<0.000000e+00> : vector<8x64xf32>
    %73 = tpu.matmul %67, %72, %cst_74 {dimension_numbers = #tpu.dot_dimension_numbers<[1], [0], [0], [1], [0, 0, 1, 1], [], []>} : vector<8x128xf32>, vector<128x64xf32>, vector<8x64xf32> -> vector<8x64xf32>
    %74 = arith.maximumf %70, %73 : vector<8x64xf32>
    %c0_75 = arith.constant 0 : index
    %c0_76 = arith.constant 0 : index
    %c0_77 = arith.constant 0 : index
    %75 = vector.load %arg5[%c0_75, %c0_76, %c0_77] : memref<2x8x8xf32, #tpu.memory_space<vmem>>, vector<1x8x8xf32>
    %76 = vector.shape_cast %75 : vector<1x8x8xf32> to vector<8x8xf32>
    %cst_78 = arith.constant dense<0.000000e+00> : vector<8x64xf32>
    %77 = tpu.matmul %76, %74, %cst_78 {dimension_numbers = #tpu.dot_dimension_numbers<[1], [0], [0], [1], [0, 0, 1, 1], [], []>} : vector<8x8xf32>, vector<8x64xf32>, vector<8x64xf32> -> vector<8x64xf32>
    %c1_79 = arith.constant 1 : index
    %c0_80 = arith.constant 0 : index
    %c0_81 = arith.constant 0 : index
    %78 = vector.load %arg5[%c1_79, %c0_80, %c0_81] : memref<2x8x8xf32, #tpu.memory_space<vmem>>, vector<1x8x8xf32>
    %79 = vector.shape_cast %78 : vector<1x8x8xf32> to vector<8x8xf32>
    %cst_82 = arith.constant dense<0.000000e+00> : vector<8x64xf32>
    %80 = tpu.matmul %79, %74, %cst_82 {dimension_numbers = #tpu.dot_dimension_numbers<[1], [0], [0], [1], [0, 0, 1, 1], [], []>} : vector<8x8xf32>, vector<8x64xf32>, vector<8x64xf32> -> vector<8x64xf32>
    %c6 = arith.constant 6 : index
    %c0_83 = arith.constant 0 : index
    %c0_84 = arith.constant 0 : index
    %81 = vector.load %arg1[%c6, %c0_83, %c0_84] : memref<9x64x128xf32, #tpu.memory_space<vmem>>, vector<1x64x128xf32>
    %82 = vector.shape_cast %81 : vector<1x64x128xf32> to vector<64x128xf32>
    %cst_85 = arith.constant dense<0.000000e+00> : vector<8x128xf32>
    %83 = tpu.matmul %77, %82, %cst_85 {dimension_numbers = #tpu.dot_dimension_numbers<[1], [0], [0], [1], [0, 0, 1, 1], [], []>} : vector<8x64xf32>, vector<64x128xf32>, vector<8x128xf32> -> vector<8x128xf32>
    %c7 = arith.constant 7 : index
    %c0_86 = arith.constant 0 : index
    %c0_87 = arith.constant 0 : index
    %84 = vector.load %arg1[%c7, %c0_86, %c0_87] : memref<9x64x128xf32, #tpu.memory_space<vmem>>, vector<1x64x128xf32>
    %85 = vector.shape_cast %84 : vector<1x64x128xf32> to vector<64x128xf32>
    %cst_88 = arith.constant dense<0.000000e+00> : vector<8x128xf32>
    %86 = tpu.matmul %74, %85, %cst_88 {dimension_numbers = #tpu.dot_dimension_numbers<[1], [0], [0], [1], [0, 0, 1, 1], [], []>} : vector<8x64xf32>, vector<64x128xf32>, vector<8x128xf32> -> vector<8x128xf32>
    %87 = arith.addf %83, %86 : vector<8x128xf32>
    %c8 = arith.constant 8 : index
    %c0_89 = arith.constant 0 : index
    %c0_90 = arith.constant 0 : index
    %88 = vector.load %arg1[%c8, %c0_89, %c0_90] : memref<9x64x128xf32, #tpu.memory_space<vmem>>, vector<1x64x128xf32>
    %89 = vector.shape_cast %88 : vector<1x64x128xf32> to vector<64x128xf32>
    %cst_91 = arith.constant dense<0.000000e+00> : vector<8x128xf32>
    %90 = tpu.matmul %80, %89, %cst_91 {dimension_numbers = #tpu.dot_dimension_numbers<[1], [0], [0], [1], [0, 0, 1, 1], [], []>} : vector<8x64xf32>, vector<64x128xf32>, vector<8x128xf32> -> vector<8x128xf32>
    %91 = arith.addf %87, %90 : vector<8x128xf32>
    %c2_92 = arith.constant 2 : index
    %c0_93 = arith.constant 0 : index
    %c0_94 = arith.constant 0 : index
    %92 = vector.load %arg2[%c2_92, %c0_93, %c0_94] : memref<3x1x128xf32, #tpu.memory_space<vmem>>, vector<1x1x128xf32>
    %93 = vector.shape_cast %92 : vector<1x1x128xf32> to vector<1x128xf32>
    %94 = vector.broadcast %93 : vector<1x128xf32> to vector<8x128xf32>
    %95 = arith.addf %91, %94 : vector<8x128xf32>
    %cst_95 = arith.constant 0.000000e+00 : f32
    %96 = vector.broadcast %cst_95 : f32 to vector<8x128xf32>
    %97 = arith.maximumf %95, %96 : vector<8x128xf32>
    %c0_96 = arith.constant 0 : index
    %c0_97 = arith.constant 0 : index
    %c0_98 = arith.constant 0 : index
    %98 = vector.load %arg8[%c0_96, %c0_97, %c0_98] : memref<2x4x8xf32, #tpu.memory_space<vmem>>, vector<1x4x8xf32>
    %99 = vector.shape_cast %98 : vector<1x4x8xf32> to vector<4x8xf32>
    %cst_99 = arith.constant dense<0.000000e+00> : vector<4x128xf32>
    %100 = tpu.matmul %99, %97, %cst_99 {dimension_numbers = #tpu.dot_dimension_numbers<[1], [0], [0], [1], [0, 0, 1, 1], [], []>} : vector<4x8xf32>, vector<8x128xf32>, vector<4x128xf32> -> vector<4x128xf32>
    %c1_100 = arith.constant 1 : index
    %c0_101 = arith.constant 0 : index
    %c0_102 = arith.constant 0 : index
    %101 = vector.load %arg8[%c1_100, %c0_101, %c0_102] : memref<2x4x8xf32, #tpu.memory_space<vmem>>, vector<1x4x8xf32>
    %102 = vector.shape_cast %101 : vector<1x4x8xf32> to vector<4x8xf32>
    %cst_103 = arith.constant dense<0.000000e+00> : vector<4x128xf32>
    %103 = tpu.matmul %102, %97, %cst_103 {dimension_numbers = #tpu.dot_dimension_numbers<[1], [0], [0], [1], [0, 0, 1, 1], [], []>} : vector<4x8xf32>, vector<8x128xf32>, vector<4x128xf32> -> vector<4x128xf32>
    %104 = arith.maximumf %100, %103 : vector<4x128xf32>
    %c4_104 = arith.constant 4 : index
    %c0_105 = arith.constant 0 : index
    %c0_106 = arith.constant 0 : index
    %105 = vector.load %arg9[%c4_104, %c0_105, %c0_106] : memref<6x128x64xf32, #tpu.memory_space<vmem>>, vector<1x128x64xf32>
    %106 = vector.shape_cast %105 : vector<1x128x64xf32> to vector<128x64xf32>
    %cst_107 = arith.constant dense<0.000000e+00> : vector<4x64xf32>
    %107 = tpu.matmul %104, %106, %cst_107 {dimension_numbers = #tpu.dot_dimension_numbers<[1], [0], [0], [1], [0, 0, 1, 1], [], []>} : vector<4x128xf32>, vector<128x64xf32>, vector<4x64xf32> -> vector<4x64xf32>
    %c5_108 = arith.constant 5 : index
    %c0_109 = arith.constant 0 : index
    %c0_110 = arith.constant 0 : index
    %108 = vector.load %arg9[%c5_108, %c0_109, %c0_110] : memref<6x128x64xf32, #tpu.memory_space<vmem>>, vector<1x128x64xf32>
    %109 = vector.shape_cast %108 : vector<1x128x64xf32> to vector<128x64xf32>
    %cst_111 = arith.constant dense<0.000000e+00> : vector<4x64xf32>
    %110 = tpu.matmul %104, %109, %cst_111 {dimension_numbers = #tpu.dot_dimension_numbers<[1], [0], [0], [1], [0, 0, 1, 1], [], []>} : vector<4x128xf32>, vector<128x64xf32>, vector<4x64xf32> -> vector<4x64xf32>
    %111 = arith.maximumf %107, %110 : vector<4x64xf32>
    %c0_112 = arith.constant 0 : index
    %c0_113 = arith.constant 0 : index
    %c0_114 = arith.constant 0 : index
    %112 = vector.load %arg10[%c0_112, %c0_113, %c0_114] : memref<2x2x4xf32, #tpu.memory_space<vmem>>, vector<1x2x4xf32>
    %113 = vector.shape_cast %112 : vector<1x2x4xf32> to vector<2x4xf32>
    %cst_115 = arith.constant dense<0.000000e+00> : vector<2x64xf32>
    %114 = tpu.matmul %113, %111, %cst_115 {dimension_numbers = #tpu.dot_dimension_numbers<[1], [0], [0], [1], [0, 0, 1, 1], [], []>} : vector<2x4xf32>, vector<4x64xf32>, vector<2x64xf32> -> vector<2x64xf32>
    %c0_116 = arith.constant 0 : index
    %c0_117 = arith.constant 0 : index
    %c0_118 = arith.constant 0 : index
    %115 = vector.load %arg11[%c0_116, %c0_117, %c0_118] : memref<2x64x32xf32, #tpu.memory_space<vmem>>, vector<1x64x32xf32>
    %116 = vector.shape_cast %115 : vector<1x64x32xf32> to vector<64x32xf32>
    %cst_119 = arith.constant dense<0.000000e+00> : vector<2x32xf32>
    %117 = tpu.matmul %114, %116, %cst_119 {dimension_numbers = #tpu.dot_dimension_numbers<[1], [0], [0], [1], [0, 0, 1, 1], [], []>} : vector<2x64xf32>, vector<64x32xf32>, vector<2x32xf32> -> vector<2x32xf32>
    %c1_120 = arith.constant 1 : index
    %c0_121 = arith.constant 0 : index
    %c0_122 = arith.constant 0 : index
    %118 = vector.load %arg10[%c1_120, %c0_121, %c0_122] : memref<2x2x4xf32, #tpu.memory_space<vmem>>, vector<1x2x4xf32>
    %119 = vector.shape_cast %118 : vector<1x2x4xf32> to vector<2x4xf32>
    %cst_123 = arith.constant dense<0.000000e+00> : vector<2x64xf32>
    %120 = tpu.matmul %119, %111, %cst_123 {dimension_numbers = #tpu.dot_dimension_numbers<[1], [0], [0], [1], [0, 0, 1, 1], [], []>} : vector<2x4xf32>, vector<4x64xf32>, vector<2x64xf32> -> vector<2x64xf32>
    %c1_124 = arith.constant 1 : index
    %c0_125 = arith.constant 0 : index
    %c0_126 = arith.constant 0 : index
    %121 = vector.load %arg11[%c1_124, %c0_125, %c0_126] : memref<2x64x32xf32, #tpu.memory_space<vmem>>, vector<1x64x32xf32>
    %122 = vector.shape_cast %121 : vector<1x64x32xf32> to vector<64x32xf32>
    %cst_127 = arith.constant dense<0.000000e+00> : vector<2x32xf32>
    %123 = tpu.matmul %120, %122, %cst_127 {dimension_numbers = #tpu.dot_dimension_numbers<[1], [0], [0], [1], [0, 0, 1, 1], [], []>} : vector<2x64xf32>, vector<64x32xf32>, vector<2x32xf32> -> vector<2x32xf32>
    %124 = arith.addf %117, %123 : vector<2x32xf32>
    %c0_128 = arith.constant 0 : index
    %c0_129 = arith.constant 0 : index
    %125 = vector.load %arg12[%c0_128, %c0_129] : memref<1x32xf32, #tpu.memory_space<vmem>>, vector<1x32xf32>
    %126 = vector.broadcast %125 : vector<1x32xf32> to vector<2x32xf32>
    %127 = arith.addf %124, %126 : vector<2x32xf32>
    %cst_130 = arith.constant 0.000000e+00 : f32
    %128 = vector.broadcast %cst_130 : f32 to vector<2x32xf32>
    %129 = arith.maximumf %127, %128 : vector<2x32xf32>
    %c0_131 = arith.constant 0 : index
    %c0_132 = arith.constant 0 : index
    %130 = vector.load %arg13[%c0_131, %c0_132] : memref<32x32xf32, #tpu.memory_space<vmem>>, vector<32x32xf32>
    %cst_133 = arith.constant dense<0.000000e+00> : vector<2x32xf32>
    %131 = tpu.matmul %129, %130, %cst_133 {dimension_numbers = #tpu.dot_dimension_numbers<[1], [0], [0], [1], [0, 0, 1, 1], [], []>} : vector<2x32xf32>, vector<32x32xf32>, vector<2x32xf32> -> vector<2x32xf32>
    %c0_134 = arith.constant 0 : index
    %c0_135 = arith.constant 0 : index
    %132 = vector.load %arg14[%c0_134, %c0_135] : memref<1x32xf32, #tpu.memory_space<vmem>>, vector<1x32xf32>
    %133 = vector.broadcast %132 : vector<1x32xf32> to vector<2x32xf32>
    %134 = arith.addf %131, %133 : vector<2x32xf32>
    %cst_136 = arith.constant 0.000000e+00 : f32
    %135 = vector.broadcast %cst_136 : f32 to vector<2x32xf32>
    %136 = arith.maximumf %134, %135 : vector<2x32xf32>
    %c0_137 = arith.constant 0 : index
    %c0_138 = arith.constant 0 : index
    %137 = vector.load %arg15[%c0_137, %c0_138] : memref<32x16xf32, #tpu.memory_space<vmem>>, vector<32x16xf32>
    %cst_139 = arith.constant dense<0.000000e+00> : vector<2x16xf32>
    %138 = tpu.matmul %136, %137, %cst_139 {dimension_numbers = #tpu.dot_dimension_numbers<[1], [0], [0], [1], [0, 0, 1, 1], [], []>} : vector<2x32xf32>, vector<32x16xf32>, vector<2x16xf32> -> vector<2x16xf32>
    %c0_140 = arith.constant 0 : index
    %c0_141 = arith.constant 0 : index
    %139 = vector.load %arg16[%c0_140, %c0_141] : memref<1x16xf32, #tpu.memory_space<vmem>>, vector<1x16xf32>
    %140 = vector.broadcast %139 : vector<1x16xf32> to vector<2x16xf32>
    %141 = arith.addf %138, %140 : vector<2x16xf32>
    %cst_142 = arith.constant 1.000000e+00 : f32
    %142 = vector.broadcast %cst_142 : f32 to vector<2x16xf32>
    %143 = arith.mulf %142, %141 : vector<2x16xf32>
    %144 = math.tanh %143 : vector<2x16xf32>
    %c0_143 = arith.constant 0 : index
    %c0_144 = arith.constant 0 : index
    %145 = vector.load %arg17[%c0_143, %c0_144] : memref<2x16xf32, #tpu.memory_space<vmem>>, vector<2x16xf32>
    tpu.vector_store %arg17[%c0_143, %c0_144], %144 {strides = array<i32>} : memref<2x16xf32, #tpu.memory_space<vmem>>, vector<2x16xf32>,
    return
  }
}

</mosaic_0001>

<llo_original>
// kernel: tpu_custom_call.1
$region0: #{tpu_custom_call.1}
  #allocation0 [shape = 'u32[]', space=smem, size = 0x4, offset = 0x4, fixed_abs, tag = 'smem constant byte address 0x4 - core index']
  #allocation1 [shape = 'u32[144,128]{1,0:T(1,128)}', space=vmem, size = 0x12000, scoped, tag = 'internal scratch']
  %s0 = inlined_call_operand.vmem [shape: f32[32,64], index: 0, kind: input, shape index: {}]
  %s1 = inlined_call_operand.vmem [shape: f32[9,64,128], index: 1, kind: input, shape index: {}]
  %s2 = inlined_call_operand.vmem [shape: f32[3,1,128], index: 2, kind: input, shape index: {}]
  %s3 = inlined_call_operand.vmem [shape: f32[2,32,32], index: 3, kind: input, shape index: {}]
  %s4 = inlined_call_operand.vmem [shape: f32[2,16,16], index: 4, kind: input, shape index: {}]
  %s5 = inlined_call_operand.vmem [shape: f32[2,8,8], index: 5, kind: input, shape index: {}]
  %s6 = inlined_call_operand.vmem [shape: f32[2,16,32], index: 6, kind: input, shape index: {}]
  %s7 = inlined_call_operand.vmem [shape: f32[2,8,16], index: 7, kind: input, shape index: {}]
  %s8 = inlined_call_operand.vmem [shape: f32[2,4,8], index: 8, kind: input, shape index: {}]
  %s9 = inlined_call_operand.vmem [shape: f32[6,128,64], index: 9, kind: input, shape index: {}]
  %s10 = inlined_call_operand.vmem [shape: f32[2,2,4], index: 10, kind: input, shape index: {}]
  %s11 = inlined_call_operand.vmem [shape: f32[2,64,32], index: 11, kind: input, shape index: {}]
  %s12 = inlined_call_operand.vmem [shape: f32[1,32], index: 12, kind: input, shape index: {}]
  %s13 = inlined_call_operand.vmem [shape: f32[32,32], index: 13, kind: input, shape index: {}]
  %s14 = inlined_call_operand.vmem [shape: f32[1,32], index: 14, kind: input, shape index: {}]
  %s15 = inlined_call_operand.vmem [shape: f32[32,16], index: 15, kind: input, shape index: {}]
  %s16 = inlined_call_operand.vmem [shape: f32[1,16], index: 16, kind: input, shape index: {}]
  %s17 = inlined_call_operand.hbm [shape: f32[2,16], index: 17, kind: output, shape index: {}]
  %s18 = sld [smem:[#allocation0]]
  $region78: #{tpu_custom_call.1} parent=0
    _
  %s20 = ssub.s32 1, %s18
  %s21 = scalar_select 0, %s20, %s18
  $region1: #{tpu_custom_call.1} parent=0
    #allocation2 [shape = 'u8[1024]{0}', space=vmem, size = 0x400, scoped, tag = 'output window, operand 0, single buffered']
    #allocation3 [shape = 's32[1]{0}', space=sflag, size = 0x4, scoped, tag = 'scoped memory for tpu_custom_call.1']
    %22 = vsyncpa [#allocation3], 0
    // Predicated region
    $region2: #{tpu_custom_call.1} parent=1 // pred_check
      _
    $region3: #{tpu_custom_call.1} parent=1 // pred_check_branch
      %24 = sbr.rel (0) target = $region5
    $region4: #{tpu_custom_call.1} parent=1 // pred_region
      _
    $region5: #{tpu_custom_call.1} parent=1 // pred_fallthru
      _
    // Predicated region
    $region6: #{tpu_custom_call.1} parent=1 // pred_check
      _
    $region7: #{tpu_custom_call.1} parent=1 // pred_check_branch
      %26 = sbr.rel (0) target = $region9
    $region8: #{tpu_custom_call.1} parent=1 // pred_region
      _
    $region9: #{tpu_custom_call.1} parent=1 // pred_fallthru
      _
    // Predicated region
    $region10: #{tpu_custom_call.1} parent=1 // pred_check
      _
    $region11: #{tpu_custom_call.1} parent=1 // pred_check_branch
      %28 = sbr.rel (0) target = $region13
    $region12: #{tpu_custom_call.1} parent=1 // pred_region
      _
    $region13: #{tpu_custom_call.1} parent=1 // pred_fallthru
      _
    // Predicated region
    $region14: #{tpu_custom_call.1} parent=1 // pred_check
      _
    $region15: #{tpu_custom_call.1} parent=1 // pred_check_branch
      %30 = sbr.rel (0) target = $region17
    $region16: #{tpu_custom_call.1} parent=1 // pred_region
      _
    $region17: #{tpu_custom_call.1} parent=1 // pred_fallthru
      _
    // Predicated region
    $region18: #{tpu_custom_call.1} parent=1 // pred_check
      _
    $region19: #{tpu_custom_call.1} parent=1 // pred_check_branch
      %32 = sbr.rel (0) target = $region21
    $region20: #{tpu_custom_call.1} parent=1 // pred_region
      _
    $region21: #{tpu_custom_call.1} parent=1 // pred_fallthru
      _
    // Predicated region
    $region22: #{tpu_custom_call.1} parent=1 // pred_check
      _
    $region23: #{tpu_custom_call.1} parent=1 // pred_check_branch
      %34 = sbr.rel (0) target = $region25
    $region24: #{tpu_custom_call.1} parent=1 // pred_region
      _
    $region25: #{tpu_custom_call.1} parent=1 // pred_fallthru
      _
    // Predicated region
    $region26: #{tpu_custom_call.1} parent=1 // pred_check
      _
    $region27: #{tpu_custom_call.1} parent=1 // pred_check_branch
      %36 = sbr.rel (0) target = $region29
    $region28: #{tpu_custom_call.1} parent=1 // pred_region
      _
    $region29: #{tpu_custom_call.1} parent=1 // pred_fallthru
      _
    // Predicated region
    $region30: #{tpu_custom_call.1} parent=1 // pred_check
      _
    $region31: #{tpu_custom_call.1} parent=1 // pred_check_branch
      %38 = sbr.rel (0) target = $region33
    $region32: #{tpu_custom_call.1} parent=1 // pred_region
      _
    $region33: #{tpu_custom_call.1} parent=1 // pred_fallthru
      _
    // Predicated region
    $region34: #{tpu_custom_call.1} parent=1 // pred_check
      _
    $region35: #{tpu_custom_call.1} parent=1 // pred_check_branch
      %40 = sbr.rel (0) target = $region37
    $region36: #{tpu_custom_call.1} parent=1 // pred_region
      _
    $region37: #{tpu_custom_call.1} parent=1 // pred_fallthru
      _
    // Predicated region
    $region38: #{tpu_custom_call.1} parent=1 // pred_check
      _
    $region39: #{tpu_custom_call.1} parent=1 // pred_check_branch
      %42 = sbr.rel (0) target = $region41
    $region40: #{tpu_custom_call.1} parent=1 // pred_region
      _
    $region41: #{tpu_custom_call.1} parent=1 // pred_fallthru
      _
    // Predicated region
    $region42: #{tpu_custom_call.1} parent=1 // pred_check
      _
    $region43: #{tpu_custom_call.1} parent=1 // pred_check_branch
      %44 = sbr.rel (0) target = $region45
    $region44: #{tpu_custom_call.1} parent=1 // pred_region
      _
    $region45: #{tpu_custom_call.1} parent=1 // pred_fallthru
      _
    // Predicated region
    $region46: #{tpu_custom_call.1} parent=1 // pred_check
      _
    $region47: #{tpu_custom_call.1} parent=1 // pred_check_branch
      %46 = sbr.rel (0) target = $region49
    $region48: #{tpu_custom_call.1} parent=1 // pred_region
      _
    $region49: #{tpu_custom_call.1} parent=1 // pred_fallthru
      _
    // Predicated region
    $region50: #{tpu_custom_call.1} parent=1 // pred_check
      _
    $region51: #{tpu_custom_call.1} parent=1 // pred_check_branch
      %48 = sbr.rel (0) target = $region53
    $region52: #{tpu_custom_call.1} parent=1 // pred_region
      _
    $region53: #{tpu_custom_call.1} parent=1 // pred_fallthru
      _
    // Predicated region
    $region54: #{tpu_custom_call.1} parent=1 // pred_check
      _
    $region55: #{tpu_custom_call.1} parent=1 // pred_check_branch
      %50 = sbr.rel (0) target = $region57
    $region56: #{tpu_custom_call.1} parent=1 // pred_region
      _
    $region57: #{tpu_custom_call.1} parent=1 // pred_fallthru
      _
    // Predicated region
    $region58: #{tpu_custom_call.1} parent=1 // pred_check
      _
    $region59: #{tpu_custom_call.1} parent=1 // pred_check_branch
      %52 = sbr.rel (0) target = $region61
    $region60: #{tpu_custom_call.1} parent=1 // pred_region
      _
    $region61: #{tpu_custom_call.1} parent=1 // pred_fallthru
      _
    // Predicated region
    $region62: #{tpu_custom_call.1} parent=1 // pred_check
      _
    $region63: #{tpu_custom_call.1} parent=1 // pred_check_branch
      %54 = sbr.rel (0) target = $region65
    $region64: #{tpu_custom_call.1} parent=1 // pred_region
      _
    $region65: #{tpu_custom_call.1} parent=1 // pred_fallthru
      _
    // Predicated region
    $region66: #{tpu_custom_call.1} parent=1 // pred_check
      _
    $region67: #{tpu_custom_call.1} parent=1 // pred_check_branch
      %56 = sbr.rel (0) target = $region69
    $region68: #{tpu_custom_call.1} parent=1 // pred_region
      _
    $region69: #{tpu_custom_call.1} parent=1 // pred_fallthru
      _
    %v57 = vld [vmem:[%s0] sm:$0xff]
    %v58 = vld [vmem:[%s0 + $0x8] sm:$0xff]
    %v59 = vld [vmem:[%s0 + $0x10] sm:$0xff]
    %v60 = vld [vmem:[%s0 + $0x18] sm:$0xff]
    %v61 = vld [vmem:[%s3] sm:$0xff]
    %v62 = vld [vmem:[%s3 + $0x8] sm:$0xff]
    %v63 = vld [vmem:[%s3 + $0x10] sm:$0xff]
    %v64 = vld [vmem:[%s3 + $0x18] sm:$0xff]
    %vm65 = vcmask 261120
    %v67 = vsel %vm65, %v61, 0
    %v70 = vsel %vm65, %v62, 0
    %v73 = vsel %vm65, %v63, 0
    %v76 = vsel %vm65, %v64, 0
    %78 = vmatprep.subr.mxu0 0.0
    %79 = vmatpush1.msra.mxu0 %v57
    %80 = vmatprep.subr.mxu0 0.0
    %81 = vmatpush1.msra.mxu0 %v58
    %82 = vmatprep.subr.mxu0 0.0
    %83 = vmatpush1.msra.mxu0 %v59
    %84 = vmatprep.subr.mxu0 0.0
    %85 = vmatpush1.msra.mxu0 %v60
    %86 = vmatprep.subr.mxu0 0.0
    %87 = vmatpush1.msra.mxu0 0.0
    %88 = vmatprep.subr.mxu0 0.0
    %89 = vmatpush1.msra.mxu0 0.0
    %90 = vmatprep.subr.mxu0 0.0
    %91 = vmatpush1.msra.mxu0 0.0
    %92 = vmatprep.subr.mxu0 0.0
    %93 = vmatpush1.msra.mxu0 0.0
    %94 = vmatprep.subr.mxu0 0.0
    %95 = vmatpush1.msra.mxu0 0.0
    %96 = vmatprep.subr.mxu0 0.0
    %97 = vmatpush1.msra.mxu0 0.0
    %98 = vmatprep.subr.mxu0 0.0
    %99 = vmatpush1.msra.mxu0 0.0
    %100 = vmatprep.subr.mxu0 0.0
    %101 = vmatpush1.msra.mxu0 0.0
    %102 = vmatprep.subr.mxu0 0.0
    %103 = vmatpush1.msra.mxu0 0.0
    %104 = vmatprep.subr.mxu0 0.0
    %105 = vmatpush1.msra.mxu0 0.0
    %106 = vmatprep.subr.mxu0 0.0
    %107 = vmatpush1.msra.mxu0 0.0
    %108 = vmatprep.subr.mxu0 0.0
    %109 = vmatpush1.msra.mxu0 0.0
    %110 = vmatprep.subr.mxu0 0.0
    %111 = vmatpush1.msra.mxu0 0.0
    %112 = vmatprep.subr.mxu0 0.0
    %113 = vmatpush1.msra.mxu0 0.0
    %114 = vmatprep.subr.mxu0 0.0
    %115 = vmatpush1.msra.mxu0 0.0
    %116 = vmatprep.subr.mxu0 0.0
    %117 = vmatpush1.msra.mxu0 0.0
    %118 = vmatprep.subr.mxu0 0.0
    %119 = vmatpush1.msra.mxu0 0.0
    %120 = vmatprep.subr.mxu0 0.0
    %121 = vmatpush1.msra.mxu0 0.0
    %122 = vmatprep.subr.mxu0 0.0
    %123 = vmatpush1.msra.mxu0 0.0
    %124 = vmatprep.subr.mxu0 0.0
    %125 = vmatpush1.msra.mxu0 0.0
    %126 = vmatprep.subr.mxu0 0.0
    %127 = vmatpush1.msra.mxu0 0.0
    %128 = vmatprep.subr.mxu0 0.0
    %129 = vmatpush1.msra.mxu0 0.0
    %130 = vmatprep.subr.mxu0 0.0
    %131 = vmatpush1.msra.mxu0 0.0
    %132 = vmatprep.subr.mxu0 0.0
    %133 = vmatpush1.msra.mxu0 0.0
    %134 = vmatprep.subr.mxu0 0.0
    %135 = vmatpush1.msra.mxu0 0.0
    %136 = vmatprep.subr.mxu0 0.0
    %137 = vmatpush1.msra.mxu0 0.0
    %138 = vmatprep.subr.mxu0 0.0
    %139 = vmatpush1.msra.mxu0 0.0
    %140 = vmatprep.subr.mxu0 0.0
    %141 = vmatpush1.msra.mxu0 0.0
    %142 = vmatprep.mubr.f32.mxu0 0.0
    %143 = vmatmul.mubr.f32.gmra.mrb[0].mxu0 %v67
    %v144 = vpop.f32.mrb[0].mxu0
    %v145 = vadd.f32 0.0, %v144
    %v146 = vpop.f32.mrb[0].mxu0
    %147 = vmatprep.mubr.f32.mxu0 0.0
    %148 = vmatmul.mubr.f32.gmra.mrb[0].mxu0 %v70
    %v149 = vpop.f32.mrb[0].mxu0
    %v150 = vadd.f32 0.0, %v149
    %v151 = vpop.f32.mrb[0].mxu0
    %152 = vmatprep.mubr.f32.mxu0 0.0
    %153 = vmatmul.mubr.f32.gmra.mrb[0].mxu0 %v73
    %v154 = vpop.f32.mrb[0].mxu0
    %v155 = vadd.f32 0.0, %v154
    %v156 = vpop.f32.mrb[0].mxu0
    %157 = vmatprep.mubr.f32.mxu0 0.0
    %158 = vmatmul.mubr.f32.gmra.mrb[0].mxu0 %v76
    %v159 = vpop.f32.mrb[0].mxu0
    %v160 = vadd.f32 0.0, %v159
    %v161 = vpop.f32.mrb[0].mxu0
    %162 = vdwg.mxu0
    %s163 = scalar_lea.vmem %s3, 32
    %v164 = vld [vmem:[%s163] sm:$0xff]
    %v165 = vld [vmem:[%s163 + $0x8] sm:$0xff]
    %v166 = vld [vmem:[%s163 + $0x10] sm:$0xff]
    %v167 = vld [vmem:[%s163 + $0x18] sm:$0xff]
    %v169 = vsel %vm65, %v164, 0
    %v172 = vsel %vm65, %v165, 0
    %v175 = vsel %vm65, %v166, 0
    %v178 = vsel %vm65, %v167, 0
    %180 = vmatprep.subr.mxu0 0.0
    %181 = vmatpush1.msra.mxu0 %v57
    %182 = vmatprep.subr.mxu0 0.0
    %183 = vmatpush1.msra.mxu0 %v58
    %184 = vmatprep.subr.mxu0 0.0
    %185 = vmatpush1.msra.mxu0 %v59
    %186 = vmatprep.subr.mxu0 0.0
    %187 = vmatpush1.msra.mxu0 %v60
    %188 = vmatprep.subr.mxu0 0.0
    %189 = vmatpush1.msra.mxu0 0.0
    %190 = vmatprep.subr.mxu0 0.0
    %191 = vmatpush1.msra.mxu0 0.0
    %192 = vmatprep.subr.mxu0 0.0
    %193 = vmatpush1.msra.mxu0 0.0
    %194 = vmatprep.subr.mxu0 0.0
    %195 = vmatpush1.msra.mxu0 0.0
    %196 = vmatprep.subr.mxu0 0.0
    %197 = vmatpush1.msra.mxu0 0.0
    %198 = vmatprep.subr.mxu0 0.0
    %199 = vmatpush1.msra.mxu0 0.0
    %200 = vmatprep.subr.mxu0 0.0
    %201 = vmatpush1.msra.mxu0 0.0
    %202 = vmatprep.subr.mxu0 0.0
    %203 = vmatpush1.msra.mxu0 0.0
    %204 = vmatprep.subr.mxu0 0.0
    %205 = vmatpush1.msra.mxu0 0.0
    %206 = vmatprep.subr.mxu0 0.0
    %207 = vmatpush1.msra.mxu0 0.0
    %208 = vmatprep.subr.mxu0 0.0
    %209 = vmatpush1.msra.mxu0 0.0
    %210 = vmatprep.subr.mxu0 0.0
    %211 = vmatpush1.msra.mxu0 0.0
    %212 = vmatprep.subr.mxu0 0.0
    %213 = vmatpush1.msra.mxu0 0.0
    %214 = vmatprep.subr.mxu0 0.0
    %215 = vmatpush1.msra.mxu0 0.0
    %216 = vmatprep.subr.mxu0 0.0
    %217 = vmatpush1.msra.mxu0 0.0
    %218 = vmatprep.subr.mxu0 0.0
    %219 = vmatpush1.msra.mxu0 0.0
    %220 = vmatprep.subr.mxu0 0.0
    %221 = vmatpush1.msra.mxu0 0.0
    %222 = vmatprep.subr.mxu0 0.0
    %223 = vmatpush1.msra.mxu0 0.0
    %224 = vmatprep.subr.mxu0 0.0
    %225 = vmatpush1.msra.mxu0 0.0
    %226 = vmatprep.subr.mxu0 0.0
    %227 = vmatpush1.msra.mxu0 0.0
    %228 = vmatprep.subr.mxu0 0.0
    %229 = vmatpush1.msra.mxu0 0.0
    %230 = vmatprep.subr.mxu0 0.0
    %231 = vmatpush1.msra.mxu0 0.0
    %232 = vmatprep.subr.mxu0 0.0
    %233 = vmatpush1.msra.mxu0 0.0
    %234 = vmatprep.subr.mxu0 0.0
    %235 = vmatpush1.msra.mxu0 0.0
    %236 = vmatprep.subr.mxu0 0.0
    %237 = vmatpush1.msra.mxu0 0.0
    %238 = vmatprep.subr.mxu0 0.0
    %239 = vmatpush1.msra.mxu0 0.0
    %240 = vmatprep.subr.mxu0 0.0
    %241 = vmatpush1.msra.mxu0 0.0
    %242 = vmatprep.subr.mxu0 0.0
    %243 = vmatpush1.msra.mxu0 0.0
    %244 = vmatprep.mubr.f32.mxu0 0.0
    %245 = vmatmul.mubr.f32.gmra.mrb[0].mxu0 %v169
    %v246 = vpop.f32.mrb[0].mxu0
    %v247 = vadd.f32 0.0, %v246
    %v248 = vpop.f32.mrb[0].mxu0
    %249 = vmatprep.mubr.f32.mxu0 0.0
    %250 = vmatmul.mubr.f32.gmra.mrb[0].mxu0 %v172
    %v251 = vpop.f32.mrb[0].mxu0
    %v252 = vadd.f32 0.0, %v251
    %v253 = vpop.f32.mrb[0].mxu0
    %254 = vmatprep.mubr.f32.mxu0 0.0
    %255 = vmatmul.mubr.f32.gmra.mrb[0].mxu0 %v175
    %v256 = vpop.f32.mrb[0].mxu0
    %v257 = vadd.f32 0.0, %v256
    %v258 = vpop.f32.mrb[0].mxu0
    %259 = vmatprep.mubr.f32.mxu0 0.0
    %260 = vmatmul.mubr.f32.gmra.mrb[0].mxu0 %v178
    %v261 = vpop.f32.mrb[0].mxu0
    %v262 = vadd.f32 0.0, %v261
    %v263 = vpop.f32.mrb[0].mxu0
    %264 = vdwg.mxu0
    %v265 = vld [vmem:[%s1] sm:$0xff]
    %v266 = vld [vmem:[%s1 + $0x8] sm:$0xff]
    %v267 = vld [vmem:[%s1 + $0x10] sm:$0xff]
    %v268 = vld [vmem:[%s1 + $0x18] sm:$0xff]
    %v269 = vld [vmem:[%s1 + $0x20] sm:$0xff]
    %v270 = vld [vmem:[%s1 + $0x28] sm:$0xff]
    %v271 = vld [vmem:[%s1 + $0x30] sm:$0xff]
    %v272 = vld [vmem:[%s1 + $0x38] sm:$0xff]
    %s273 = scalar_lea.vmem %s1, 64
    %v274 = vld [vmem:[%s273] sm:$0xff]
    %v275 = vld [vmem:[%s273 + $0x8] sm:$0xff]
    %v276 = vld [vmem:[%s273 + $0x10] sm:$0xff]
    %v277 = vld [vmem:[%s273 + $0x18] sm:$0xff]
    %v278 = vld [vmem:[%s273 + $0x20] sm:$0xff]
    %v279 = vld [vmem:[%s273 + $0x28] sm:$0xff]
    %v280 = vld [vmem:[%s273 + $0x30] sm:$0xff]
    %v281 = vld [vmem:[%s273 + $0x38] sm:$0xff]
    %vm282 = vcmask 523264
    %v284 = vsel %vm282, %v57, 0
    %v287 = vsel %vm282, %v58, 0
    %v290 = vsel %vm282, %v59, 0
    %v293 = vsel %vm282, %v60, 0
    %295 = vmatprep.subr.mxu0 0.0
    %296 = vmatpush1.msra.mxu0 %v274
    %297 = vmatprep.subr.mxu0 0.0
    %298 = vmatpush1.msra.mxu0 %v275
    %299 = vmatprep.subr.mxu0 0.0
    %300 = vmatpush1.msra.mxu0 %v276
    %301 = vmatprep.subr.mxu0 0.0
    %302 = vmatpush1.msra.mxu0 %v277
    %303 = vmatprep.subr.mxu0 0.0
    %304 = vmatpush1.msra.mxu0 %v278
    %305 = vmatprep.subr.mxu0 0.0
    %306 = vmatpush1.msra.mxu0 %v279
    %307 = vmatprep.subr.mxu0 0.0
    %308 = vmatpush1.msra.mxu0 %v280
    %309 = vmatprep.subr.mxu0 0.0
    %310 = vmatpush1.msra.mxu0 %v281
    %311 = vmatprep.subr.mxu0 0.0
    %312 = vmatpush1.msra.mxu0 0.0
    %313 = vmatprep.subr.mxu0 0.0
    %314 = vmatpush1.msra.mxu0 0.0
    %315 = vmatprep.subr.mxu0 0.0
    %316 = vmatpush1.msra.mxu0 0.0
    %317 = vmatprep.subr.mxu0 0.0
    %318 = vmatpush1.msra.mxu0 0.0
    %319 = vmatprep.subr.mxu0 0.0
    %320 = vmatpush1.msra.mxu0 0.0
    %321 = vmatprep.subr.mxu0 0.0
    %322 = vmatpush1.msra.mxu0 0.0
    %323 = vmatprep.subr.mxu0 0.0
    %324 = vmatpush1.msra.mxu0 0.0
    %325 = vmatprep.subr.mxu0 0.0
    %326 = vmatpush1.msra.mxu0 0.0
    %327 = vmatprep.subr.mxu0 0.0
    %328 = vmatpush1.msra.mxu0 0.0
    %329 = vmatprep.subr.mxu0 0.0
    %330 = vmatpush1.msra.mxu0 0.0
    %331 = vmatprep.subr.mxu0 0.0
    %332 = vmatpush1.msra.mxu0 0.0
    %333 = vmatprep.subr.mxu0 0.0
    %334 = vmatpush1.msra.mxu0 0.0
    %335 = vmatprep.subr.mxu0 0.0
    %336 = vmatpush1.msra.mxu0 0.0
    %337 = vmatprep.subr.mxu0 0.0
    %338 = vmatpush1.msra.mxu0 0.0
    %339 = vmatprep.subr.mxu0 0.0
    %340 = vmatpush1.msra.mxu0 0.0
    %341 = vmatprep.subr.mxu0 0.0
    %342 = vmatpush1.msra.mxu0 0.0
    %343 = vmatprep.subr.mxu0 0.0
    %344 = vmatpush1.msra.mxu0 0.0
    %345 = vmatprep.subr.mxu0 0.0
    %346 = vmatpush1.msra.mxu0 0.0
    %347 = vmatprep.subr.mxu0 0.0
    %348 = vmatpush1.msra.mxu0 0.0
    %349 = vmatprep.subr.mxu0 0.0
    %350 = vmatpush1.msra.mxu0 0.0
    %351 = vmatprep.subr.mxu0 0.0
    %352 = vmatpush1.msra.mxu0 0.0
    %353 = vmatprep.subr.mxu0 0.0
    %354 = vmatpush1.msra.mxu0 0.0
    %355 = vmatprep.subr.mxu0 0.0
    %356 = vmatpush1.msra.mxu0 0.0
    %357 = vmatprep.subr.mxu0 0.0
    %358 = vmatpush1.msra.mxu0 0.0
    %359 = vmatprep.mubr.f32.mxu0 0.0
    %360 = vmatmul.mubr.f32.gmra.mrb[0].mxu0 %v284
    %v361 = vpop.f32.mrb[0].mxu0
    %v362 = vadd.f32 0.0, %v361
    %v363 = vpop.f32.mrb[0].mxu0
    %364 = vmatprep.mubr.f32.mxu0 0.0
    %365 = vmatmul.mubr.f32.gmra.mrb[0].mxu0 %v287
    %v366 = vpop.f32.mrb[0].mxu0
    %v367 = vadd.f32 0.0, %v366
    %v368 = vpop.f32.mrb[0].mxu0
    %369 = vmatprep.mubr.f32.mxu0 0.0
    %370 = vmatmul.mubr.f32.gmra.mrb[0].mxu0 %v290
    %v371 = vpop.f32.mrb[0].mxu0
    %v372 = vadd.f32 0.0, %v371
    %v373 = vpop.f32.mrb[0].mxu0
    %374 = vmatprep.mubr.f32.mxu0 0.0
    %375 = vmatmul.mubr.f32.gmra.mrb[0].mxu0 %v293
    %v376 = vpop.f32.mrb[0].mxu0
    %v377 = vadd.f32 0.0, %v376
    %v378 = vpop.f32.mrb[0].mxu0
    %379 = vdwg.mxu0
    %v381 = vsel %vm282, %v145, 0
    %v384 = vsel %vm282, %v150, 0
    %v387 = vsel %vm282, %v155, 0
    %v390 = vsel %vm282, %v160, 0
    %392 = vmatprep.subr.mxu0 0.0
    %393 = vmatpush1.msra.mxu0 %v265
    %394 = vmatprep.subr.mxu0 0.0
    %395 = vmatpush1.msra.mxu0 %v266
    %396 = vmatprep.subr.mxu0 0.0
    %397 = vmatpush1.msra.mxu0 %v267
    %398 = vmatprep.subr.mxu0 0.0
    %399 = vmatpush1.msra.mxu0 %v268
    %400 = vmatprep.subr.mxu0 0.0
    %401 = vmatpush1.msra.mxu0 %v269
    %402 = vmatprep.subr.mxu0 0.0
    %403 = vmatpush1.msra.mxu0 %v270
    %404 = vmatprep.subr.mxu0 0.0
    %405 = vmatpush1.msra.mxu0 %v271
    %406 = vmatprep.subr.mxu0 0.0
    %407 = vmatpush1.msra.mxu0 %v272
    %408 = vmatprep.subr.mxu0 0.0
    %409 = vmatpush1.msra.mxu0 0.0
    %410 = vmatprep.subr.mxu0 0.0
    %411 = vmatpush1.msra.mxu0 0.0
    %412 = vmatprep.subr.mxu0 0.0
    %413 = vmatpush1.msra.mxu0 0.0
    %414 = vmatprep.subr.mxu0 0.0
    %415 = vmatpush1.msra.mxu0 0.0
    %416 = vmatprep.subr.mxu0 0.0
    %417 = vmatpush1.msra.mxu0 0.0
    %418 = vmatprep.subr.mxu0 0.0
    %419 = vmatpush1.msra.mxu0 0.0
    %420 = vmatprep.subr.mxu0 0.0
    %421 = vmatpush1.msra.mxu0 0.0
    %422 = vmatprep.subr.mxu0 0.0
    %423 = vmatpush1.msra.mxu0 0.0
    %424 = vmatprep.subr.mxu0 0.0
    %425 = vmatpush1.msra.mxu0 0.0
    %426 = vmatprep.subr.mxu0 0.0
    %427 = vmatpush1.msra.mxu0 0.0
    %428 = vmatprep.subr.mxu0 0.0
    %429 = vmatpush1.msra.mxu0 0.0
    %430 = vmatprep.subr.mxu0 0.0
    %431 = vmatpush1.msra.mxu0 0.0
    %432 = vmatprep.subr.mxu0 0.0
    %433 = vmatpush1.msra.mxu0 0.0
    %434 = vmatprep.subr.mxu0 0.0
    %435 = vmatpush1.msra.mxu0 0.0
    %436 = vmatprep.subr.mxu0 0.0
    %437 = vmatpush1.msra.mxu0 0.0
    %438 = vmatprep.subr.mxu0 0.0
    %439 = vmatpush1.msra.mxu0 0.0
    %440 = vmatprep.subr.mxu0 0.0
    %441 = vmatpush1.msra.mxu0 0.0
    %442 = vmatprep.subr.mxu0 0.0
    %443 = vmatpush1.msra.mxu0 0.0
    %444 = vmatprep.subr.mxu0 0.0
    %445 = vmatpush1.msra.mxu0 0.0
    %446 = vmatprep.subr.mxu0 0.0
    %447 = vmatpush1.msra.mxu0 0.0
    %448 = vmatprep.subr.mxu0 0.0
    %449 = vmatpush1.msra.mxu0 0.0
    %450 = vmatprep.subr.mxu0 0.0
    %451 = vmatpush1.msra.mxu0 0.0
    %452 = vmatprep.subr.mxu0 0.0
    %453 = vmatpush1.msra.mxu0 0.0
    %454 = vmatprep.subr.mxu0 0.0
    %455 = vmatpush1.msra.mxu0 0.0
    %456 = vmatprep.mubr.f32.mxu0 0.0
    %457 = vmatmul.mubr.f32.gmra.mrb[0].mxu0 %v381
    %v458 = vpop.f32.mrb[0].mxu0
    %v459 = vadd.f32 %v362, %v458
    %v460 = vpop.f32.mrb[0].mxu0
    %461 = vmatprep.mubr.f32.mxu0 0.0
    %462 = vmatmul.mubr.f32.gmra.mrb[0].mxu0 %v384
    %v463 = vpop.f32.mrb[0].mxu0
    %v464 = vadd.f32 %v367, %v463
    %v465 = vpop.f32.mrb[0].mxu0
    %466 = vmatprep.mubr.f32.mxu0 0.0
    %467 = vmatmul.mubr.f32.gmra.mrb[0].mxu0 %v387
    %v468 = vpop.f32.mrb[0].mxu0
    %v469 = vadd.f32 %v372, %v468
    %v470 = vpop.f32.mrb[0].mxu0
    %471 = vmatprep.mubr.f32.mxu0 0.0
    %472 = vmatmul.mubr.f32.gmra.mrb[0].mxu0 %v390
    %v473 = vpop.f32.mrb[0].mxu0
    %v474 = vadd.f32 %v377, %v473
    %v475 = vpop.f32.mrb[0].mxu0
    %476 = vdwg.mxu0
    %s477 = scalar_lea.vmem %s1, 128
    %v478 = vld [vmem:[%s477] sm:$0xff]
    %v479 = vld [vmem:[%s477 + $0x8] sm:$0xff]
    %v480 = vld [vmem:[%s477 + $0x10] sm:$0xff]
    %v481 = vld [vmem:[%s477 + $0x18] sm:$0xff]
    %v482 = vld [vmem:[%s477 + $0x20] sm:$0xff]
    %v483 = vld [vmem:[%s477 + $0x28] sm:$0xff]
    %v484 = vld [vmem:[%s477 + $0x30] sm:$0xff]
    %v485 = vld [vmem:[%s477 + $0x38] sm:$0xff]
    %v487 = vsel %vm282, %v247, 0
    %v490 = vsel %vm282, %v252, 0
    %v493 = vsel %vm282, %v257, 0
    %v496 = vsel %vm282, %v262, 0
    %498 = vmatprep.subr.mxu0 0.0
    %499 = vmatpush1.msra.mxu0 %v478
    %500 = vmatprep.subr.mxu0 0.0
    %501 = vmatpush1.msra.mxu0 %v479
    %502 = vmatprep.subr.mxu0 0.0
    %503 = vmatpush1.msra.mxu0 %v480
    %504 = vmatprep.subr.mxu0 0.0
    %505 = vmatpush1.msra.mxu0 %v481
    %506 = vmatprep.subr.mxu0 0.0
    %507 = vmatpush1.msra.mxu0 %v482
    %508 = vmatprep.subr.mxu0 0.0
    %509 = vmatpush1.msra.mxu0 %v483
    %510 = vmatprep.subr.mxu0 0.0
    %511 = vmatpush1.msra.mxu0 %v484
    %512 = vmatprep.subr.mxu0 0.0
    %513 = vmatpush1.msra.mxu0 %v485
    %514 = vmatprep.subr.mxu0 0.0
    %515 = vmatpush1.msra.mxu0 0.0
    %516 = vmatprep.subr.mxu0 0.0
    %517 = vmatpush1.msra.mxu0 0.0
    %518 = vmatprep.subr.mxu0 0.0
    %519 = vmatpush1.msra.mxu0 0.0
    %520 = vmatprep.subr.mxu0 0.0
    %521 = vmatpush1.msra.mxu0 0.0
    %522 = vmatprep.subr.mxu0 0.0
    %523 = vmatpush1.msra.mxu0 0.0
    %524 = vmatprep.subr.mxu0 0.0
    %525 = vmatpush1.msra.mxu0 0.0
    %526 = vmatprep.subr.mxu0 0.0
    %527 = vmatpush1.msra.mxu0 0.0
    %528 = vmatprep.subr.mxu0 0.0
    %529 = vmatpush1.msra.mxu0 0.0
    %530 = vmatprep.subr.mxu0 0.0
    %531 = vmatpush1.msra.mxu0 0.0
    %532 = vmatprep.subr.mxu0 0.0
    %533 = vmatpush1.msra.mxu0 0.0
    %534 = vmatprep.subr.mxu0 0.0
    %535 = vmatpush1.msra.mxu0 0.0
    %536 = vmatprep.subr.mxu0 0.0
    %537 = vmatpush1.msra.mxu0 0.0
    %538 = vmatprep.subr.mxu0 0.0
    %539 = vmatpush1.msra.mxu0 0.0
    %540 = vmatprep.subr.mxu0 0.0
    %541 = vmatpush1.msra.mxu0 0.0
    %542 = vmatprep.subr.mxu0 0.0
    %543 = vmatpush1.msra.mxu0 0.0
    %544 = vmatprep.subr.mxu0 0.0
    %545 = vmatpush1.msra.mxu0 0.0
    %546 = vmatprep.subr.mxu0 0.0
    %547 = vmatpush1.msra.mxu0 0.0
    %548 = vmatprep.subr.mxu0 0.0
    %549 = vmatpush1.msra.mxu0 0.0
    %550 = vmatprep.subr.mxu0 0.0
    %551 = vmatpush1.msra.mxu0 0.0
    %552 = vmatprep.subr.mxu0 0.0
    %553 = vmatpush1.msra.mxu0 0.0
    %554 = vmatprep.subr.mxu0 0.0
    %555 = vmatpush1.msra.mxu0 0.0
    %556 = vmatprep.subr.mxu0 0.0
    %557 = vmatpush1.msra.mxu0 0.0
    %558 = vmatprep.subr.mxu0 0.0
    %559 = vmatpush1.msra.mxu0 0.0
    %560 = vmatprep.subr.mxu0 0.0
    %561 = vmatpush1.msra.mxu0 0.0
    %562 = vmatprep.mubr.f32.mxu0 0.0
    %563 = vmatmul.mubr.f32.gmra.mrb[0].mxu0 %v487
    %v564 = vpop.f32.mrb[0].mxu0
    %v565 = vadd.f32 0.0, %v564
    %v566 = vpop.f32.mrb[0].mxu0
    %567 = vmatprep.mubr.f32.mxu0 0.0
    %568 = vmatmul.mubr.f32.gmra.mrb[0].mxu0 %v490
    %v569 = vpop.f32.mrb[0].mxu0
    %v570 = vadd.f32 0.0, %v569
    %v571 = vpop.f32.mrb[0].mxu0
    %572 = vmatprep.mubr.f32.mxu0 0.0
    %573 = vmatmul.mubr.f32.gmra.mrb[0].mxu0 %v493
    %v574 = vpop.f32.mrb[0].mxu0
    %v575 = vadd.f32 0.0, %v574
    %v576 = vpop.f32.mrb[0].mxu0
    %577 = vmatprep.mubr.f32.mxu0 0.0
    %578 = vmatmul.mubr.f32.gmra.mrb[0].mxu0 %v496
    %v579 = vpop.f32.mrb[0].mxu0
    %v580 = vadd.f32 0.0, %v579
    %v581 = vpop.f32.mrb[0].mxu0
    %582 = vdwg.mxu0
    %v583 = vadd.f32 %v459, %v565
    %v584 = vadd.f32 %v464, %v570
    %v585 = vadd.f32 %v469, %v575
    %v586 = vadd.f32 %v474, %v580
    %v587 = vld [vmem:[%s2] sm:$0x1]
    %v589 = vlaneseq
    %v590 = vshrl.u32 %v589, 7
    %v591 = vsub.s32 0, %v590
    %v592 = vrot.slane %v587, %v591
    %v594 = vadd.f32 %v583, %v592
    %v595 = vadd.f32 %v584, %v592
    %v596 = vadd.f32 %v585, %v592
    %v597 = vadd.f32 %v586, %v592
    %v598 = vmax.f32 %v594, 0.0
    %v599 = vmax.f32 %v595, 0.0
    %v600 = vmax.f32 %v596, 0.0
    %v601 = vmax.f32 %v597, 0.0
    %v602 = vld [vmem:[%s6] sm:$0xff]
    %v603 = vld [vmem:[%s6 + $0x8] sm:$0xff]
    %v605 = vsel %vm65, %v602, 0
    %v608 = vsel %vm65, %v603, 0
    %610 = vmatprep.subr.mxu0 0.0
    %611 = vmatpush1.msra.mxu0 %v598
    %612 = vmatprep.subr.mxu0 0.0
    %613 = vmatpush1.msra.mxu0 %v599
    %614 = vmatprep.subr.mxu0 0.0
    %615 = vmatpush1.msra.mxu0 %v600
    %616 = vmatprep.subr.mxu0 0.0
    %617 = vmatpush1.msra.mxu0 %v601
    %618 = vmatprep.subr.mxu0 0.0
    %619 = vmatpush1.msra.mxu0 0.0
    %620 = vmatprep.subr.mxu0 0.0
    %621 = vmatpush1.msra.mxu0 0.0
    %622 = vmatprep.subr.mxu0 0.0
    %623 = vmatpush1.msra.mxu0 0.0
    %624 = vmatprep.subr.mxu0 0.0
    %625 = vmatpush1.msra.mxu0 0.0
    %626 = vmatprep.subr.mxu0 0.0
    %627 = vmatpush1.msra.mxu0 0.0
    %628 = vmatprep.subr.mxu0 0.0
    %629 = vmatpush1.msra.mxu0 0.0
    %630 = vmatprep.subr.mxu0 0.0
    %631 = vmatpush1.msra.mxu0 0.0
    %632 = vmatprep.subr.mxu0 0.0
    %633 = vmatpush1.msra.mxu0 0.0
    %634 = vmatprep.subr.mxu0 0.0
    %635 = vmatpush1.msra.mxu0 0.0
    %636 = vmatprep.subr.mxu0 0.0
    %637 = vmatpush1.msra.mxu0 0.0
    %638 = vmatprep.subr.mxu0 0.0
    %639 = vmatpush1.msra.mxu0 0.0
    %640 = vmatprep.subr.mxu0 0.0
    %641 = vmatpush1.msra.mxu0 0.0
    %642 = vmatprep.subr.mxu0 0.0
    %643 = vmatpush1.msra.mxu0 0.0
    %644 = vmatprep.subr.mxu0 0.0
    %645 = vmatpush1.msra.mxu0 0.0
    %646 = vmatprep.subr.mxu0 0.0
    %647 = vmatpush1.msra.mxu0 0.0
    %648 = vmatprep.subr.mxu0 0.0
    %649 = vmatpush1.msra.mxu0 0.0
    %650 = vmatprep.subr.mxu0 0.0
    %651 = vmatpush1.msra.mxu0 0.0
    %652 = vmatprep.subr.mxu0 0.0
    %653 = vmatpush1.msra.mxu0 0.0
    %654 = vmatprep.subr.mxu0 0.0
    %655 = vmatpush1.msra.mxu0 0.0
    %656 = vmatprep.subr.mxu0 0.0
    %657 = vmatpush1.msra.mxu0 0.0
    %658 = vmatprep.subr.mxu0 0.0
    %659 = vmatpush1.msra.mxu0 0.0
    %660 = vmatprep.subr.mxu0 0.0
    %661 = vmatpush1.msra.mxu0 0.0
    %662 = vmatprep.subr.mxu0 0.0
    %663 = vmatpush1.msra.mxu0 0.0
    %664 = vmatprep.subr.mxu0 0.0
    %665 = vmatpush1.msra.mxu0 0.0
    %666 = vmatprep.subr.mxu0 0.0
    %667 = vmatpush1.msra.mxu0 0.0
    %668 = vmatprep.subr.mxu0 0.0
    %669 = vmatpush1.msra.mxu0 0.0
    %670 = vmatprep.subr.mxu0 0.0
    %671 = vmatpush1.msra.mxu0 0.0
    %672 = vmatprep.subr.mxu0 0.0
    %673 = vmatpush1.msra.mxu0 0.0
    %674 = vmatprep.mubr.f32.mxu0 0.0
    %675 = vmatmul.mubr.f32.gmra.mrb[0].mxu0 %v605
    %v676 = vpop.f32.mrb[0].mxu0
    %v677 = vadd.f32 0.0, %v676
    %v678 = vpop.f32.mrb[0].mxu0
    %679 = vmatprep.mubr.f32.mxu0 0.0
    %680 = vmatmul.mubr.f32.gmra.mrb[0].mxu0 %v608
    %v681 = vpop.f32.mrb[0].mxu0
    %v682 = vadd.f32 0.0, %v681
    %v683 = vpop.f32.mrb[0].mxu0
    %684 = vdwg.mxu0
    %s685 = scalar_lea.vmem %s6, 16
    %v686 = vld [vmem:[%s685] sm:$0xff]
    %v687 = vld [vmem:[%s685 + $0x8] sm:$0xff]
    %v689 = vsel %vm65, %v686, 0
    %v692 = vsel %vm65, %v687, 0
    %694 = vmatprep.subr.mxu0 0.0
    %695 = vmatpush1.msra.mxu0 %v598
    %696 = vmatprep.subr.mxu0 0.0
    %697 = vmatpush1.msra.mxu0 %v599
    %698 = vmatprep.subr.mxu0 0.0
    %699 = vmatpush1.msra.mxu0 %v600
    %700 = vmatprep.subr.mxu0 0.0
    %701 = vmatpush1.msra.mxu0 %v601
    %702 = vmatprep.subr.mxu0 0.0
    %703 = vmatpush1.msra.mxu0 0.0
    %704 = vmatprep.subr.mxu0 0.0
    %705 = vmatpush1.msra.mxu0 0.0
    %706 = vmatprep.subr.mxu0 0.0
    %707 = vmatpush1.msra.mxu0 0.0
    %708 = vmatprep.subr.mxu0 0.0
    %709 = vmatpush1.msra.mxu0 0.0
    %710 = vmatprep.subr.mxu0 0.0
    %711 = vmatpush1.msra.mxu0 0.0
    %712 = vmatprep.subr.mxu0 0.0
    %713 = vmatpush1.msra.mxu0 0.0
    %714 = vmatprep.subr.mxu0 0.0
    %715 = vmatpush1.msra.mxu0 0.0
    %716 = vmatprep.subr.mxu0 0.0
    %717 = vmatpush1.msra.mxu0 0.0
    %718 = vmatprep.subr.mxu0 0.0
    %719 = vmatpush1.msra.mxu0 0.0
    %720 = vmatprep.subr.mxu0 0.0
    %721 = vmatpush1.msra.mxu0 0.0
    %722 = vmatprep.subr.mxu0 0.0
    %723 = vmatpush1.msra.mxu0 0.0
    %724 = vmatprep.subr.mxu0 0.0
    %725 = vmatpush1.msra.mxu0 0.0
    %726 = vmatprep.subr.mxu0 0.0
    %727 = vmatpush1.msra.mxu0 0.0
    %728 = vmatprep.subr.mxu0 0.0
    %729 = vmatpush1.msra.mxu0 0.0
    %730 = vmatprep.subr.mxu0 0.0
    %731 = vmatpush1.msra.mxu0 0.0
    %732 = vmatprep.subr.mxu0 0.0
    %733 = vmatpush1.msra.mxu0 0.0
    %734 = vmatprep.subr.mxu0 0.0
    %735 = vmatpush1.msra.mxu0 0.0
    %736 = vmatprep.subr.mxu0 0.0
    %737 = vmatpush1.msra.mxu0 0.0
    %738 = vmatprep.subr.mxu0 0.0
    %739 = vmatpush1.msra.mxu0 0.0
    %740 = vmatprep.subr.mxu0 0.0
    %741 = vmatpush1.msra.mxu0 0.0
    %742 = vmatprep.subr.mxu0 0.0
    %743 = vmatpush1.msra.mxu0 0.0
    %744 = vmatprep.subr.mxu0 0.0
    %745 = vmatpush1.msra.mxu0 0.0
    %746 = vmatprep.subr.mxu0 0.0
    %747 = vmatpush1.msra.mxu0 0.0
    %748 = vmatprep.subr.mxu0 0.0
    %749 = vmatpush1.msra.mxu0 0.0
    %750 = vmatprep.subr.mxu0 0.0
    %751 = vmatpush1.msra.mxu0 0.0
    %752 = vmatprep.subr.mxu0 0.0
    %753 = vmatpush1.msra.mxu0 0.0
    %754 = vmatprep.subr.mxu0 0.0
    %755 = vmatpush1.msra.mxu0 0.0
    %756 = vmatprep.subr.mxu0 0.0
    %757 = vmatpush1.msra.mxu0 0.0
    %758 = vmatprep.mubr.f32.mxu0 0.0
    %759 = vmatmul.mubr.f32.gmra.mrb[0].mxu0 %v689
    %v760 = vpop.f32.mrb[0].mxu0
    %v761 = vadd.f32 0.0, %v760
    %v762 = vpop.f32.mrb[0].mxu0
    %763 = vmatprep.mubr.f32.mxu0 0.0
    %764 = vmatmul.mubr.f32.gmra.mrb[0].mxu0 %v692
    %v765 = vpop.f32.mrb[0].mxu0
    %v766 = vadd.f32 0.0, %v765
    %v767 = vpop.f32.mrb[0].mxu0
    %768 = vdwg.mxu0
    %v769 = vmax.f32 %v677, %v761
    %v770 = vmax.f32 %v682, %v766
    %v771 = vld [vmem:[%s9] sm:$0xff]
    %v772 = vld [vmem:[%s9 + $0x8] sm:$0xff]
    %v773 = vld [vmem:[%s9 + $0x10] sm:$0xff]
    %v774 = vld [vmem:[%s9 + $0x18] sm:$0xff]
    %v775 = vld [vmem:[%s9 + $0x20] sm:$0xff]
    %v776 = vld [vmem:[%s9 + $0x28] sm:$0xff]
    %v777 = vld [vmem:[%s9 + $0x30] sm:$0xff]
    %v778 = vld [vmem:[%s9 + $0x38] sm:$0xff]
    %v779 = vld [vmem:[%s9 + $0x40] sm:$0xff]
    %v780 = vld [vmem:[%s9 + $0x48] sm:$0xff]
    %v781 = vld [vmem:[%s9 + $0x50] sm:$0xff]
    %v782 = vld [vmem:[%s9 + $0x58] sm:$0xff]
    %v783 = vld [vmem:[%s9 + $0x60] sm:$0xff]
    %v784 = vld [vmem:[%s9 + $0x68] sm:$0xff]
    %v785 = vld [vmem:[%s9 + $0x70] sm:$0xff]
    %v786 = vld [vmem:[%s9 + $0x78] sm:$0xff]
    %787 = vmatprep.subr.mxu0 0.0
    %788 = vmatpush1.msra.mxu0 %v771
    %789 = vmatprep.subr.mxu0 0.0
    %790 = vmatpush1.msra.mxu0 %v772
    %791 = vmatprep.subr.mxu0 0.0
    %792 = vmatpush1.msra.mxu0 %v773
    %793 = vmatprep.subr.mxu0 0.0
    %794 = vmatpush1.msra.mxu0 %v774
    %795 = vmatprep.subr.mxu0 0.0
    %796 = vmatpush1.msra.mxu0 %v775
    %797 = vmatprep.subr.mxu0 0.0
    %798 = vmatpush1.msra.mxu0 %v776
    %799 = vmatprep.subr.mxu0 0.0
    %800 = vmatpush1.msra.mxu0 %v777
    %801 = vmatprep.subr.mxu0 0.0
    %802 = vmatpush1.msra.mxu0 %v778
    %803 = vmatprep.subr.mxu0 0.0
    %804 = vmatpush1.msra.mxu0 %v779
    %805 = vmatprep.subr.mxu0 0.0
    %806 = vmatpush1.msra.mxu0 %v780
    %807 = vmatprep.subr.mxu0 0.0
    %808 = vmatpush1.msra.mxu0 %v781
    %809 = vmatprep.subr.mxu0 0.0
    %810 = vmatpush1.msra.mxu0 %v782
    %811 = vmatprep.subr.mxu0 0.0
    %812 = vmatpush1.msra.mxu0 %v783
    %813 = vmatprep.subr.mxu0 0.0
    %814 = vmatpush1.msra.mxu0 %v784
    %815 = vmatprep.subr.mxu0 0.0
    %816 = vmatpush1.msra.mxu0 %v785
    %817 = vmatprep.subr.mxu0 0.0
    %818 = vmatpush1.msra.mxu0 %v786
    %819 = vmatprep.subr.mxu0 0.0
    %820 = vmatpush1.msra.mxu0 0.0
    %821 = vmatprep.subr.mxu0 0.0
    %822 = vmatpush1.msra.mxu0 0.0
    %823 = vmatprep.subr.mxu0 0.0
    %824 = vmatpush1.msra.mxu0 0.0
    %825 = vmatprep.subr.mxu0 0.0
    %826 = vmatpush1.msra.mxu0 0.0
    %827 = vmatprep.subr.mxu0 0.0
    %828 = vmatpush1.msra.mxu0 0.0
    %829 = vmatprep.subr.mxu0 0.0
    %830 = vmatpush1.msra.mxu0 0.0
    %831 = vmatprep.subr.mxu0 0.0
    %832 = vmatpush1.msra.mxu0 0.0
    %833 = vmatprep.subr.mxu0 0.0
    %834 = vmatpush1.msra.mxu0 0.0
    %835 = vmatprep.subr.mxu0 0.0
    %836 = vmatpush1.msra.mxu0 0.0
    %837 = vmatprep.subr.mxu0 0.0
    %838 = vmatpush1.msra.mxu0 0.0
    %839 = vmatprep.subr.mxu0 0.0
    %840 = vmatpush1.msra.mxu0 0.0
    %841 = vmatprep.subr.mxu0 0.0
    %842 = vmatpush1.msra.mxu0 0.0
    %843 = vmatprep.subr.mxu0 0.0
    %844 = vmatpush1.msra.mxu0 0.0
    %845 = vmatprep.subr.mxu0 0.0
    %846 = vmatpush1.msra.mxu0 0.0
    %847 = vmatprep.subr.mxu0 0.0
    %848 = vmatpush1.msra.mxu0 0.0
    %849 = vmatprep.subr.mxu0 0.0
    %850 = vmatpush1.msra.mxu0 0.0
    %851 = vmatprep.mubr.f32.mxu0 0.0
    %852 = vmatmul.mubr.f32.gmra.mrb[0].mxu0 %v769
    %v853 = vpop.f32.mrb[0].mxu0
    %v854 = vadd.f32 0.0, %v853
    %v855 = vpop.f32.mrb[0].mxu0
    %856 = vmatprep.mubr.f32.mxu0 0.0
    %857 = vmatmul.mubr.f32.gmra.mrb[0].mxu0 %v770
    %v858 = vpop.f32.mrb[0].mxu0
    %v859 = vadd.f32 0.0, %v858
    %v860 = vpop.f32.mrb[0].mxu0
    %861 = vdwg.mxu0
    %s862 = scalar_lea.vmem %s9, 128
    %v863 = vld [vmem:[%s862] sm:$0xff]
    %v864 = vld [vmem:[%s862 + $0x8] sm:$0xff]
    %v865 = vld [vmem:[%s862 + $0x10] sm:$0xff]
    %v866 = vld [vmem:[%s862 + $0x18] sm:$0xff]
    %v867 = vld [vmem:[%s862 + $0x20] sm:$0xff]
    %v868 = vld [vmem:[%s862 + $0x28] sm:$0xff]
    %v869 = vld [vmem:[%s862 + $0x30] sm:$0xff]
    %v870 = vld [vmem:[%s862 + $0x38] sm:$0xff]
    %v871 = vld [vmem:[%s862 + $0x40] sm:$0xff]
    %v872 = vld [vmem:[%s862 + $0x48] sm:$0xff]
    %v873 = vld [vmem:[%s862 + $0x50] sm:$0xff]
    %v874 = vld [vmem:[%s862 + $0x58] sm:$0xff]
    %v875 = vld [vmem:[%s862 + $0x60] sm:$0xff]
    %v876 = vld [vmem:[%s862 + $0x68] sm:$0xff]
    %v877 = vld [vmem:[%s862 + $0x70] sm:$0xff]
    %v878 = vld [vmem:[%s862 + $0x78] sm:$0xff]
    %879 = vmatprep.subr.mxu0 0.0
    %880 = vmatpush1.msra.mxu0 %v863
    %881 = vmatprep.subr.mxu0 0.0
    %882 = vmatpush1.msra.mxu0 %v864
    %883 = vmatprep.subr.mxu0 0.0
    %884 = vmatpush1.msra.mxu0 %v865
    %885 = vmatprep.subr.mxu0 0.0
    %886 = vmatpush1.msra.mxu0 %v866
    %887 = vmatprep.subr.mxu0 0.0
    %888 = vmatpush1.msra.mxu0 %v867
    %889 = vmatprep.subr.mxu0 0.0
    %890 = vmatpush1.msra.mxu0 %v868
    %891 = vmatprep.subr.mxu0 0.0
    %892 = vmatpush1.msra.mxu0 %v869
    %893 = vmatprep.subr.mxu0 0.0
    %894 = vmatpush1.msra.mxu0 %v870
    %895 = vmatprep.subr.mxu0 0.0
    %896 = vmatpush1.msra.mxu0 %v871
    %897 = vmatprep.subr.mxu0 0.0
    %898 = vmatpush1.msra.mxu0 %v872
    %899 = vmatprep.subr.mxu0 0.0
    %900 = vmatpush1.msra.mxu0 %v873
    %901 = vmatprep.subr.mxu0 0.0
    %902 = vmatpush1.msra.mxu0 %v874
    %903 = vmatprep.subr.mxu0 0.0
    %904 = vmatpush1.msra.mxu0 %v875
    %905 = vmatprep.subr.mxu0 0.0
    %906 = vmatpush1.msra.mxu0 %v876
    %907 = vmatprep.subr.mxu0 0.0
    %908 = vmatpush1.msra.mxu0 %v877
    %909 = vmatprep.subr.mxu0 0.0
    %910 = vmatpush1.msra.mxu0 %v878
    %911 = vmatprep.subr.mxu0 0.0
    %912 = vmatpush1.msra.mxu0 0.0
    %913 = vmatprep.subr.mxu0 0.0
    %914 = vmatpush1.msra.mxu0 0.0
    %915 = vmatprep.subr.mxu0 0.0
    %916 = vmatpush1.msra.mxu0 0.0
    %917 = vmatprep.subr.mxu0 0.0
    %918 = vmatpush1.msra.mxu0 0.0
    %919 = vmatprep.subr.mxu0 0.0
    %920 = vmatpush1.msra.mxu0 0.0
    %921 = vmatprep.subr.mxu0 0.0
    %922 = vmatpush1.msra.mxu0 0.0
    %923 = vmatprep.subr.mxu0 0.0
    %924 = vmatpush1.msra.mxu0 0.0
    %925 = vmatprep.subr.mxu0 0.0
    %926 = vmatpush1.msra.mxu0 0.0
    %927 = vmatprep.subr.mxu0 0.0
    %928 = vmatpush1.msra.mxu0 0.0
    %929 = vmatprep.subr.mxu0 0.0
    %930 = vmatpush1.msra.mxu0 0.0
    %931 = vmatprep.subr.mxu0 0.0
    %932 = vmatpush1.msra.mxu0 0.0
    %933 = vmatprep.subr.mxu0 0.0
    %934 = vmatpush1.msra.mxu0 0.0
    %935 = vmatprep.subr.mxu0 0.0
    %936 = vmatpush1.msra.mxu0 0.0
    %937 = vmatprep.subr.mxu0 0.0
    %938 = vmatpush1.msra.mxu0 0.0
    %939 = vmatprep.subr.mxu0 0.0
    %940 = vmatpush1.msra.mxu0 0.0
    %941 = vmatprep.subr.mxu0 0.0
    %942 = vmatpush1.msra.mxu0 0.0
    %943 = vmatprep.mubr.f32.mxu0 0.0
    %944 = vmatmul.mubr.f32.gmra.mrb[0].mxu0 %v769
    %v945 = vpop.f32.mrb[0].mxu0
    %v946 = vadd.f32 0.0, %v945
    %v947 = vpop.f32.mrb[0].mxu0
    %948 = vmatprep.mubr.f32.mxu0 0.0
    %949 = vmatmul.mubr.f32.gmra.mrb[0].mxu0 %v770
    %v950 = vpop.f32.mrb[0].mxu0
    %v951 = vadd.f32 0.0, %v950
    %v952 = vpop.f32.mrb[0].mxu0
    %953 = vdwg.mxu0
    %v954 = vmax.f32 %v854, %v946
    %v955 = vmax.f32 %v859, %v951
    %v956 = vld [vmem:[%s4] sm:$0xff]
    %v957 = vld [vmem:[%s4 + $0x8] sm:$0xff]
    %vm958 = vcmask 130048
    %v960 = vsel %vm958, %v956, 0
    %v963 = vsel %vm958, %v957, 0
    %965 = vmatprep.subr.mxu0 0.0
    %966 = vmatpush1.msra.mxu0 %v954
    %967 = vmatprep.subr.mxu0 0.0
    %968 = vmatpush1.msra.mxu0 %v955
    %969 = vmatprep.subr.mxu0 0.0
    %970 = vmatpush1.msra.mxu0 0.0
    %971 = vmatprep.subr.mxu0 0.0
    %972 = vmatpush1.msra.mxu0 0.0
    %973 = vmatprep.subr.mxu0 0.0
    %974 = vmatpush1.msra.mxu0 0.0
    %975 = vmatprep.subr.mxu0 0.0
    %976 = vmatpush1.msra.mxu0 0.0
    %977 = vmatprep.subr.mxu0 0.0
    %978 = vmatpush1.msra.mxu0 0.0
    %979 = vmatprep.subr.mxu0 0.0
    %980 = vmatpush1.msra.mxu0 0.0
    %981 = vmatprep.subr.mxu0 0.0
    %982 = vmatpush1.msra.mxu0 0.0
    %983 = vmatprep.subr.mxu0 0.0
    %984 = vmatpush1.msra.mxu0 0.0
    %985 = vmatprep.subr.mxu0 0.0
    %986 = vmatpush1.msra.mxu0 0.0
    %987 = vmatprep.subr.mxu0 0.0
    %988 = vmatpush1.msra.mxu0 0.0
    %989 = vmatprep.subr.mxu0 0.0
    %990 = vmatpush1.msra.mxu0 0.0
    %991 = vmatprep.subr.mxu0 0.0
    %992 = vmatpush1.msra.mxu0 0.0
    %993 = vmatprep.subr.mxu0 0.0
    %994 = vmatpush1.msra.mxu0 0.0
    %995 = vmatprep.subr.mxu0 0.0
    %996 = vmatpush1.msra.mxu0 0.0
    %997 = vmatprep.subr.mxu0 0.0
    %998 = vmatpush1.msra.mxu0 0.0
    %999 = vmatprep.subr.mxu0 0.0
    %1000 = vmatpush1.msra.mxu0 0.0
    %1001 = vmatprep.subr.mxu0 0.0
    %1002 = vmatpush1.msra.mxu0 0.0
    %1003 = vmatprep.subr.mxu0 0.0
    %1004 = vmatpush1.msra.mxu0 0.0
    %1005 = vmatprep.subr.mxu0 0.0
    %1006 = vmatpush1.msra.mxu0 0.0
    %1007 = vmatprep.subr.mxu0 0.0
    %1008 = vmatpush1.msra.mxu0 0.0
    %1009 = vmatprep.subr.mxu0 0.0
    %1010 = vmatpush1.msra.mxu0 0.0
    %1011 = vmatprep.subr.mxu0 0.0
    %1012 = vmatpush1.msra.mxu0 0.0
    %1013 = vmatprep.subr.mxu0 0.0
    %1014 = vmatpush1.msra.mxu0 0.0
    %1015 = vmatprep.subr.mxu0 0.0
    %1016 = vmatpush1.msra.mxu0 0.0
    %1017 = vmatprep.subr.mxu0 0.0
    %1018 = vmatpush1.msra.mxu0 0.0
    %1019 = vmatprep.subr.mxu0 0.0
    %1020 = vmatpush1.msra.mxu0 0.0
    %1021 = vmatprep.subr.mxu0 0.0
    %1022 = vmatpush1.msra.mxu0 0.0
    %1023 = vmatprep.subr.mxu0 0.0
    %1024 = vmatpush1.msra.mxu0 0.0
    %1025 = vmatprep.subr.mxu0 0.0
    %1026 = vmatpush1.msra.mxu0 0.0
    %1027 = vmatprep.subr.mxu0 0.0
    %1028 = vmatpush1.msra.mxu0 0.0
    %1029 = vmatprep.mubr.f32.mxu0 0.0
    %1030 = vmatmul.mubr.f32.gmra.mrb[0].mxu0 %v960
    %v1031 = vpop.f32.mrb[0].mxu0
    %v1032 = vadd.f32 0.0, %v1031
    %v1033 = vpop.f32.mrb[0].mxu0
    %1034 = vmatprep.mubr.f32.mxu0 0.0
    %1035 = vmatmul.mubr.f32.gmra.mrb[0].mxu0 %v963
    %v1036 = vpop.f32.mrb[0].mxu0
    %v1037 = vadd.f32 0.0, %v1036
    %v1038 = vpop.f32.mrb[0].mxu0
    %1039 = vdwg.mxu0
    %s1040 = scalar_lea.vmem %s4, 16
    %v1041 = vld [vmem:[%s1040] sm:$0xff]
    %v1042 = vld [vmem:[%s1040 + $0x8] sm:$0xff]
    %v1044 = vsel %vm958, %v1041, 0
    %v1047 = vsel %vm958, %v1042, 0
    %1049 = vmatprep.subr.mxu0 0.0
    %1050 = vmatpush1.msra.mxu0 %v954
    %1051 = vmatprep.subr.mxu0 0.0
    %1052 = vmatpush1.msra.mxu0 %v955
    %1053 = vmatprep.subr.mxu0 0.0
    %1054 = vmatpush1.msra.mxu0 0.0
    %1055 = vmatprep.subr.mxu0 0.0
    %1056 = vmatpush1.msra.mxu0 0.0
    %1057 = vmatprep.subr.mxu0 0.0
    %1058 = vmatpush1.msra.mxu0 0.0
    %1059 = vmatprep.subr.mxu0 0.0
    %1060 = vmatpush1.msra.mxu0 0.0
    %1061 = vmatprep.subr.mxu0 0.0
    %1062 = vmatpush1.msra.mxu0 0.0
    %1063 = vmatprep.subr.mxu0 0.0
    %1064 = vmatpush1.msra.mxu0 0.0
    %1065 = vmatprep.subr.mxu0 0.0
    %1066 = vmatpush1.msra.mxu0 0.0
    %1067 = vmatprep.subr.mxu0 0.0
    %1068 = vmatpush1.msra.mxu0 0.0
    %1069 = vmatprep.subr.mxu0 0.0
    %1070 = vmatpush1.msra.mxu0 0.0
    %1071 = vmatprep.subr.mxu0 0.0
    %1072 = vmatpush1.msra.mxu0 0.0
    %1073 = vmatprep.subr.mxu0 0.0
    %1074 = vmatpush1.msra.mxu0 0.0
    %1075 = vmatprep.subr.mxu0 0.0
    %1076 = vmatpush1.msra.mxu0 0.0
    %1077 = vmatprep.subr.mxu0 0.0
    %1078 = vmatpush1.msra.mxu0 0.0
    %1079 = vmatprep.subr.mxu0 0.0
    %1080 = vmatpush1.msra.mxu0 0.0
    %1081 = vmatprep.subr.mxu0 0.0
    %1082 = vmatpush1.msra.mxu0 0.0
    %1083 = vmatprep.subr.mxu0 0.0
    %1084 = vmatpush1.msra.mxu0 0.0
    %1085 = vmatprep.subr.mxu0 0.0
    %1086 = vmatpush1.msra.mxu0 0.0
    %1087 = vmatprep.subr.mxu0 0.0
    %1088 = vmatpush1.msra.mxu0 0.0
    %1089 = vmatprep.subr.mxu0 0.0
    %1090 = vmatpush1.msra.mxu0 0.0
    %1091 = vmatprep.subr.mxu0 0.0
    %1092 = vmatpush1.msra.mxu0 0.0
    %1093 = vmatprep.subr.mxu0 0.0
    %1094 = vmatpush1.msra.mxu0 0.0
    %1095 = vmatprep.subr.mxu0 0.0
    %1096 = vmatpush1.msra.mxu0 0.0
    %1097 = vmatprep.subr.mxu0 0.0
    %1098 = vmatpush1.msra.mxu0 0.0
    %1099 = vmatprep.subr.mxu0 0.0
    %1100 = vmatpush1.msra.mxu0 0.0
    %1101 = vmatprep.subr.mxu0 0.0
    %1102 = vmatpush1.msra.mxu0 0.0
    %1103 = vmatprep.subr.mxu0 0.0
    %1104 = vmatpush1.msra.mxu0 0.0
    %1105 = vmatprep.subr.mxu0 0.0
    %1106 = vmatpush1.msra.mxu0 0.0
    %1107 = vmatprep.subr.mxu0 0.0
    %1108 = vmatpush1.msra.mxu0 0.0
    %1109 = vmatprep.subr.mxu0 0.0
    %1110 = vmatpush1.msra.mxu0 0.0
    %1111 = vmatprep.subr.mxu0 0.0
    %1112 = vmatpush1.msra.mxu0 0.0
    %1113 = vmatprep.mubr.f32.mxu0 0.0
    %1114 = vmatmul.mubr.f32.gmra.mrb[0].mxu0 %v1044
    %v1115 = vpop.f32.mrb[0].mxu0
    %v1116 = vadd.f32 0.0, %v1115
    %v1117 = vpop.f32.mrb[0].mxu0
    %1118 = vmatprep.mubr.f32.mxu0 0.0
    %1119 = vmatmul.mubr.f32.gmra.mrb[0].mxu0 %v1047
    %v1120 = vpop.f32.mrb[0].mxu0
    %v1121 = vadd.f32 0.0, %v1120
    %v1122 = vpop.f32.mrb[0].mxu0
    %1123 = vdwg.mxu0
    %s1124 = scalar_lea.vmem %s1, 192
    %v1125 = vld [vmem:[%s1124] sm:$0xff]
    %v1126 = vld [vmem:[%s1124 + $0x8] sm:$0xff]
    %v1127 = vld [vmem:[%s1124 + $0x10] sm:$0xff]
    %v1128 = vld [vmem:[%s1124 + $0x18] sm:$0xff]
    %v1129 = vld [vmem:[%s1124 + $0x20] sm:$0xff]
    %v1130 = vld [vmem:[%s1124 + $0x28] sm:$0xff]
    %v1131 = vld [vmem:[%s1124 + $0x30] sm:$0xff]
    %v1132 = vld [vmem:[%s1124 + $0x38] sm:$0xff]
    %s1133 = scalar_lea.vmem %s1, 256
    %v1134 = vld [vmem:[%s1133] sm:$0xff]
    %v1135 = vld [vmem:[%s1133 + $0x8] sm:$0xff]
    %v1136 = vld [vmem:[%s1133 + $0x10] sm:$0xff]
    %v1137 = vld [vmem:[%s1133 + $0x18] sm:$0xff]
    %v1138 = vld [vmem:[%s1133 + $0x20] sm:$0xff]
    %v1139 = vld [vmem:[%s1133 + $0x28] sm:$0xff]
    %v1140 = vld [vmem:[%s1133 + $0x30] sm:$0xff]
    %v1141 = vld [vmem:[%s1133 + $0x38] sm:$0xff]
    %v1143 = vsel %vm282, %v954, 0
    %v1146 = vsel %vm282, %v955, 0
    %1148 = vmatprep.subr.mxu0 0.0
    %1149 = vmatpush1.msra.mxu0 %v1134
    %1150 = vmatprep.subr.mxu0 0.0
    %1151 = vmatpush1.msra.mxu0 %v1135
    %1152 = vmatprep.subr.mxu0 0.0
    %1153 = vmatpush1.msra.mxu0 %v1136
    %1154 = vmatprep.subr.mxu0 0.0
    %1155 = vmatpush1.msra.mxu0 %v1137
    %1156 = vmatprep.subr.mxu0 0.0
    %1157 = vmatpush1.msra.mxu0 %v1138
    %1158 = vmatprep.subr.mxu0 0.0
    %1159 = vmatpush1.msra.mxu0 %v1139
    %1160 = vmatprep.subr.mxu0 0.0
    %1161 = vmatpush1.msra.mxu0 %v1140
    %1162 = vmatprep.subr.mxu0 0.0
    %1163 = vmatpush1.msra.mxu0 %v1141
    %1164 = vmatprep.subr.mxu0 0.0
    %1165 = vmatpush1.msra.mxu0 0.0
    %1166 = vmatprep.subr.mxu0 0.0
    %1167 = vmatpush1.msra.mxu0 0.0
    %1168 = vmatprep.subr.mxu0 0.0
    %1169 = vmatpush1.msra.mxu0 0.0
    %1170 = vmatprep.subr.mxu0 0.0
    %1171 = vmatpush1.msra.mxu0 0.0
    %1172 = vmatprep.subr.mxu0 0.0
    %1173 = vmatpush1.msra.mxu0 0.0
    %1174 = vmatprep.subr.mxu0 0.0
    %1175 = vmatpush1.msra.mxu0 0.0
    %1176 = vmatprep.subr.mxu0 0.0
    %1177 = vmatpush1.msra.mxu0 0.0
    %1178 = vmatprep.subr.mxu0 0.0
    %1179 = vmatpush1.msra.mxu0 0.0
    %1180 = vmatprep.subr.mxu0 0.0
    %1181 = vmatpush1.msra.mxu0 0.0
    %1182 = vmatprep.subr.mxu0 0.0
    %1183 = vmatpush1.msra.mxu0 0.0
    %1184 = vmatprep.subr.mxu0 0.0
    %1185 = vmatpush1.msra.mxu0 0.0
    %1186 = vmatprep.subr.mxu0 0.0
    %1187 = vmatpush1.msra.mxu0 0.0
    %1188 = vmatprep.subr.mxu0 0.0
    %1189 = vmatpush1.msra.mxu0 0.0
    %1190 = vmatprep.subr.mxu0 0.0
    %1191 = vmatpush1.msra.mxu0 0.0
    %1192 = vmatprep.subr.mxu0 0.0
    %1193 = vmatpush1.msra.mxu0 0.0
    %1194 = vmatprep.subr.mxu0 0.0
    %1195 = vmatpush1.msra.mxu0 0.0
    %1196 = vmatprep.subr.mxu0 0.0
    %1197 = vmatpush1.msra.mxu0 0.0
    %1198 = vmatprep.subr.mxu0 0.0
    %1199 = vmatpush1.msra.mxu0 0.0
    %1200 = vmatprep.subr.mxu0 0.0
    %1201 = vmatpush1.msra.mxu0 0.0
    %1202 = vmatprep.subr.mxu0 0.0
    %1203 = vmatpush1.msra.mxu0 0.0
    %1204 = vmatprep.subr.mxu0 0.0
    %1205 = vmatpush1.msra.mxu0 0.0
    %1206 = vmatprep.subr.mxu0 0.0
    %1207 = vmatpush1.msra.mxu0 0.0
    %1208 = vmatprep.subr.mxu0 0.0
    %1209 = vmatpush1.msra.mxu0 0.0
    %1210 = vmatprep.subr.mxu0 0.0
    %1211 = vmatpush1.msra.mxu0 0.0
    %1212 = vmatprep.mubr.f32.mxu0 0.0
    %1213 = vmatmul.mubr.f32.gmra.mrb[0].mxu0 %v1143
    %v1214 = vpop.f32.mrb[0].mxu0
    %v1215 = vadd.f32 0.0, %v1214
    %v1216 = vpop.f32.mrb[0].mxu0
    %1217 = vmatprep.mubr.f32.mxu0 0.0
    %1218 = vmatmul.mubr.f32.gmra.mrb[0].mxu0 %v1146
    %v1219 = vpop.f32.mrb[0].mxu0
    %v1220 = vadd.f32 0.0, %v1219
    %v1221 = vpop.f32.mrb[0].mxu0
    %1222 = vdwg.mxu0
    %v1224 = vsel %vm282, %v1032, 0
    %v1227 = vsel %vm282, %v1037, 0
    %1229 = vmatprep.subr.mxu0 0.0
    %1230 = vmatpush1.msra.mxu0 %v1125
    %1231 = vmatprep.subr.mxu0 0.0
    %1232 = vmatpush1.msra.mxu0 %v1126
    %1233 = vmatprep.subr.mxu0 0.0
    %1234 = vmatpush1.msra.mxu0 %v1127
    %1235 = vmatprep.subr.mxu0 0.0
    %1236 = vmatpush1.msra.mxu0 %v1128
    %1237 = vmatprep.subr.mxu0 0.0
    %1238 = vmatpush1.msra.mxu0 %v1129
    %1239 = vmatprep.subr.mxu0 0.0
    %1240 = vmatpush1.msra.mxu0 %v1130
    %1241 = vmatprep.subr.mxu0 0.0
    %1242 = vmatpush1.msra.mxu0 %v1131
    %1243 = vmatprep.subr.mxu0 0.0
    %1244 = vmatpush1.msra.mxu0 %v1132
    %1245 = vmatprep.subr.mxu0 0.0
    %1246 = vmatpush1.msra.mxu0 0.0
    %1247 = vmatprep.subr.mxu0 0.0
    %1248 = vmatpush1.msra.mxu0 0.0
    %1249 = vmatprep.subr.mxu0 0.0
    %1250 = vmatpush1.msra.mxu0 0.0
    %1251 = vmatprep.subr.mxu0 0.0
    %1252 = vmatpush1.msra.mxu0 0.0
    %1253 = vmatprep.subr.mxu0 0.0
    %1254 = vmatpush1.msra.mxu0 0.0
    %1255 = vmatprep.subr.mxu0 0.0
    %1256 = vmatpush1.msra.mxu0 0.0
    %1257 = vmatprep.subr.mxu0 0.0
    %1258 = vmatpush1.msra.mxu0 0.0
    %1259 = vmatprep.subr.mxu0 0.0
    %1260 = vmatpush1.msra.mxu0 0.0
    %1261 = vmatprep.subr.mxu0 0.0
    %1262 = vmatpush1.msra.mxu0 0.0
    %1263 = vmatprep.subr.mxu0 0.0
    %1264 = vmatpush1.msra.mxu0 0.0
    %1265 = vmatprep.subr.mxu0 0.0
    %1266 = vmatpush1.msra.mxu0 0.0
    %1267 = vmatprep.subr.mxu0 0.0
    %1268 = vmatpush1.msra.mxu0 0.0
    %1269 = vmatprep.subr.mxu0 0.0
    %1270 = vmatpush1.msra.mxu0 0.0
    %1271 = vmatprep.subr.mxu0 0.0
    %1272 = vmatpush1.msra.mxu0 0.0
    %1273 = vmatprep.subr.mxu0 0.0
    %1274 = vmatpush1.msra.mxu0 0.0
    %1275 = vmatprep.subr.mxu0 0.0
    %1276 = vmatpush1.msra.mxu0 0.0
    %1277 = vmatprep.subr.mxu0 0.0
    %1278 = vmatpush1.msra.mxu0 0.0
    %1279 = vmatprep.subr.mxu0 0.0
    %1280 = vmatpush1.msra.mxu0 0.0
    %1281 = vmatprep.subr.mxu0 0.0
    %1282 = vmatpush1.msra.mxu0 0.0
    %1283 = vmatprep.subr.mxu0 0.0
    %1284 = vmatpush1.msra.mxu0 0.0
    %1285 = vmatprep.subr.mxu0 0.0
    %1286 = vmatpush1.msra.mxu0 0.0
    %1287 = vmatprep.subr.mxu0 0.0
    %1288 = vmatpush1.msra.mxu0 0.0
    %1289 = vmatprep.subr.mxu0 0.0
    %1290 = vmatpush1.msra.mxu0 0.0
    %1291 = vmatprep.subr.mxu0 0.0
    %1292 = vmatpush1.msra.mxu0 0.0
    %1293 = vmatprep.mubr.f32.mxu0 0.0
    %1294 = vmatmul.mubr.f32.gmra.mrb[0].mxu0 %v1224
    %v1295 = vpop.f32.mrb[0].mxu0
    %v1296 = vadd.f32 %v1215, %v1295
    %v1297 = vpop.f32.mrb[0].mxu0
    %1298 = vmatprep.mubr.f32.mxu0 0.0
    %1299 = vmatmul.mubr.f32.gmra.mrb[0].mxu0 %v1227
    %v1300 = vpop.f32.mrb[0].mxu0
    %v1301 = vadd.f32 %v1220, %v1300
    %v1302 = vpop.f32.mrb[0].mxu0
    %1303 = vdwg.mxu0
    %s1304 = scalar_lea.vmem %s1, 320
    %v1305 = vld [vmem:[%s1304] sm:$0xff]
    %v1306 = vld [vmem:[%s1304 + $0x8] sm:$0xff]
    %v1307 = vld [vmem:[%s1304 + $0x10] sm:$0xff]
    %v1308 = vld [vmem:[%s1304 + $0x18] sm:$0xff]
    %v1309 = vld [vmem:[%s1304 + $0x20] sm:$0xff]
    %v1310 = vld [vmem:[%s1304 + $0x28] sm:$0xff]
    %v1311 = vld [vmem:[%s1304 + $0x30] sm:$0xff]
    %v1312 = vld [vmem:[%s1304 + $0x38] sm:$0xff]
    %v1314 = vsel %vm282, %v1116, 0
    %v1317 = vsel %vm282, %v1121, 0
    %1319 = vmatprep.subr.mxu0 0.0
    %1320 = vmatpush1.msra.mxu0 %v1305
    %1321 = vmatprep.subr.mxu0 0.0
    %1322 = vmatpush1.msra.mxu0 %v1306
    %1323 = vmatprep.subr.mxu0 0.0
    %1324 = vmatpush1.msra.mxu0 %v1307
    %1325 = vmatprep.subr.mxu0 0.0
    %1326 = vmatpush1.msra.mxu0 %v1308
    %1327 = vmatprep.subr.mxu0 0.0
    %1328 = vmatpush1.msra.mxu0 %v1309
    %1329 = vmatprep.subr.mxu0 0.0
    %1330 = vmatpush1.msra.mxu0 %v1310
    %1331 = vmatprep.subr.mxu0 0.0
    %1332 = vmatpush1.msra.mxu0 %v1311
    %1333 = vmatprep.subr.mxu0 0.0
    %1334 = vmatpush1.msra.mxu0 %v1312
    %1335 = vmatprep.subr.mxu0 0.0
    %1336 = vmatpush1.msra.mxu0 0.0
    %1337 = vmatprep.subr.mxu0 0.0
    %1338 = vmatpush1.msra.mxu0 0.0
    %1339 = vmatprep.subr.mxu0 0.0
    %1340 = vmatpush1.msra.mxu0 0.0
    %1341 = vmatprep.subr.mxu0 0.0
    %1342 = vmatpush1.msra.mxu0 0.0
    %1343 = vmatprep.subr.mxu0 0.0
    %1344 = vmatpush1.msra.mxu0 0.0
    %1345 = vmatprep.subr.mxu0 0.0
    %1346 = vmatpush1.msra.mxu0 0.0
    %1347 = vmatprep.subr.mxu0 0.0
    %1348 = vmatpush1.msra.mxu0 0.0
    %1349 = vmatprep.subr.mxu0 0.0
    %1350 = vmatpush1.msra.mxu0 0.0
    %1351 = vmatprep.subr.mxu0 0.0
    %1352 = vmatpush1.msra.mxu0 0.0
    %1353 = vmatprep.subr.mxu0 0.0
    %1354 = vmatpush1.msra.mxu0 0.0
    %1355 = vmatprep.subr.mxu0 0.0
    %1356 = vmatpush1.msra.mxu0 0.0
    %1357 = vmatprep.subr.mxu0 0.0
    %1358 = vmatpush1.msra.mxu0 0.0
    %1359 = vmatprep.subr.mxu0 0.0
    %1360 = vmatpush1.msra.mxu0 0.0
    %1361 = vmatprep.subr.mxu0 0.0
    %1362 = vmatpush1.msra.mxu0 0.0
    %1363 = vmatprep.subr.mxu0 0.0
    %1364 = vmatpush1.msra.mxu0 0.0
    %1365 = vmatprep.subr.mxu0 0.0
    %1366 = vmatpush1.msra.mxu0 0.0
    %1367 = vmatprep.subr.mxu0 0.0
    %1368 = vmatpush1.msra.mxu0 0.0
    %1369 = vmatprep.subr.mxu0 0.0
    %1370 = vmatpush1.msra.mxu0 0.0
    %1371 = vmatprep.subr.mxu0 0.0
    %1372 = vmatpush1.msra.mxu0 0.0
    %1373 = vmatprep.subr.mxu0 0.0
    %1374 = vmatpush1.msra.mxu0 0.0
    %1375 = vmatprep.subr.mxu0 0.0
    %1376 = vmatpush1.msra.mxu0 0.0
    %1377 = vmatprep.subr.mxu0 0.0
    %1378 = vmatpush1.msra.mxu0 0.0
    %1379 = vmatprep.subr.mxu0 0.0
    %1380 = vmatpush1.msra.mxu0 0.0
    %1381 = vmatprep.subr.mxu0 0.0
    %1382 = vmatpush1.msra.mxu0 0.0
    %1383 = vmatprep.mubr.f32.mxu0 0.0
    %1384 = vmatmul.mubr.f32.gmra.mrb[0].mxu0 %v1314
    %v1385 = vpop.f32.mrb[0].mxu0
    %v1386 = vadd.f32 0.0, %v1385
    %v1387 = vpop.f32.mrb[0].mxu0
    %1388 = vmatprep.mubr.f32.mxu0 0.0
    %1389 = vmatmul.mubr.f32.gmra.mrb[0].mxu0 %v1317
    %v1390 = vpop.f32.mrb[0].mxu0
    %v1391 = vadd.f32 0.0, %v1390
    %v1392 = vpop.f32.mrb[0].mxu0
    %1393 = vdwg.mxu0
    %v1394 = vadd.f32 %v1296, %v1386
    %v1395 = vadd.f32 %v1301, %v1391
    %s1396 = scalar_lea.vmem %s2, 1
    %v1397 = vld [vmem:[%s1396] sm:$0x1]
    %v1399 = vlaneseq
    %v1400 = vshrl.u32 %v1399, 7
    %v1401 = vsub.s32 0, %v1400
    %v1402 = vrot.slane %v1397, %v1401
    %v1404 = vadd.f32 %v1394, %v1402
    %v1405 = vadd.f32 %v1395, %v1402
    %v1406 = vmax.f32 %v1404, 0.0
    %v1407 = vmax.f32 %v1405, 0.0
    %v1408 = vld [vmem:[%s7] sm:$0xff]
    %v1410 = vsel %vm958, %v1408, 0
    %1412 = vmatprep.subr.mxu0 0.0
    %1413 = vmatpush1.msra.mxu0 %v1406
    %1414 = vmatprep.subr.mxu0 0.0
    %1415 = vmatpush1.msra.mxu0 %v1407
    %1416 = vmatprep.subr.mxu0 0.0
    %1417 = vmatpush1.msra.mxu0 0.0
    %1418 = vmatprep.subr.mxu0 0.0
    %1419 = vmatpush1.msra.mxu0 0.0
    %1420 = vmatprep.subr.mxu0 0.0
    %1421 = vmatpush1.msra.mxu0 0.0
    %1422 = vmatprep.subr.mxu0 0.0
    %1423 = vmatpush1.msra.mxu0 0.0
    %1424 = vmatprep.subr.mxu0 0.0
    %1425 = vmatpush1.msra.mxu0 0.0
    %1426 = vmatprep.subr.mxu0 0.0
    %1427 = vmatpush1.msra.mxu0 0.0
    %1428 = vmatprep.subr.mxu0 0.0
    %1429 = vmatpush1.msra.mxu0 0.0
    %1430 = vmatprep.subr.mxu0 0.0
    %1431 = vmatpush1.msra.mxu0 0.0
    %1432 = vmatprep.subr.mxu0 0.0
    %1433 = vmatpush1.msra.mxu0 0.0
    %1434 = vmatprep.subr.mxu0 0.0
    %1435 = vmatpush1.msra.mxu0 0.0
    %1436 = vmatprep.subr.mxu0 0.0
    %1437 = vmatpush1.msra.mxu0 0.0
    %1438 = vmatprep.subr.mxu0 0.0
    %1439 = vmatpush1.msra.mxu0 0.0
    %1440 = vmatprep.subr.mxu0 0.0
    %1441 = vmatpush1.msra.mxu0 0.0
    %1442 = vmatprep.subr.mxu0 0.0
    %1443 = vmatpush1.msra.mxu0 0.0
    %1444 = vmatprep.subr.mxu0 0.0
    %1445 = vmatpush1.msra.mxu0 0.0
    %1446 = vmatprep.subr.mxu0 0.0
    %1447 = vmatpush1.msra.mxu0 0.0
    %1448 = vmatprep.subr.mxu0 0.0
    %1449 = vmatpush1.msra.mxu0 0.0
    %1450 = vmatprep.subr.mxu0 0.0
    %1451 = vmatpush1.msra.mxu0 0.0
    %1452 = vmatprep.subr.mxu0 0.0
    %1453 = vmatpush1.msra.mxu0 0.0
    %1454 = vmatprep.subr.mxu0 0.0
    %1455 = vmatpush1.msra.mxu0 0.0
    %1456 = vmatprep.subr.mxu0 0.0
    %1457 = vmatpush1.msra.mxu0 0.0
    %1458 = vmatprep.subr.mxu0 0.0
    %1459 = vmatpush1.msra.mxu0 0.0
    %1460 = vmatprep.subr.mxu0 0.0
    %1461 = vmatpush1.msra.mxu0 0.0
    %1462 = vmatprep.subr.mxu0 0.0
    %1463 = vmatpush1.msra.mxu0 0.0
    %1464 = vmatprep.subr.mxu0 0.0
    %1465 = vmatpush1.msra.mxu0 0.0
    %1466 = vmatprep.subr.mxu0 0.0
    %1467 = vmatpush1.msra.mxu0 0.0
    %1468 = vmatprep.subr.mxu0 0.0
    %1469 = vmatpush1.msra.mxu0 0.0
    %1470 = vmatprep.subr.mxu0 0.0
    %1471 = vmatpush1.msra.mxu0 0.0
    %1472 = vmatprep.subr.mxu0 0.0
    %1473 = vmatpush1.msra.mxu0 0.0
    %1474 = vmatprep.subr.mxu0 0.0
    %1475 = vmatpush1.msra.mxu0 0.0
    %1476 = vmatprep.mubr.f32.mxu0 0.0
    %1477 = vmatmul.mubr.f32.gmra.mrb[0].mxu0 %v1410
    %v1478 = vpop.f32.mrb[0].mxu0
    %v1479 = vadd.f32 0.0, %v1478
    %v1480 = vpop.f32.mrb[0].mxu0
    %1481 = vdwg.mxu0
    %s1482 = scalar_lea.vmem %s7, 8
    %v1483 = vld [vmem:[%s1482] sm:$0xff]
    %v1485 = vsel %vm958, %v1483, 0
    %1487 = vmatprep.subr.mxu0 0.0
    %1488 = vmatpush1.msra.mxu0 %v1406
    %1489 = vmatprep.subr.mxu0 0.0
    %1490 = vmatpush1.msra.mxu0 %v1407
    %1491 = vmatprep.subr.mxu0 0.0
    %1492 = vmatpush1.msra.mxu0 0.0
    %1493 = vmatprep.subr.mxu0 0.0
    %1494 = vmatpush1.msra.mxu0 0.0
    %1495 = vmatprep.subr.mxu0 0.0
    %1496 = vmatpush1.msra.mxu0 0.0
    %1497 = vmatprep.subr.mxu0 0.0
    %1498 = vmatpush1.msra.mxu0 0.0
    %1499 = vmatprep.subr.mxu0 0.0
    %1500 = vmatpush1.msra.mxu0 0.0
    %1501 = vmatprep.subr.mxu0 0.0
    %1502 = vmatpush1.msra.mxu0 0.0
    %1503 = vmatprep.subr.mxu0 0.0
    %1504 = vmatpush1.msra.mxu0 0.0
    %1505 = vmatprep.subr.mxu0 0.0
    %1506 = vmatpush1.msra.mxu0 0.0
    %1507 = vmatprep.subr.mxu0 0.0
    %1508 = vmatpush1.msra.mxu0 0.0
    %1509 = vmatprep.subr.mxu0 0.0
    %1510 = vmatpush1.msra.mxu0 0.0
    %1511 = vmatprep.subr.mxu0 0.0
    %1512 = vmatpush1.msra.mxu0 0.0
    %1513 = vmatprep.subr.mxu0 0.0
    %1514 = vmatpush1.msra.mxu0 0.0
    %1515 = vmatprep.subr.mxu0 0.0
    %1516 = vmatpush1.msra.mxu0 0.0
    %1517 = vmatprep.subr.mxu0 0.0
    %1518 = vmatpush1.msra.mxu0 0.0
    %1519 = vmatprep.subr.mxu0 0.0
    %1520 = vmatpush1.msra.mxu0 0.0
    %1521 = vmatprep.subr.mxu0 0.0
    %1522 = vmatpush1.msra.mxu0 0.0
    %1523 = vmatprep.subr.mxu0 0.0
    %1524 = vmatpush1.msra.mxu0 0.0
    %1525 = vmatprep.subr.mxu0 0.0
    %1526 = vmatpush1.msra.mxu0 0.0
    %1527 = vmatprep.subr.mxu0 0.0
    %1528 = vmatpush1.msra.mxu0 0.0
    %1529 = vmatprep.subr.mxu0 0.0
    %1530 = vmatpush1.msra.mxu0 0.0
    %1531 = vmatprep.subr.mxu0 0.0
    %1532 = vmatpush1.msra.mxu0 0.0
    %1533 = vmatprep.subr.mxu0 0.0
    %1534 = vmatpush1.msra.mxu0 0.0
    %1535 = vmatprep.subr.mxu0 0.0
    %1536 = vmatpush1.msra.mxu0 0.0
    %1537 = vmatprep.subr.mxu0 0.0
    %1538 = vmatpush1.msra.mxu0 0.0
    %1539 = vmatprep.subr.mxu0 0.0
    %1540 = vmatpush1.msra.mxu0 0.0
    %1541 = vmatprep.subr.mxu0 0.0
    %1542 = vmatpush1.msra.mxu0 0.0
    %1543 = vmatprep.subr.mxu0 0.0
    %1544 = vmatpush1.msra.mxu0 0.0
    %1545 = vmatprep.subr.mxu0 0.0
    %1546 = vmatpush1.msra.mxu0 0.0
    %1547 = vmatprep.subr.mxu0 0.0
    %1548 = vmatpush1.msra.mxu0 0.0
    %1549 = vmatprep.subr.mxu0 0.0
    %1550 = vmatpush1.msra.mxu0 0.0
    %1551 = vmatprep.mubr.f32.mxu0 0.0
    %1552 = vmatmul.mubr.f32.gmra.mrb[0].mxu0 %v1485
    %v1553 = vpop.f32.mrb[0].mxu0
    %v1554 = vadd.f32 0.0, %v1553
    %v1555 = vpop.f32.mrb[0].mxu0
    %1556 = vdwg.mxu0
    %v1557 = vmax.f32 %v1479, %v1554
    %s1558 = scalar_lea.vmem %s9, 256
    %v1559 = vld [vmem:[%s1558] sm:$0xff]
    %v1560 = vld [vmem:[%s1558 + $0x8] sm:$0xff]
    %v1561 = vld [vmem:[%s1558 + $0x10] sm:$0xff]
    %v1562 = vld [vmem:[%s1558 + $0x18] sm:$0xff]
    %v1563 = vld [vmem:[%s1558 + $0x20] sm:$0xff]
    %v1564 = vld [vmem:[%s1558 + $0x28] sm:$0xff]
    %v1565 = vld [vmem:[%s1558 + $0x30] sm:$0xff]
    %v1566 = vld [vmem:[%s1558 + $0x38] sm:$0xff]
    %v1567 = vld [vmem:[%s1558 + $0x40] sm:$0xff]
    %v1568 = vld [vmem:[%s1558 + $0x48] sm:$0xff]
    %v1569 = vld [vmem:[%s1558 + $0x50] sm:$0xff]
    %v1570 = vld [vmem:[%s1558 + $0x58] sm:$0xff]
    %v1571 = vld [vmem:[%s1558 + $0x60] sm:$0xff]
    %v1572 = vld [vmem:[%s1558 + $0x68] sm:$0xff]
    %v1573 = vld [vmem:[%s1558 + $0x70] sm:$0xff]
    %v1574 = vld [vmem:[%s1558 + $0x78] sm:$0xff]
    %1575 = vmatprep.subr.mxu0 0.0
    %1576 = vmatpush1.msra.mxu0 %v1559
    %1577 = vmatprep.subr.mxu0 0.0
    %1578 = vmatpush1.msra.mxu0 %v1560
    %1579 = vmatprep.subr.mxu0 0.0
    %1580 = vmatpush1.msra.mxu0 %v1561
    %1581 = vmatprep.subr.mxu0 0.0
    %1582 = vmatpush1.msra.mxu0 %v1562
    %1583 = vmatprep.subr.mxu0 0.0
    %1584 = vmatpush1.msra.mxu0 %v1563
    %1585 = vmatprep.subr.mxu0 0.0
    %1586 = vmatpush1.msra.mxu0 %v1564
    %1587 = vmatprep.subr.mxu0 0.0
    %1588 = vmatpush1.msra.mxu0 %v1565
    %1589 = vmatprep.subr.mxu0 0.0
    %1590 = vmatpush1.msra.mxu0 %v1566
    %1591 = vmatprep.subr.mxu0 0.0
    %1592 = vmatpush1.msra.mxu0 %v1567
    %1593 = vmatprep.subr.mxu0 0.0
    %1594 = vmatpush1.msra.mxu0 %v1568
    %1595 = vmatprep.subr.mxu0 0.0
    %1596 = vmatpush1.msra.mxu0 %v1569
    %1597 = vmatprep.subr.mxu0 0.0
    %1598 = vmatpush1.msra.mxu0 %v1570
    %1599 = vmatprep.subr.mxu0 0.0
    %1600 = vmatpush1.msra.mxu0 %v1571
    %1601 = vmatprep.subr.mxu0 0.0
    %1602 = vmatpush1.msra.mxu0 %v1572
    %1603 = vmatprep.subr.mxu0 0.0
    %1604 = vmatpush1.msra.mxu0 %v1573
    %1605 = vmatprep.subr.mxu0 0.0
    %1606 = vmatpush1.msra.mxu0 %v1574
    %1607 = vmatprep.subr.mxu0 0.0
    %1608 = vmatpush1.msra.mxu0 0.0
    %1609 = vmatprep.subr.mxu0 0.0
    %1610 = vmatpush1.msra.mxu0 0.0
    %1611 = vmatprep.subr.mxu0 0.0
    %1612 = vmatpush1.msra.mxu0 0.0
    %1613 = vmatprep.subr.mxu0 0.0
    %1614 = vmatpush1.msra.mxu0 0.0
    %1615 = vmatprep.subr.mxu0 0.0
    %1616 = vmatpush1.msra.mxu0 0.0
    %1617 = vmatprep.subr.mxu0 0.0
    %1618 = vmatpush1.msra.mxu0 0.0
    %1619 = vmatprep.subr.mxu0 0.0
    %1620 = vmatpush1.msra.mxu0 0.0
    %1621 = vmatprep.subr.mxu0 0.0
    %1622 = vmatpush1.msra.mxu0 0.0
    %1623 = vmatprep.subr.mxu0 0.0
    %1624 = vmatpush1.msra.mxu0 0.0
    %1625 = vmatprep.subr.mxu0 0.0
    %1626 = vmatpush1.msra.mxu0 0.0
    %1627 = vmatprep.subr.mxu0 0.0
    %1628 = vmatpush1.msra.mxu0 0.0
    %1629 = vmatprep.subr.mxu0 0.0
    %1630 = vmatpush1.msra.mxu0 0.0
    %1631 = vmatprep.subr.mxu0 0.0
    %1632 = vmatpush1.msra.mxu0 0.0
    %1633 = vmatprep.subr.mxu0 0.0
    %1634 = vmatpush1.msra.mxu0 0.0
    %1635 = vmatprep.subr.mxu0 0.0
    %1636 = vmatpush1.msra.mxu0 0.0
    %1637 = vmatprep.subr.mxu0 0.0
    %1638 = vmatpush1.msra.mxu0 0.0
    %1639 = vmatprep.mubr.f32.mxu0 0.0
    %1640 = vmatmul.mubr.f32.gmra.mrb[0].mxu0 %v1557
    %v1641 = vpop.f32.mrb[0].mxu0
    %v1642 = vadd.f32 0.0, %v1641
    %v1643 = vpop.f32.mrb[0].mxu0
    %1644 = vdwg.mxu0
    %s1645 = scalar_lea.vmem %s9, 384
    %v1646 = vld [vmem:[%s1645] sm:$0xff]
    %v1647 = vld [vmem:[%s1645 + $0x8] sm:$0xff]
    %v1648 = vld [vmem:[%s1645 + $0x10] sm:$0xff]
    %v1649 = vld [vmem:[%s1645 + $0x18] sm:$0xff]
    %v1650 = vld [vmem:[%s1645 + $0x20] sm:$0xff]
    %v1651 = vld [vmem:[%s1645 + $0x28] sm:$0xff]
    %v1652 = vld [vmem:[%s1645 + $0x30] sm:$0xff]
    %v1653 = vld [vmem:[%s1645 + $0x38] sm:$0xff]
    %v1654 = vld [vmem:[%s1645 + $0x40] sm:$0xff]
    %v1655 = vld [vmem:[%s1645 + $0x48] sm:$0xff]
    %v1656 = vld [vmem:[%s1645 + $0x50] sm:$0xff]
    %v1657 = vld [vmem:[%s1645 + $0x58] sm:$0xff]
    %v1658 = vld [vmem:[%s1645 + $0x60] sm:$0xff]
    %v1659 = vld [vmem:[%s1645 + $0x68] sm:$0xff]
    %v1660 = vld [vmem:[%s1645 + $0x70] sm:$0xff]
    %v1661 = vld [vmem:[%s1645 + $0x78] sm:$0xff]
    %1662 = vmatprep.subr.mxu0 0.0
    %1663 = vmatpush1.msra.mxu0 %v1646
    %1664 = vmatprep.subr.mxu0 0.0
    %1665 = vmatpush1.msra.mxu0 %v1647
    %1666 = vmatprep.subr.mxu0 0.0
    %1667 = vmatpush1.msra.mxu0 %v1648
    %1668 = vmatprep.subr.mxu0 0.0
    %1669 = vmatpush1.msra.mxu0 %v1649
    %1670 = vmatprep.subr.mxu0 0.0
    %1671 = vmatpush1.msra.mxu0 %v1650
    %1672 = vmatprep.subr.mxu0 0.0
    %1673 = vmatpush1.msra.mxu0 %v1651
    %1674 = vmatprep.subr.mxu0 0.0
    %1675 = vmatpush1.msra.mxu0 %v1652
    %1676 = vmatprep.subr.mxu0 0.0
    %1677 = vmatpush1.msra.mxu0 %v1653
    %1678 = vmatprep.subr.mxu0 0.0
    %1679 = vmatpush1.msra.mxu0 %v1654
    %1680 = vmatprep.subr.mxu0 0.0
    %1681 = vmatpush1.msra.mxu0 %v1655
    %1682 = vmatprep.subr.mxu0 0.0
    %1683 = vmatpush1.msra.mxu0 %v1656
    %1684 = vmatprep.subr.mxu0 0.0
    %1685 = vmatpush1.msra.mxu0 %v1657
    %1686 = vmatprep.subr.mxu0 0.0
    %1687 = vmatpush1.msra.mxu0 %v1658
    %1688 = vmatprep.subr.mxu0 0.0
    %1689 = vmatpush1.msra.mxu0 %v1659
    %1690 = vmatprep.subr.mxu0 0.0
    %1691 = vmatpush1.msra.mxu0 %v1660
    %1692 = vmatprep.subr.mxu0 0.0
    %1693 = vmatpush1.msra.mxu0 %v1661
    %1694 = vmatprep.subr.mxu0 0.0
    %1695 = vmatpush1.msra.mxu0 0.0
    %1696 = vmatprep.subr.mxu0 0.0
    %1697 = vmatpush1.msra.mxu0 0.0
    %1698 = vmatprep.subr.mxu0 0.0
    %1699 = vmatpush1.msra.mxu0 0.0
    %1700 = vmatprep.subr.mxu0 0.0
    %1701 = vmatpush1.msra.mxu0 0.0
    %1702 = vmatprep.subr.mxu0 0.0
    %1703 = vmatpush1.msra.mxu0 0.0
    %1704 = vmatprep.subr.mxu0 0.0
    %1705 = vmatpush1.msra.mxu0 0.0
    %1706 = vmatprep.subr.mxu0 0.0
    %1707 = vmatpush1.msra.mxu0 0.0
    %1708 = vmatprep.subr.mxu0 0.0
    %1709 = vmatpush1.msra.mxu0 0.0
    %1710 = vmatprep.subr.mxu0 0.0
    %1711 = vmatpush1.msra.mxu0 0.0
    %1712 = vmatprep.subr.mxu0 0.0
    %1713 = vmatpush1.msra.mxu0 0.0
    %1714 = vmatprep.subr.mxu0 0.0
    %1715 = vmatpush1.msra.mxu0 0.0
    %1716 = vmatprep.subr.mxu0 0.0
    %1717 = vmatpush1.msra.mxu0 0.0
    %1718 = vmatprep.subr.mxu0 0.0
    %1719 = vmatpush1.msra.mxu0 0.0
    %1720 = vmatprep.subr.mxu0 0.0
    %1721 = vmatpush1.msra.mxu0 0.0
    %1722 = vmatprep.subr.mxu0 0.0
    %1723 = vmatpush1.msra.mxu0 0.0
    %1724 = vmatprep.subr.mxu0 0.0
    %1725 = vmatpush1.msra.mxu0 0.0
    %1726 = vmatprep.mubr.f32.mxu0 0.0
    %1727 = vmatmul.mubr.f32.gmra.mrb[0].mxu0 %v1557
    %v1728 = vpop.f32.mrb[0].mxu0
    %v1729 = vadd.f32 0.0, %v1728
    %v1730 = vpop.f32.mrb[0].mxu0
    %1731 = vdwg.mxu0
    %v1732 = vmax.f32 %v1642, %v1729
    %v1733 = vld [vmem:[%s5] sm:$0xff]
    %vm1734 = vcmask 64512
    %v1736 = vsel %vm1734, %v1733, 0
    %1738 = vmatprep.subr.mxu0 0.0
    %1739 = vmatpush1.msra.mxu0 %v1732
    %1740 = vmatprep.subr.mxu0 0.0
    %1741 = vmatpush1.msra.mxu0 0.0
    %1742 = vmatprep.subr.mxu0 0.0
    %1743 = vmatpush1.msra.mxu0 0.0
    %1744 = vmatprep.subr.mxu0 0.0
    %1745 = vmatpush1.msra.mxu0 0.0
    %1746 = vmatprep.subr.mxu0 0.0
    %1747 = vmatpush1.msra.mxu0 0.0
    %1748 = vmatprep.subr.mxu0 0.0
    %1749 = vmatpush1.msra.mxu0 0.0
    %1750 = vmatprep.subr.mxu0 0.0
    %1751 = vmatpush1.msra.mxu0 0.0
    %1752 = vmatprep.subr.mxu0 0.0
    %1753 = vmatpush1.msra.mxu0 0.0
    %1754 = vmatprep.subr.mxu0 0.0
    %1755 = vmatpush1.msra.mxu0 0.0
    %1756 = vmatprep.subr.mxu0 0.0
    %1757 = vmatpush1.msra.mxu0 0.0
    %1758 = vmatprep.subr.mxu0 0.0
    %1759 = vmatpush1.msra.mxu0 0.0
    %1760 = vmatprep.subr.mxu0 0.0
    %1761 = vmatpush1.msra.mxu0 0.0
    %1762 = vmatprep.subr.mxu0 0.0
    %1763 = vmatpush1.msra.mxu0 0.0
    %1764 = vmatprep.subr.mxu0 0.0
    %1765 = vmatpush1.msra.mxu0 0.0
    %1766 = vmatprep.subr.mxu0 0.0
    %1767 = vmatpush1.msra.mxu0 0.0
    %1768 = vmatprep.subr.mxu0 0.0
    %1769 = vmatpush1.msra.mxu0 0.0
    %1770 = vmatprep.subr.mxu0 0.0
    %1771 = vmatpush1.msra.mxu0 0.0
    %1772 = vmatprep.subr.mxu0 0.0
    %1773 = vmatpush1.msra.mxu0 0.0
    %1774 = vmatprep.subr.mxu0 0.0
    %1775 = vmatpush1.msra.mxu0 0.0
    %1776 = vmatprep.subr.mxu0 0.0
    %1777 = vmatpush1.msra.mxu0 0.0
    %1778 = vmatprep.subr.mxu0 0.0
    %1779 = vmatpush1.msra.mxu0 0.0
    %1780 = vmatprep.subr.mxu0 0.0
    %1781 = vmatpush1.msra.mxu0 0.0
    %1782 = vmatprep.subr.mxu0 0.0
    %1783 = vmatpush1.msra.mxu0 0.0
    %1784 = vmatprep.subr.mxu0 0.0
    %1785 = vmatpush1.msra.mxu0 0.0
    %1786 = vmatprep.subr.mxu0 0.0
    %1787 = vmatpush1.msra.mxu0 0.0
    %1788 = vmatprep.subr.mxu0 0.0
    %1789 = vmatpush1.msra.mxu0 0.0
    %1790 = vmatprep.subr.mxu0 0.0
    %1791 = vmatpush1.msra.mxu0 0.0
    %1792 = vmatprep.subr.mxu0 0.0
    %1793 = vmatpush1.msra.mxu0 0.0
    %1794 = vmatprep.subr.mxu0 0.0
    %1795 = vmatpush1.msra.mxu0 0.0
    %1796 = vmatprep.subr.mxu0 0.0
    %1797 = vmatpush1.msra.mxu0 0.0
    %1798 = vmatprep.subr.mxu0 0.0
    %1799 = vmatpush1.msra.mxu0 0.0
    %1800 = vmatprep.subr.mxu0 0.0
    %1801 = vmatpush1.msra.mxu0 0.0
    %1802 = vmatprep.mubr.f32.mxu0 0.0
    %1803 = vmatmul.mubr.f32.gmra.mrb[0].mxu0 %v1736
    %v1804 = vpop.f32.mrb[0].mxu0
    %v1805 = vadd.f32 0.0, %v1804
    %v1806 = vpop.f32.mrb[0].mxu0
    %1807 = vdwg.mxu0
    %s1808 = scalar_lea.vmem %s5, 8
    %v1809 = vld [vmem:[%s1808] sm:$0xff]
    %v1811 = vsel %vm1734, %v1809, 0
    %1813 = vmatprep.subr.mxu0 0.0
    %1814 = vmatpush1.msra.mxu0 %v1732
    %1815 = vmatprep.subr.mxu0 0.0
    %1816 = vmatpush1.msra.mxu0 0.0
    %1817 = vmatprep.subr.mxu0 0.0
    %1818 = vmatpush1.msra.mxu0 0.0
    %1819 = vmatprep.subr.mxu0 0.0
    %1820 = vmatpush1.msra.mxu0 0.0
    %1821 = vmatprep.subr.mxu0 0.0
    %1822 = vmatpush1.msra.mxu0 0.0
    %1823 = vmatprep.subr.mxu0 0.0
    %1824 = vmatpush1.msra.mxu0 0.0
    %1825 = vmatprep.subr.mxu0 0.0
    %1826 = vmatpush1.msra.mxu0 0.0
    %1827 = vmatprep.subr.mxu0 0.0
    %1828 = vmatpush1.msra.mxu0 0.0
    %1829 = vmatprep.subr.mxu0 0.0
    %1830 = vmatpush1.msra.mxu0 0.0
    %1831 = vmatprep.subr.mxu0 0.0
    %1832 = vmatpush1.msra.mxu0 0.0
    %1833 = vmatprep.subr.mxu0 0.0
    %1834 = vmatpush1.msra.mxu0 0.0
    %1835 = vmatprep.subr.mxu0 0.0
    %1836 = vmatpush1.msra.mxu0 0.0
    %1837 = vmatprep.subr.mxu0 0.0
    %1838 = vmatpush1.msra.mxu0 0.0
    %1839 = vmatprep.subr.mxu0 0.0
    %1840 = vmatpush1.msra.mxu0 0.0
    %1841 = vmatprep.subr.mxu0 0.0
    %1842 = vmatpush1.msra.mxu0 0.0
    %1843 = vmatprep.subr.mxu0 0.0
    %1844 = vmatpush1.msra.mxu0 0.0
    %1845 = vmatprep.subr.mxu0 0.0
    %1846 = vmatpush1.msra.mxu0 0.0
    %1847 = vmatprep.subr.mxu0 0.0
    %1848 = vmatpush1.msra.mxu0 0.0
    %1849 = vmatprep.subr.mxu0 0.0
    %1850 = vmatpush1.msra.mxu0 0.0
    %1851 = vmatprep.subr.mxu0 0.0
    %1852 = vmatpush1.msra.mxu0 0.0
    %1853 = vmatprep.subr.mxu0 0.0
    %1854 = vmatpush1.msra.mxu0 0.0
    %1855 = vmatprep.subr.mxu0 0.0
    %1856 = vmatpush1.msra.mxu0 0.0
    %1857 = vmatprep.subr.mxu0 0.0
    %1858 = vmatpush1.msra.mxu0 0.0
    %1859 = vmatprep.subr.mxu0 0.0
    %1860 = vmatpush1.msra.mxu0 0.0
    %1861 = vmatprep.subr.mxu0 0.0
    %1862 = vmatpush1.msra.mxu0 0.0
    %1863 = vmatprep.subr.mxu0 0.0
    %1864 = vmatpush1.msra.mxu0 0.0
    %1865 = vmatprep.subr.mxu0 0.0
    %1866 = vmatpush1.msra.mxu0 0.0
    %1867 = vmatprep.subr.mxu0 0.0
    %1868 = vmatpush1.msra.mxu0 0.0
    %1869 = vmatprep.subr.mxu0 0.0
    %1870 = vmatpush1.msra.mxu0 0.0
    %1871 = vmatprep.subr.mxu0 0.0
    %1872 = vmatpush1.msra.mxu0 0.0
    %1873 = vmatprep.subr.mxu0 0.0
    %1874 = vmatpush1.msra.mxu0 0.0
    %1875 = vmatprep.subr.mxu0 0.0
    %1876 = vmatpush1.msra.mxu0 0.0
    %1877 = vmatprep.mubr.f32.mxu0 0.0
    %1878 = vmatmul.mubr.f32.gmra.mrb[0].mxu0 %v1811
    %v1879 = vpop.f32.mrb[0].mxu0
    %v1880 = vadd.f32 0.0, %v1879
    %v1881 = vpop.f32.mrb[0].mxu0
    %1882 = vdwg.mxu0
    %s1883 = scalar_lea.vmem %s1, 384
    %v1884 = vld [vmem:[%s1883] sm:$0xff]
    %v1885 = vld [vmem:[%s1883 + $0x8] sm:$0xff]
    %v1886 = vld [vmem:[%s1883 + $0x10] sm:$0xff]
    %v1887 = vld [vmem:[%s1883 + $0x18] sm:$0xff]
    %v1888 = vld [vmem:[%s1883 + $0x20] sm:$0xff]
    %v1889 = vld [vmem:[%s1883 + $0x28] sm:$0xff]
    %v1890 = vld [vmem:[%s1883 + $0x30] sm:$0xff]
    %v1891 = vld [vmem:[%s1883 + $0x38] sm:$0xff]
    %s1892 = scalar_lea.vmem %s1, 448
    %v1893 = vld [vmem:[%s1892] sm:$0xff]
    %v1894 = vld [vmem:[%s1892 + $0x8] sm:$0xff]
    %v1895 = vld [vmem:[%s1892 + $0x10] sm:$0xff]
    %v1896 = vld [vmem:[%s1892 + $0x18] sm:$0xff]
    %v1897 = vld [vmem:[%s1892 + $0x20] sm:$0xff]
    %v1898 = vld [vmem:[%s1892 + $0x28] sm:$0xff]
    %v1899 = vld [vmem:[%s1892 + $0x30] sm:$0xff]
    %v1900 = vld [vmem:[%s1892 + $0x38] sm:$0xff]
    %v1902 = vsel %vm282, %v1732, 0
    %1904 = vmatprep.subr.mxu0 0.0
    %1905 = vmatpush1.msra.mxu0 %v1893
    %1906 = vmatprep.subr.mxu0 0.0
    %1907 = vmatpush1.msra.mxu0 %v1894
    %1908 = vmatprep.subr.mxu0 0.0
    %1909 = vmatpush1.msra.mxu0 %v1895
    %1910 = vmatprep.subr.mxu0 0.0
    %1911 = vmatpush1.msra.mxu0 %v1896
    %1912 = vmatprep.subr.mxu0 0.0
    %1913 = vmatpush1.msra.mxu0 %v1897
    %1914 = vmatprep.subr.mxu0 0.0
    %1915 = vmatpush1.msra.mxu0 %v1898
    %1916 = vmatprep.subr.mxu0 0.0
    %1917 = vmatpush1.msra.mxu0 %v1899
    %1918 = vmatprep.subr.mxu0 0.0
    %1919 = vmatpush1.msra.mxu0 %v1900
    %1920 = vmatprep.subr.mxu0 0.0
    %1921 = vmatpush1.msra.mxu0 0.0
    %1922 = vmatprep.subr.mxu0 0.0
    %1923 = vmatpush1.msra.mxu0 0.0
    %1924 = vmatprep.subr.mxu0 0.0
    %1925 = vmatpush1.msra.mxu0 0.0
    %1926 = vmatprep.subr.mxu0 0.0
    %1927 = vmatpush1.msra.mxu0 0.0
    %1928 = vmatprep.subr.mxu0 0.0
    %1929 = vmatpush1.msra.mxu0 0.0
    %1930 = vmatprep.subr.mxu0 0.0
    %1931 = vmatpush1.msra.mxu0 0.0
    %1932 = vmatprep.subr.mxu0 0.0
    %1933 = vmatpush1.msra.mxu0 0.0
    %1934 = vmatprep.subr.mxu0 0.0
    %1935 = vmatpush1.msra.mxu0 0.0
    %1936 = vmatprep.subr.mxu0 0.0
    %1937 = vmatpush1.msra.mxu0 0.0
    %1938 = vmatprep.subr.mxu0 0.0
    %1939 = vmatpush1.msra.mxu0 0.0
    %1940 = vmatprep.subr.mxu0 0.0
    %1941 = vmatpush1.msra.mxu0 0.0
    %1942 = vmatprep.subr.mxu0 0.0
    %1943 = vmatpush1.msra.mxu0 0.0
    %1944 = vmatprep.subr.mxu0 0.0
    %1945 = vmatpush1.msra.mxu0 0.0
    %1946 = vmatprep.subr.mxu0 0.0
    %1947 = vmatpush1.msra.mxu0 0.0
    %1948 = vmatprep.subr.mxu0 0.0
    %1949 = vmatpush1.msra.mxu0 0.0
    %1950 = vmatprep.subr.mxu0 0.0
    %1951 = vmatpush1.msra.mxu0 0.0
    %1952 = vmatprep.subr.mxu0 0.0
    %1953 = vmatpush1.msra.mxu0 0.0
    %1954 = vmatprep.subr.mxu0 0.0
    %1955 = vmatpush1.msra.mxu0 0.0
    %1956 = vmatprep.subr.mxu0 0.0
    %1957 = vmatpush1.msra.mxu0 0.0
    %1958 = vmatprep.subr.mxu0 0.0
    %1959 = vmatpush1.msra.mxu0 0.0
    %1960 = vmatprep.subr.mxu0 0.0
    %1961 = vmatpush1.msra.mxu0 0.0
    %1962 = vmatprep.subr.mxu0 0.0
    %1963 = vmatpush1.msra.mxu0 0.0
    %1964 = vmatprep.subr.mxu0 0.0
    %1965 = vmatpush1.msra.mxu0 0.0
    %1966 = vmatprep.subr.mxu0 0.0
    %1967 = vmatpush1.msra.mxu0 0.0
    %1968 = vmatprep.mubr.f32.mxu0 0.0
    %1969 = vmatmul.mubr.f32.gmra.mrb[0].mxu0 %v1902
    %v1970 = vpop.f32.mrb[0].mxu0
    %v1971 = vadd.f32 0.0, %v1970
    %v1972 = vpop.f32.mrb[0].mxu0
    %1973 = vdwg.mxu0
    %v1975 = vsel %vm282, %v1805, 0
    %1977 = vmatprep.subr.mxu0 0.0
    %1978 = vmatpush1.msra.mxu0 %v1884
    %1979 = vmatprep.subr.mxu0 0.0
    %1980 = vmatpush1.msra.mxu0 %v1885
    %1981 = vmatprep.subr.mxu0 0.0
    %1982 = vmatpush1.msra.mxu0 %v1886
    %1983 = vmatprep.subr.mxu0 0.0
    %1984 = vmatpush1.msra.mxu0 %v1887
    %1985 = vmatprep.subr.mxu0 0.0
    %1986 = vmatpush1.msra.mxu0 %v1888
    %1987 = vmatprep.subr.mxu0 0.0
    %1988 = vmatpush1.msra.mxu0 %v1889
    %1989 = vmatprep.subr.mxu0 0.0
    %1990 = vmatpush1.msra.mxu0 %v1890
    %1991 = vmatprep.subr.mxu0 0.0
    %1992 = vmatpush1.msra.mxu0 %v1891
    %1993 = vmatprep.subr.mxu0 0.0
    %1994 = vmatpush1.msra.mxu0 0.0
    %1995 = vmatprep.subr.mxu0 0.0
    %1996 = vmatpush1.msra.mxu0 0.0
    %1997 = vmatprep.subr.mxu0 0.0
    %1998 = vmatpush1.msra.mxu0 0.0
    %1999 = vmatprep.subr.mxu0 0.0
    %2000 = vmatpush1.msra.mxu0 0.0
    %2001 = vmatprep.subr.mxu0 0.0
    %2002 = vmatpush1.msra.mxu0 0.0
    %2003 = vmatprep.subr.mxu0 0.0
    %2004 = vmatpush1.msra.mxu0 0.0
    %2005 = vmatprep.subr.mxu0 0.0
    %2006 = vmatpush1.msra.mxu0 0.0
    %2007 = vmatprep.subr.mxu0 0.0
    %2008 = vmatpush1.msra.mxu0 0.0
    %2009 = vmatprep.subr.mxu0 0.0
    %2010 = vmatpush1.msra.mxu0 0.0
    %2011 = vmatprep.subr.mxu0 0.0
    %2012 = vmatpush1.msra.mxu0 0.0
    %2013 = vmatprep.subr.mxu0 0.0
    %2014 = vmatpush1.msra.mxu0 0.0
    %2015 = vmatprep.subr.mxu0 0.0
    %2016 = vmatpush1.msra.mxu0 0.0
    %2017 = vmatprep.subr.mxu0 0.0
    %2018 = vmatpush1.msra.mxu0 0.0
    %2019 = vmatprep.subr.mxu0 0.0
    %2020 = vmatpush1.msra.mxu0 0.0
    %2021 = vmatprep.subr.mxu0 0.0
    %2022 = vmatpush1.msra.mxu0 0.0
    %2023 = vmatprep.subr.mxu0 0.0
    %2024 = vmatpush1.msra.mxu0 0.0
    %2025 = vmatprep.subr.mxu0 0.0
    %2026 = vmatpush1.msra.mxu0 0.0
    %2027 = vmatprep.subr.mxu0 0.0
    %2028 = vmatpush1.msra.mxu0 0.0
    %2029 = vmatprep.subr.mxu0 0.0
    %2030 = vmatpush1.msra.mxu0 0.0
    %2031 = vmatprep.subr.mxu0 0.0
    %2032 = vmatpush1.msra.mxu0 0.0
    %2033 = vmatprep.subr.mxu0 0.0
    %2034 = vmatpush1.msra.mxu0 0.0
    %2035 = vmatprep.subr.mxu0 0.0
    %2036 = vmatpush1.msra.mxu0 0.0
    %2037 = vmatprep.subr.mxu0 0.0
    %2038 = vmatpush1.msra.mxu0 0.0
    %2039 = vmatprep.subr.mxu0 0.0
    %2040 = vmatpush1.msra.mxu0 0.0
    %2041 = vmatprep.mubr.f32.mxu0 0.0
    %2042 = vmatmul.mubr.f32.gmra.mrb[0].mxu0 %v1975
    %v2043 = vpop.f32.mrb[0].mxu0
    %v2044 = vadd.f32 %v1971, %v2043
    %v2045 = vpop.f32.mrb[0].mxu0
    %2046 = vdwg.mxu0
    %s2047 = scalar_lea.vmem %s1, 512
    %v2048 = vld [vmem:[%s2047] sm:$0xff]
    %v2049 = vld [vmem:[%s2047 + $0x8] sm:$0xff]
    %v2050 = vld [vmem:[%s2047 + $0x10] sm:$0xff]
    %v2051 = vld [vmem:[%s2047 + $0x18] sm:$0xff]
    %v2052 = vld [vmem:[%s2047 + $0x20] sm:$0xff]
    %v2053 = vld [vmem:[%s2047 + $0x28] sm:$0xff]
    %v2054 = vld [vmem:[%s2047 + $0x30] sm:$0xff]
    %v2055 = vld [vmem:[%s2047 + $0x38] sm:$0xff]
    %v2057 = vsel %vm282, %v1880, 0
    %2059 = vmatprep.subr.mxu0 0.0
    %2060 = vmatpush1.msra.mxu0 %v2048
    %2061 = vmatprep.subr.mxu0 0.0
    %2062 = vmatpush1.msra.mxu0 %v2049
    %2063 = vmatprep.subr.mxu0 0.0
    %2064 = vmatpush1.msra.mxu0 %v2050
    %2065 = vmatprep.subr.mxu0 0.0
    %2066 = vmatpush1.msra.mxu0 %v2051
    %2067 = vmatprep.subr.mxu0 0.0
    %2068 = vmatpush1.msra.mxu0 %v2052
    %2069 = vmatprep.subr.mxu0 0.0
    %2070 = vmatpush1.msra.mxu0 %v2053
    %2071 = vmatprep.subr.mxu0 0.0
    %2072 = vmatpush1.msra.mxu0 %v2054
    %2073 = vmatprep.subr.mxu0 0.0
    %2074 = vmatpush1.msra.mxu0 %v2055
    %2075 = vmatprep.subr.mxu0 0.0
    %2076 = vmatpush1.msra.mxu0 0.0
    %2077 = vmatprep.subr.mxu0 0.0
    %2078 = vmatpush1.msra.mxu0 0.0
    %2079 = vmatprep.subr.mxu0 0.0
    %2080 = vmatpush1.msra.mxu0 0.0
    %2081 = vmatprep.subr.mxu0 0.0
    %2082 = vmatpush1.msra.mxu0 0.0
    %2083 = vmatprep.subr.mxu0 0.0
    %2084 = vmatpush1.msra.mxu0 0.0
    %2085 = vmatprep.subr.mxu0 0.0
    %2086 = vmatpush1.msra.mxu0 0.0
    %2087 = vmatprep.subr.mxu0 0.0
    %2088 = vmatpush1.msra.mxu0 0.0
    %2089 = vmatprep.subr.mxu0 0.0
    %2090 = vmatpush1.msra.mxu0 0.0
    %2091 = vmatprep.subr.mxu0 0.0
    %2092 = vmatpush1.msra.mxu0 0.0
    %2093 = vmatprep.subr.mxu0 0.0
    %2094 = vmatpush1.msra.mxu0 0.0
    %2095 = vmatprep.subr.mxu0 0.0
    %2096 = vmatpush1.msra.mxu0 0.0
    %2097 = vmatprep.subr.mxu0 0.0
    %2098 = vmatpush1.msra.mxu0 0.0
    %2099 = vmatprep.subr.mxu0 0.0
    %2100 = vmatpush1.msra.mxu0 0.0
    %2101 = vmatprep.subr.mxu0 0.0
    %2102 = vmatpush1.msra.mxu0 0.0
    %2103 = vmatprep.subr.mxu0 0.0
    %2104 = vmatpush1.msra.mxu0 0.0
    %2105 = vmatprep.subr.mxu0 0.0
    %2106 = vmatpush1.msra.mxu0 0.0
    %2107 = vmatprep.subr.mxu0 0.0
    %2108 = vmatpush1.msra.mxu0 0.0
    %2109 = vmatprep.subr.mxu0 0.0
    %2110 = vmatpush1.msra.mxu0 0.0
    %2111 = vmatprep.subr.mxu0 0.0
    %2112 = vmatpush1.msra.mxu0 0.0
    %2113 = vmatprep.subr.mxu0 0.0
    %2114 = vmatpush1.msra.mxu0 0.0
    %2115 = vmatprep.subr.mxu0 0.0
    %2116 = vmatpush1.msra.mxu0 0.0
    %2117 = vmatprep.subr.mxu0 0.0
    %2118 = vmatpush1.msra.mxu0 0.0
    %2119 = vmatprep.subr.mxu0 0.0
    %2120 = vmatpush1.msra.mxu0 0.0
    %2121 = vmatprep.subr.mxu0 0.0
    %2122 = vmatpush1.msra.mxu0 0.0
    %2123 = vmatprep.mubr.f32.mxu0 0.0
    %2124 = vmatmul.mubr.f32.gmra.mrb[0].mxu0 %v2057
    %v2125 = vpop.f32.mrb[0].mxu0
    %v2126 = vadd.f32 0.0, %v2125
    %v2127 = vpop.f32.mrb[0].mxu0
    %2128 = vdwg.mxu0
    %v2129 = vadd.f32 %v2044, %v2126
    %s2130 = scalar_lea.vmem %s2, 2
    %v2131 = vld [vmem:[%s2130] sm:$0x1]
    %v2133 = vlaneseq
    %v2134 = vshrl.u32 %v2133, 7
    %v2135 = vsub.s32 0, %v2134
    %v2136 = vrot.slane %v2131, %v2135
    %v2138 = vadd.f32 %v2129, %v2136
    %v2139 = vmax.f32 %v2138, 0.0
    %v2140 = vld [vmem:[%s8] sm:$0xf]
    %v2142 = vsel %vm1734, %v2140, 0
    %2144 = vmatprep.subr.mxu0 0.0
    %2145 = vmatpush1.msra.mxu0 %v2139
    %2146 = vmatprep.subr.mxu0 0.0
    %2147 = vmatpush1.msra.mxu0 0.0
    %2148 = vmatprep.subr.mxu0 0.0
    %2149 = vmatpush1.msra.mxu0 0.0
    %2150 = vmatprep.subr.mxu0 0.0
    %2151 = vmatpush1.msra.mxu0 0.0
    %2152 = vmatprep.subr.mxu0 0.0
    %2153 = vmatpush1.msra.mxu0 0.0
    %2154 = vmatprep.subr.mxu0 0.0
    %2155 = vmatpush1.msra.mxu0 0.0
    %2156 = vmatprep.subr.mxu0 0.0
    %2157 = vmatpush1.msra.mxu0 0.0
    %2158 = vmatprep.subr.mxu0 0.0
    %2159 = vmatpush1.msra.mxu0 0.0
    %2160 = vmatprep.subr.mxu0 0.0
    %2161 = vmatpush1.msra.mxu0 0.0
    %2162 = vmatprep.subr.mxu0 0.0
    %2163 = vmatpush1.msra.mxu0 0.0
    %2164 = vmatprep.subr.mxu0 0.0
    %2165 = vmatpush1.msra.mxu0 0.0
    %2166 = vmatprep.subr.mxu0 0.0
    %2167 = vmatpush1.msra.mxu0 0.0
    %2168 = vmatprep.subr.mxu0 0.0
    %2169 = vmatpush1.msra.mxu0 0.0
    %2170 = vmatprep.subr.mxu0 0.0
    %2171 = vmatpush1.msra.mxu0 0.0
    %2172 = vmatprep.subr.mxu0 0.0
    %2173 = vmatpush1.msra.mxu0 0.0
    %2174 = vmatprep.subr.mxu0 0.0
    %2175 = vmatpush1.msra.mxu0 0.0
    %2176 = vmatprep.subr.mxu0 0.0
    %2177 = vmatpush1.msra.mxu0 0.0
    %2178 = vmatprep.subr.mxu0 0.0
    %2179 = vmatpush1.msra.mxu0 0.0
    %2180 = vmatprep.subr.mxu0 0.0
    %2181 = vmatpush1.msra.mxu0 0.0
    %2182 = vmatprep.subr.mxu0 0.0
    %2183 = vmatpush1.msra.mxu0 0.0
    %2184 = vmatprep.subr.mxu0 0.0
    %2185 = vmatpush1.msra.mxu0 0.0
    %2186 = vmatprep.subr.mxu0 0.0
    %2187 = vmatpush1.msra.mxu0 0.0
    %2188 = vmatprep.subr.mxu0 0.0
    %2189 = vmatpush1.msra.mxu0 0.0
    %2190 = vmatprep.subr.mxu0 0.0
    %2191 = vmatpush1.msra.mxu0 0.0
    %2192 = vmatprep.subr.mxu0 0.0
    %2193 = vmatpush1.msra.mxu0 0.0
    %2194 = vmatprep.subr.mxu0 0.0
    %2195 = vmatpush1.msra.mxu0 0.0
    %2196 = vmatprep.subr.mxu0 0.0
    %2197 = vmatpush1.msra.mxu0 0.0
    %2198 = vmatprep.subr.mxu0 0.0
    %2199 = vmatpush1.msra.mxu0 0.0
    %2200 = vmatprep.subr.mxu0 0.0
    %2201 = vmatpush1.msra.mxu0 0.0
    %2202 = vmatprep.subr.mxu0 0.0
    %2203 = vmatpush1.msra.mxu0 0.0
    %2204 = vmatprep.subr.mxu0 0.0
    %2205 = vmatpush1.msra.mxu0 0.0
    %2206 = vmatprep.subr.mxu0 0.0
    %2207 = vmatpush1.msra.mxu0 0.0
    %2208 = vmatprep.mubr.f32.mxu0 0.0
    %2209 = vmatmul.mubr.f32.gmra.mrb[0].mxu0 %v2142
    %v2210 = vpop.f32.mrb[0].mxu0
    %v2211 = vadd.f32 0.0, %v2210
    %v2212 = vpop.f32.mrb[0].mxu0
    %2213 = vdwg.mxu0
    %s2214 = scalar_lea.vmem %s8, 4
    %v2215 = vld [vmem:[%s2214] sm:$0xf]
    %v2217 = vsel %vm1734, %v2215, 0
    %2219 = vmatprep.subr.mxu0 0.0
    %2220 = vmatpush1.msra.mxu0 %v2139
    %2221 = vmatprep.subr.mxu0 0.0
    %2222 = vmatpush1.msra.mxu0 0.0
    %2223 = vmatprep.subr.mxu0 0.0
    %2224 = vmatpush1.msra.mxu0 0.0
    %2225 = vmatprep.subr.mxu0 0.0
    %2226 = vmatpush1.msra.mxu0 0.0
    %2227 = vmatprep.subr.mxu0 0.0
    %2228 = vmatpush1.msra.mxu0 0.0
    %2229 = vmatprep.subr.mxu0 0.0
    %2230 = vmatpush1.msra.mxu0 0.0
    %2231 = vmatprep.subr.mxu0 0.0
    %2232 = vmatpush1.msra.mxu0 0.0
    %2233 = vmatprep.subr.mxu0 0.0
    %2234 = vmatpush1.msra.mxu0 0.0
    %2235 = vmatprep.subr.mxu0 0.0
    %2236 = vmatpush1.msra.mxu0 0.0
    %2237 = vmatprep.subr.mxu0 0.0
    %2238 = vmatpush1.msra.mxu0 0.0
    %2239 = vmatprep.subr.mxu0 0.0
    %2240 = vmatpush1.msra.mxu0 0.0
    %2241 = vmatprep.subr.mxu0 0.0
    %2242 = vmatpush1.msra.mxu0 0.0
    %2243 = vmatprep.subr.mxu0 0.0
    %2244 = vmatpush1.msra.mxu0 0.0
    %2245 = vmatprep.subr.mxu0 0.0
    %2246 = vmatpush1.msra.mxu0 0.0
    %2247 = vmatprep.subr.mxu0 0.0
    %2248 = vmatpush1.msra.mxu0 0.0
    %2249 = vmatprep.subr.mxu0 0.0
    %2250 = vmatpush1.msra.mxu0 0.0
    %2251 = vmatprep.subr.mxu0 0.0
    %2252 = vmatpush1.msra.mxu0 0.0
    %2253 = vmatprep.subr.mxu0 0.0
    %2254 = vmatpush1.msra.mxu0 0.0
    %2255 = vmatprep.subr.mxu0 0.0
    %2256 = vmatpush1.msra.mxu0 0.0
    %2257 = vmatprep.subr.mxu0 0.0
    %2258 = vmatpush1.msra.mxu0 0.0
    %2259 = vmatprep.subr.mxu0 0.0
    %2260 = vmatpush1.msra.mxu0 0.0
    %2261 = vmatprep.subr.mxu0 0.0
    %2262 = vmatpush1.msra.mxu0 0.0
    %2263 = vmatprep.subr.mxu0 0.0
    %2264 = vmatpush1.msra.mxu0 0.0
    %2265 = vmatprep.subr.mxu0 0.0
    %2266 = vmatpush1.msra.mxu0 0.0
    %2267 = vmatprep.subr.mxu0 0.0
    %2268 = vmatpush1.msra.mxu0 0.0
    %2269 = vmatprep.subr.mxu0 0.0
    %2270 = vmatpush1.msra.mxu0 0.0
    %2271 = vmatprep.subr.mxu0 0.0
    %2272 = vmatpush1.msra.mxu0 0.0
    %2273 = vmatprep.subr.mxu0 0.0
    %2274 = vmatpush1.msra.mxu0 0.0
    %2275 = vmatprep.subr.mxu0 0.0
    %2276 = vmatpush1.msra.mxu0 0.0
    %2277 = vmatprep.subr.mxu0 0.0
    %2278 = vmatpush1.msra.mxu0 0.0
    %2279 = vmatprep.subr.mxu0 0.0
    %2280 = vmatpush1.msra.mxu0 0.0
    %2281 = vmatprep.subr.mxu0 0.0
    %2282 = vmatpush1.msra.mxu0 0.0
    %2283 = vmatprep.mubr.f32.mxu0 0.0
    %2284 = vmatmul.mubr.f32.gmra.mrb[0].mxu0 %v2217
    %v2285 = vpop.f32.mrb[0].mxu0
    %v2286 = vadd.f32 0.0, %v2285
    %v2287 = vpop.f32.mrb[0].mxu0
    %2288 = vdwg.mxu0
    %v2289 = vmax.f32 %v2211, %v2286
    %s2290 = scalar_lea.vmem %s9, 512
    %v2291 = vld [vmem:[%s2290] sm:$0xff]
    %v2292 = vld [vmem:[%s2290 + $0x8] sm:$0xff]
    %v2293 = vld [vmem:[%s2290 + $0x10] sm:$0xff]
    %v2294 = vld [vmem:[%s2290 + $0x18] sm:$0xff]
    %v2295 = vld [vmem:[%s2290 + $0x20] sm:$0xff]
    %v2296 = vld [vmem:[%s2290 + $0x28] sm:$0xff]
    %v2297 = vld [vmem:[%s2290 + $0x30] sm:$0xff]
    %v2298 = vld [vmem:[%s2290 + $0x38] sm:$0xff]
    %v2299 = vld [vmem:[%s2290 + $0x40] sm:$0xff]
    %v2300 = vld [vmem:[%s2290 + $0x48] sm:$0xff]
    %v2301 = vld [vmem:[%s2290 + $0x50] sm:$0xff]
    %v2302 = vld [vmem:[%s2290 + $0x58] sm:$0xff]
    %v2303 = vld [vmem:[%s2290 + $0x60] sm:$0xff]
    %v2304 = vld [vmem:[%s2290 + $0x68] sm:$0xff]
    %v2305 = vld [vmem:[%s2290 + $0x70] sm:$0xff]
    %v2306 = vld [vmem:[%s2290 + $0x78] sm:$0xff]
    %2307 = vmatprep.subr.mxu0 0.0
    %2308 = vmatpush1.msra.mxu0 %v2291
    %2309 = vmatprep.subr.mxu0 0.0
    %2310 = vmatpush1.msra.mxu0 %v2292
    %2311 = vmatprep.subr.mxu0 0.0
    %2312 = vmatpush1.msra.mxu0 %v2293
    %2313 = vmatprep.subr.mxu0 0.0
    %2314 = vmatpush1.msra.mxu0 %v2294
    %2315 = vmatprep.subr.mxu0 0.0
    %2316 = vmatpush1.msra.mxu0 %v2295
    %2317 = vmatprep.subr.mxu0 0.0
    %2318 = vmatpush1.msra.mxu0 %v2296
    %2319 = vmatprep.subr.mxu0 0.0
    %2320 = vmatpush1.msra.mxu0 %v2297
    %2321 = vmatprep.subr.mxu0 0.0
    %2322 = vmatpush1.msra.mxu0 %v2298
    %2323 = vmatprep.subr.mxu0 0.0
    %2324 = vmatpush1.msra.mxu0 %v2299
    %2325 = vmatprep.subr.mxu0 0.0
    %2326 = vmatpush1.msra.mxu0 %v2300
    %2327 = vmatprep.subr.mxu0 0.0
    %2328 = vmatpush1.msra.mxu0 %v2301
    %2329 = vmatprep.subr.mxu0 0.0
    %2330 = vmatpush1.msra.mxu0 %v2302
    %2331 = vmatprep.subr.mxu0 0.0
    %2332 = vmatpush1.msra.mxu0 %v2303
    %2333 = vmatprep.subr.mxu0 0.0
    %2334 = vmatpush1.msra.mxu0 %v2304
    %2335 = vmatprep.subr.mxu0 0.0
    %2336 = vmatpush1.msra.mxu0 %v2305
    %2337 = vmatprep.subr.mxu0 0.0
    %2338 = vmatpush1.msra.mxu0 %v2306
    %2339 = vmatprep.subr.mxu0 0.0
    %2340 = vmatpush1.msra.mxu0 0.0
    %2341 = vmatprep.subr.mxu0 0.0
    %2342 = vmatpush1.msra.mxu0 0.0
    %2343 = vmatprep.subr.mxu0 0.0
    %2344 = vmatpush1.msra.mxu0 0.0
    %2345 = vmatprep.subr.mxu0 0.0
    %2346 = vmatpush1.msra.mxu0 0.0
    %2347 = vmatprep.subr.mxu0 0.0
    %2348 = vmatpush1.msra.mxu0 0.0
    %2349 = vmatprep.subr.mxu0 0.0
    %2350 = vmatpush1.msra.mxu0 0.0
    %2351 = vmatprep.subr.mxu0 0.0
    %2352 = vmatpush1.msra.mxu0 0.0
    %2353 = vmatprep.subr.mxu0 0.0
    %2354 = vmatpush1.msra.mxu0 0.0
    %2355 = vmatprep.subr.mxu0 0.0
    %2356 = vmatpush1.msra.mxu0 0.0
    %2357 = vmatprep.subr.mxu0 0.0
    %2358 = vmatpush1.msra.mxu0 0.0
    %2359 = vmatprep.subr.mxu0 0.0
    %2360 = vmatpush1.msra.mxu0 0.0
    %2361 = vmatprep.subr.mxu0 0.0
    %2362 = vmatpush1.msra.mxu0 0.0
    %2363 = vmatprep.subr.mxu0 0.0
    %2364 = vmatpush1.msra.mxu0 0.0
    %2365 = vmatprep.subr.mxu0 0.0
    %2366 = vmatpush1.msra.mxu0 0.0
    %2367 = vmatprep.subr.mxu0 0.0
    %2368 = vmatpush1.msra.mxu0 0.0
    %2369 = vmatprep.subr.mxu0 0.0
    %2370 = vmatpush1.msra.mxu0 0.0
    %2371 = vmatprep.mubr.f32.mxu0 0.0
    %2372 = vmatmul.mubr.f32.gmra.mrb[0].mxu0 %v2289
    %v2373 = vpop.f32.mrb[0].mxu0
    %v2374 = vadd.f32 0.0, %v2373
    %v2375 = vpop.f32.mrb[0].mxu0
    %2376 = vdwg.mxu0
    %s2377 = scalar_lea.vmem %s9, 640
    %v2378 = vld [vmem:[%s2377] sm:$0xff]
    %v2379 = vld [vmem:[%s2377 + $0x8] sm:$0xff]
    %v2380 = vld [vmem:[%s2377 + $0x10] sm:$0xff]
    %v2381 = vld [vmem:[%s2377 + $0x18] sm:$0xff]
    %v2382 = vld [vmem:[%s2377 + $0x20] sm:$0xff]
    %v2383 = vld [vmem:[%s2377 + $0x28] sm:$0xff]
    %v2384 = vld [vmem:[%s2377 + $0x30] sm:$0xff]
    %v2385 = vld [vmem:[%s2377 + $0x38] sm:$0xff]
    %v2386 = vld [vmem:[%s2377 + $0x40] sm:$0xff]
    %v2387 = vld [vmem:[%s2377 + $0x48] sm:$0xff]
    %v2388 = vld [vmem:[%s2377 + $0x50] sm:$0xff]
    %v2389 = vld [vmem:[%s2377 + $0x58] sm:$0xff]
    %v2390 = vld [vmem:[%s2377 + $0x60] sm:$0xff]
    %v2391 = vld [vmem:[%s2377 + $0x68] sm:$0xff]
    %v2392 = vld [vmem:[%s2377 + $0x70] sm:$0xff]
    %v2393 = vld [vmem:[%s2377 + $0x78] sm:$0xff]
    %2394 = vmatprep.subr.mxu0 0.0
    %2395 = vmatpush1.msra.mxu0 %v2378
    %2396 = vmatprep.subr.mxu0 0.0
    %2397 = vmatpush1.msra.mxu0 %v2379
    %2398 = vmatprep.subr.mxu0 0.0
    %2399 = vmatpush1.msra.mxu0 %v2380
    %2400 = vmatprep.subr.mxu0 0.0
    %2401 = vmatpush1.msra.mxu0 %v2381
    %2402 = vmatprep.subr.mxu0 0.0
    %2403 = vmatpush1.msra.mxu0 %v2382
    %2404 = vmatprep.subr.mxu0 0.0
    %2405 = vmatpush1.msra.mxu0 %v2383
    %2406 = vmatprep.subr.mxu0 0.0
    %2407 = vmatpush1.msra.mxu0 %v2384
    %2408 = vmatprep.subr.mxu0 0.0
    %2409 = vmatpush1.msra.mxu0 %v2385
    %2410 = vmatprep.subr.mxu0 0.0
    %2411 = vmatpush1.msra.mxu0 %v2386
    %2412 = vmatprep.subr.mxu0 0.0
    %2413 = vmatpush1.msra.mxu0 %v2387
    %2414 = vmatprep.subr.mxu0 0.0
    %2415 = vmatpush1.msra.mxu0 %v2388
    %2416 = vmatprep.subr.mxu0 0.0
    %2417 = vmatpush1.msra.mxu0 %v2389
    %2418 = vmatprep.subr.mxu0 0.0
    %2419 = vmatpush1.msra.mxu0 %v2390
    %2420 = vmatprep.subr.mxu0 0.0
    %2421 = vmatpush1.msra.mxu0 %v2391
    %2422 = vmatprep.subr.mxu0 0.0
    %2423 = vmatpush1.msra.mxu0 %v2392
    %2424 = vmatprep.subr.mxu0 0.0
    %2425 = vmatpush1.msra.mxu0 %v2393
    %2426 = vmatprep.subr.mxu0 0.0
    %2427 = vmatpush1.msra.mxu0 0.0
    %2428 = vmatprep.subr.mxu0 0.0
    %2429 = vmatpush1.msra.mxu0 0.0
    %2430 = vmatprep.subr.mxu0 0.0
    %2431 = vmatpush1.msra.mxu0 0.0
    %2432 = vmatprep.subr.mxu0 0.0
    %2433 = vmatpush1.msra.mxu0 0.0
    %2434 = vmatprep.subr.mxu0 0.0
    %2435 = vmatpush1.msra.mxu0 0.0
    %2436 = vmatprep.subr.mxu0 0.0
    %2437 = vmatpush1.msra.mxu0 0.0
    %2438 = vmatprep.subr.mxu0 0.0
    %2439 = vmatpush1.msra.mxu0 0.0
    %2440 = vmatprep.subr.mxu0 0.0
    %2441 = vmatpush1.msra.mxu0 0.0
    %2442 = vmatprep.subr.mxu0 0.0
    %2443 = vmatpush1.msra.mxu0 0.0
    %2444 = vmatprep.subr.mxu0 0.0
    %2445 = vmatpush1.msra.mxu0 0.0
    %2446 = vmatprep.subr.mxu0 0.0
    %2447 = vmatpush1.msra.mxu0 0.0
    %2448 = vmatprep.subr.mxu0 0.0
    %2449 = vmatpush1.msra.mxu0 0.0
    %2450 = vmatprep.subr.mxu0 0.0
    %2451 = vmatpush1.msra.mxu0 0.0
    %2452 = vmatprep.subr.mxu0 0.0
    %2453 = vmatpush1.msra.mxu0 0.0
    %2454 = vmatprep.subr.mxu0 0.0
    %2455 = vmatpush1.msra.mxu0 0.0
    %2456 = vmatprep.subr.mxu0 0.0
    %2457 = vmatpush1.msra.mxu0 0.0
    %2458 = vmatprep.mubr.f32.mxu0 0.0
    %2459 = vmatmul.mubr.f32.gmra.mrb[0].mxu0 %v2289
    %v2460 = vpop.f32.mrb[0].mxu0
    %v2461 = vadd.f32 0.0, %v2460
    %v2462 = vpop.f32.mrb[0].mxu0
    %2463 = vdwg.mxu0
    %v2464 = vmax.f32 %v2374, %v2461
    %v2465 = vld [vmem:[%s10] sm:$0x3]
    %vm2466 = vcmask 31744
    %v2468 = vsel %vm2466, %v2465, 0
    %vm2470 = vcmask 1043456
    %v2472 = vsel %vm2470, %v2464, 0
    %2474 = vmatprep.subr.mxu0 0.0
    %2475 = vmatpush1.msra.mxu0 %v2472
    %2476 = vmatprep.subr.mxu0 0.0
    %2477 = vmatpush1.msra.mxu0 0.0
    %2478 = vmatprep.subr.mxu0 0.0
    %2479 = vmatpush1.msra.mxu0 0.0
    %2480 = vmatprep.subr.mxu0 0.0
    %2481 = vmatpush1.msra.mxu0 0.0
    %2482 = vmatprep.subr.mxu0 0.0
    %2483 = vmatpush1.msra.mxu0 0.0
    %2484 = vmatprep.subr.mxu0 0.0
    %2485 = vmatpush1.msra.mxu0 0.0
    %2486 = vmatprep.subr.mxu0 0.0
    %2487 = vmatpush1.msra.mxu0 0.0
    %2488 = vmatprep.subr.mxu0 0.0
    %2489 = vmatpush1.msra.mxu0 0.0
    %2490 = vmatprep.subr.mxu0 0.0
    %2491 = vmatpush1.msra.mxu0 0.0
    %2492 = vmatprep.subr.mxu0 0.0
    %2493 = vmatpush1.msra.mxu0 0.0
    %2494 = vmatprep.subr.mxu0 0.0
    %2495 = vmatpush1.msra.mxu0 0.0
    %2496 = vmatprep.subr.mxu0 0.0
    %2497 = vmatpush1.msra.mxu0 0.0
    %2498 = vmatprep.subr.mxu0 0.0
    %2499 = vmatpush1.msra.mxu0 0.0
    %2500 = vmatprep.subr.mxu0 0.0
    %2501 = vmatpush1.msra.mxu0 0.0
    %2502 = vmatprep.subr.mxu0 0.0
    %2503 = vmatpush1.msra.mxu0 0.0
    %2504 = vmatprep.subr.mxu0 0.0
    %2505 = vmatpush1.msra.mxu0 0.0
    %2506 = vmatprep.subr.mxu0 0.0
    %2507 = vmatpush1.msra.mxu0 0.0
    %2508 = vmatprep.subr.mxu0 0.0
    %2509 = vmatpush1.msra.mxu0 0.0
    %2510 = vmatprep.subr.mxu0 0.0
    %2511 = vmatpush1.msra.mxu0 0.0
    %2512 = vmatprep.subr.mxu0 0.0
    %2513 = vmatpush1.msra.mxu0 0.0
    %2514 = vmatprep.subr.mxu0 0.0
    %2515 = vmatpush1.msra.mxu0 0.0
    %2516 = vmatprep.subr.mxu0 0.0
    %2517 = vmatpush1.msra.mxu0 0.0
    %2518 = vmatprep.subr.mxu0 0.0
    %2519 = vmatpush1.msra.mxu0 0.0
    %2520 = vmatprep.subr.mxu0 0.0
    %2521 = vmatpush1.msra.mxu0 0.0
    %2522 = vmatprep.subr.mxu0 0.0
    %2523 = vmatpush1.msra.mxu0 0.0
    %2524 = vmatprep.subr.mxu0 0.0
    %2525 = vmatpush1.msra.mxu0 0.0
    %2526 = vmatprep.subr.mxu0 0.0
    %2527 = vmatpush1.msra.mxu0 0.0
    %2528 = vmatprep.subr.mxu0 0.0
    %2529 = vmatpush1.msra.mxu0 0.0
    %2530 = vmatprep.subr.mxu0 0.0
    %2531 = vmatpush1.msra.mxu0 0.0
    %2532 = vmatprep.subr.mxu0 0.0
    %2533 = vmatpush1.msra.mxu0 0.0
    %2534 = vmatprep.subr.mxu0 0.0
    %2535 = vmatpush1.msra.mxu0 0.0
    %2536 = vmatprep.subr.mxu0 0.0
    %2537 = vmatpush1.msra.mxu0 0.0
    %2538 = vmatprep.mubr.f32.mxu0 0.0
    %2539 = vmatmul.mubr.f32.gmra.mrb[0].mxu0 %v2468
    %v2540 = vpop.f32.mrb[0].mxu0
    %v2541 = vadd.f32 0.0, %v2540
    %v2542 = vpop.f32.mrb[0].mxu0
    %2543 = vdwg.mxu0
    %v2544 = vld [vmem:[%s11] sm:$0xff]
    %v2545 = vld [vmem:[%s11 + $0x8] sm:$0xff]
    %v2546 = vld [vmem:[%s11 + $0x10] sm:$0xff]
    %v2547 = vld [vmem:[%s11 + $0x18] sm:$0xff]
    %v2548 = vld [vmem:[%s11 + $0x20] sm:$0xff]
    %v2549 = vld [vmem:[%s11 + $0x28] sm:$0xff]
    %v2550 = vld [vmem:[%s11 + $0x30] sm:$0xff]
    %v2551 = vld [vmem:[%s11 + $0x38] sm:$0xff]
    %s2552 = scalar_lea.vmem %s10, 2
    %v2553 = vld [vmem:[%s2552] sm:$0x3]
    %v2555 = vsel %vm2466, %v2553, 0
    %2557 = vmatprep.subr.mxu0 0.0
    %2558 = vmatpush1.msra.mxu0 %v2472
    %2559 = vmatprep.subr.mxu0 0.0
    %2560 = vmatpush1.msra.mxu0 0.0
    %2561 = vmatprep.subr.mxu0 0.0
    %2562 = vmatpush1.msra.mxu0 0.0
    %2563 = vmatprep.subr.mxu0 0.0
    %2564 = vmatpush1.msra.mxu0 0.0
    %2565 = vmatprep.subr.mxu0 0.0
    %2566 = vmatpush1.msra.mxu0 0.0
    %2567 = vmatprep.subr.mxu0 0.0
    %2568 = vmatpush1.msra.mxu0 0.0
    %2569 = vmatprep.subr.mxu0 0.0
    %2570 = vmatpush1.msra.mxu0 0.0
    %2571 = vmatprep.subr.mxu0 0.0
    %2572 = vmatpush1.msra.mxu0 0.0
    %2573 = vmatprep.subr.mxu0 0.0
    %2574 = vmatpush1.msra.mxu0 0.0
    %2575 = vmatprep.subr.mxu0 0.0
    %2576 = vmatpush1.msra.mxu0 0.0
    %2577 = vmatprep.subr.mxu0 0.0
    %2578 = vmatpush1.msra.mxu0 0.0
    %2579 = vmatprep.subr.mxu0 0.0
    %2580 = vmatpush1.msra.mxu0 0.0
    %2581 = vmatprep.subr.mxu0 0.0
    %2582 = vmatpush1.msra.mxu0 0.0
    %2583 = vmatprep.subr.mxu0 0.0
    %2584 = vmatpush1.msra.mxu0 0.0
    %2585 = vmatprep.subr.mxu0 0.0
    %2586 = vmatpush1.msra.mxu0 0.0
    %2587 = vmatprep.subr.mxu0 0.0
    %2588 = vmatpush1.msra.mxu0 0.0
    %2589 = vmatprep.subr.mxu0 0.0
    %2590 = vmatpush1.msra.mxu0 0.0
    %2591 = vmatprep.subr.mxu0 0.0
    %2592 = vmatpush1.msra.mxu0 0.0
    %2593 = vmatprep.subr.mxu0 0.0
    %2594 = vmatpush1.msra.mxu0 0.0
    %2595 = vmatprep.subr.mxu0 0.0
    %2596 = vmatpush1.msra.mxu0 0.0
    %2597 = vmatprep.subr.mxu0 0.0
    %2598 = vmatpush1.msra.mxu0 0.0
    %2599 = vmatprep.subr.mxu0 0.0
    %2600 = vmatpush1.msra.mxu0 0.0
    %2601 = vmatprep.subr.mxu0 0.0
    %2602 = vmatpush1.msra.mxu0 0.0
    %2603 = vmatprep.subr.mxu0 0.0
    %2604 = vmatpush1.msra.mxu0 0.0
    %2605 = vmatprep.subr.mxu0 0.0
    %2606 = vmatpush1.msra.mxu0 0.0
    %2607 = vmatprep.subr.mxu0 0.0
    %2608 = vmatpush1.msra.mxu0 0.0
    %2609 = vmatprep.subr.mxu0 0.0
    %2610 = vmatpush1.msra.mxu0 0.0
    %2611 = vmatprep.subr.mxu0 0.0
    %2612 = vmatpush1.msra.mxu0 0.0
    %2613 = vmatprep.subr.mxu0 0.0
    %2614 = vmatpush1.msra.mxu0 0.0
    %2615 = vmatprep.subr.mxu0 0.0
    %2616 = vmatpush1.msra.mxu0 0.0
    %2617 = vmatprep.subr.mxu0 0.0
    %2618 = vmatpush1.msra.mxu0 0.0
    %2619 = vmatprep.subr.mxu0 0.0
    %2620 = vmatpush1.msra.mxu0 0.0
    %2621 = vmatprep.mubr.f32.mxu0 0.0
    %2622 = vmatmul.mubr.f32.gmra.mrb[0].mxu0 %v2555
    %v2623 = vpop.f32.mrb[0].mxu0
    %v2624 = vadd.f32 0.0, %v2623
    %v2625 = vpop.f32.mrb[0].mxu0
    %2626 = vdwg.mxu0
    %s2627 = scalar_lea.vmem %s11, 64
    %v2628 = vld [vmem:[%s2627] sm:$0xff]
    %v2629 = vld [vmem:[%s2627 + $0x8] sm:$0xff]
    %v2630 = vld [vmem:[%s2627 + $0x10] sm:$0xff]
    %v2631 = vld [vmem:[%s2627 + $0x18] sm:$0xff]
    %v2632 = vld [vmem:[%s2627 + $0x20] sm:$0xff]
    %v2633 = vld [vmem:[%s2627 + $0x28] sm:$0xff]
    %v2634 = vld [vmem:[%s2627 + $0x30] sm:$0xff]
    %v2635 = vld [vmem:[%s2627 + $0x38] sm:$0xff]
    %v2637 = vsel %vm282, %v2624, 0
    %2639 = vmatprep.subr.mxu0 0.0
    %2640 = vmatpush1.msra.mxu0 %v2628
    %2641 = vmatprep.subr.mxu0 0.0
    %2642 = vmatpush1.msra.mxu0 %v2629
    %2643 = vmatprep.subr.mxu0 0.0
    %2644 = vmatpush1.msra.mxu0 %v2630
    %2645 = vmatprep.subr.mxu0 0.0
    %2646 = vmatpush1.msra.mxu0 %v2631
    %2647 = vmatprep.subr.mxu0 0.0
    %2648 = vmatpush1.msra.mxu0 %v2632
    %2649 = vmatprep.subr.mxu0 0.0
    %2650 = vmatpush1.msra.mxu0 %v2633
    %2651 = vmatprep.subr.mxu0 0.0
    %2652 = vmatpush1.msra.mxu0 %v2634
    %2653 = vmatprep.subr.mxu0 0.0
    %2654 = vmatpush1.msra.mxu0 %v2635
    %2655 = vmatprep.subr.mxu0 0.0
    %2656 = vmatpush1.msra.mxu0 0.0
    %2657 = vmatprep.subr.mxu0 0.0
    %2658 = vmatpush1.msra.mxu0 0.0
    %2659 = vmatprep.subr.mxu0 0.0
    %2660 = vmatpush1.msra.mxu0 0.0
    %2661 = vmatprep.subr.mxu0 0.0
    %2662 = vmatpush1.msra.mxu0 0.0
    %2663 = vmatprep.subr.mxu0 0.0
    %2664 = vmatpush1.msra.mxu0 0.0
    %2665 = vmatprep.subr.mxu0 0.0
    %2666 = vmatpush1.msra.mxu0 0.0
    %2667 = vmatprep.subr.mxu0 0.0
    %2668 = vmatpush1.msra.mxu0 0.0
    %2669 = vmatprep.subr.mxu0 0.0
    %2670 = vmatpush1.msra.mxu0 0.0
    %2671 = vmatprep.subr.mxu0 0.0
    %2672 = vmatpush1.msra.mxu0 0.0
    %2673 = vmatprep.subr.mxu0 0.0
    %2674 = vmatpush1.msra.mxu0 0.0
    %2675 = vmatprep.subr.mxu0 0.0
    %2676 = vmatpush1.msra.mxu0 0.0
    %2677 = vmatprep.subr.mxu0 0.0
    %2678 = vmatpush1.msra.mxu0 0.0
    %2679 = vmatprep.subr.mxu0 0.0
    %2680 = vmatpush1.msra.mxu0 0.0
    %2681 = vmatprep.subr.mxu0 0.0
    %2682 = vmatpush1.msra.mxu0 0.0
    %2683 = vmatprep.subr.mxu0 0.0
    %2684 = vmatpush1.msra.mxu0 0.0
    %2685 = vmatprep.subr.mxu0 0.0
    %2686 = vmatpush1.msra.mxu0 0.0
    %2687 = vmatprep.subr.mxu0 0.0
    %2688 = vmatpush1.msra.mxu0 0.0
    %2689 = vmatprep.subr.mxu0 0.0
    %2690 = vmatpush1.msra.mxu0 0.0
    %2691 = vmatprep.subr.mxu0 0.0
    %2692 = vmatpush1.msra.mxu0 0.0
    %2693 = vmatprep.subr.mxu0 0.0
    %2694 = vmatpush1.msra.mxu0 0.0
    %2695 = vmatprep.subr.mxu0 0.0
    %2696 = vmatpush1.msra.mxu0 0.0
    %2697 = vmatprep.subr.mxu0 0.0
    %2698 = vmatpush1.msra.mxu0 0.0
    %2699 = vmatprep.subr.mxu0 0.0
    %2700 = vmatpush1.msra.mxu0 0.0
    %2701 = vmatprep.subr.mxu0 0.0
    %2702 = vmatpush1.msra.mxu0 0.0
    %2703 = vmatprep.mubr.f32.mxu0 0.0
    %2704 = vmatmul.mubr.f32.gmra.mrb[0].mxu0 %v2637
    %v2705 = vpop.f32.mrb[0].mxu0
    %v2706 = vadd.f32 0.0, %v2705
    %v2707 = vpop.f32.mrb[0].mxu0
    %2708 = vdwg.mxu0
    %v2710 = vsel %vm282, %v2541, 0
    %2712 = vmatprep.subr.mxu0 0.0
    %2713 = vmatpush1.msra.mxu0 %v2544
    %2714 = vmatprep.subr.mxu0 0.0
    %2715 = vmatpush1.msra.mxu0 %v2545
    %2716 = vmatprep.subr.mxu0 0.0
    %2717 = vmatpush1.msra.mxu0 %v2546
    %2718 = vmatprep.subr.mxu0 0.0
    %2719 = vmatpush1.msra.mxu0 %v2547
    %2720 = vmatprep.subr.mxu0 0.0
    %2721 = vmatpush1.msra.mxu0 %v2548
    %2722 = vmatprep.subr.mxu0 0.0
    %2723 = vmatpush1.msra.mxu0 %v2549
    %2724 = vmatprep.subr.mxu0 0.0
    %2725 = vmatpush1.msra.mxu0 %v2550
    %2726 = vmatprep.subr.mxu0 0.0
    %2727 = vmatpush1.msra.mxu0 %v2551
    %2728 = vmatprep.subr.mxu0 0.0
    %2729 = vmatpush1.msra.mxu0 0.0
    %2730 = vmatprep.subr.mxu0 0.0
    %2731 = vmatpush1.msra.mxu0 0.0
    %2732 = vmatprep.subr.mxu0 0.0
    %2733 = vmatpush1.msra.mxu0 0.0
    %2734 = vmatprep.subr.mxu0 0.0
    %2735 = vmatpush1.msra.mxu0 0.0
    %2736 = vmatprep.subr.mxu0 0.0
    %2737 = vmatpush1.msra.mxu0 0.0
    %2738 = vmatprep.subr.mxu0 0.0
    %2739 = vmatpush1.msra.mxu0 0.0
    %2740 = vmatprep.subr.mxu0 0.0
    %2741 = vmatpush1.msra.mxu0 0.0
    %2742 = vmatprep.subr.mxu0 0.0
    %2743 = vmatpush1.msra.mxu0 0.0
    %2744 = vmatprep.subr.mxu0 0.0
    %2745 = vmatpush1.msra.mxu0 0.0
    %2746 = vmatprep.subr.mxu0 0.0
    %2747 = vmatpush1.msra.mxu0 0.0
    %2748 = vmatprep.subr.mxu0 0.0
    %2749 = vmatpush1.msra.mxu0 0.0
    %2750 = vmatprep.subr.mxu0 0.0
    %2751 = vmatpush1.msra.mxu0 0.0
    %2752 = vmatprep.subr.mxu0 0.0
    %2753 = vmatpush1.msra.mxu0 0.0
    %2754 = vmatprep.subr.mxu0 0.0
    %2755 = vmatpush1.msra.mxu0 0.0
    %2756 = vmatprep.subr.mxu0 0.0
    %2757 = vmatpush1.msra.mxu0 0.0
    %2758 = vmatprep.subr.mxu0 0.0
    %2759 = vmatpush1.msra.mxu0 0.0
    %2760 = vmatprep.subr.mxu0 0.0
    %2761 = vmatpush1.msra.mxu0 0.0
    %2762 = vmatprep.subr.mxu0 0.0
    %2763 = vmatpush1.msra.mxu0 0.0
    %2764 = vmatprep.subr.mxu0 0.0
    %2765 = vmatpush1.msra.mxu0 0.0
    %2766 = vmatprep.subr.mxu0 0.0
    %2767 = vmatpush1.msra.mxu0 0.0
    %2768 = vmatprep.subr.mxu0 0.0
    %2769 = vmatpush1.msra.mxu0 0.0
    %2770 = vmatprep.subr.mxu0 0.0
    %2771 = vmatpush1.msra.mxu0 0.0
    %2772 = vmatprep.subr.mxu0 0.0
    %2773 = vmatpush1.msra.mxu0 0.0
    %2774 = vmatprep.subr.mxu0 0.0
    %2775 = vmatpush1.msra.mxu0 0.0
    %2776 = vmatprep.mubr.f32.mxu0 0.0
    %2777 = vmatmul.mubr.f32.gmra.mrb[0].mxu0 %v2710
    %v2778 = vpop.f32.mrb[0].mxu0
    %v2779 = vadd.f32 %v2706, %v2778
    %v2780 = vpop.f32.mrb[0].mxu0
    %2781 = vdwg.mxu0
    %v2782 = vld [vmem:[%s12] sm:$0x1]
    %v2784 = vlaneseq
    %v2785 = vshrl.u32 %v2784, 7
    %v2786 = vsub.s32 0, %v2785
    %v2787 = vrot.slane %v2782, %v2786
    %v2789 = vadd.f32 %v2779, %v2787
    %v2790 = vmax.f32 %v2789, 0.0
    %v2791 = vld [vmem:[%s13] sm:$0xff]
    %v2792 = vld [vmem:[%s13 + $0x8] sm:$0xff]
    %v2793 = vld [vmem:[%s13 + $0x10] sm:$0xff]
    %v2794 = vld [vmem:[%s13 + $0x18] sm:$0xff]
    %v2795 = vld [vmem:[%s14] sm:$0x1]
    %v2797 = vlaneseq
    %v2798 = vshrl.u32 %v2797, 7
    %v2799 = vsub.s32 0, %v2798
    %v2800 = vrot.slane %v2795, %v2799
    %v2803 = vsel %vm65, %v2790, 0
    %2805 = vmatprep.subr.mxu0 0.0
    %2806 = vmatpush1.msra.mxu0 %v2791
    %2807 = vmatprep.subr.mxu0 0.0
    %2808 = vmatpush1.msra.mxu0 %v2792
    %2809 = vmatprep.subr.mxu0 0.0
    %2810 = vmatpush1.msra.mxu0 %v2793
    %2811 = vmatprep.subr.mxu0 0.0
    %2812 = vmatpush1.msra.mxu0 %v2794
    %2813 = vmatprep.subr.mxu0 0.0
    %2814 = vmatpush1.msra.mxu0 0.0
    %2815 = vmatprep.subr.mxu0 0.0
    %2816 = vmatpush1.msra.mxu0 0.0
    %2817 = vmatprep.subr.mxu0 0.0
    %2818 = vmatpush1.msra.mxu0 0.0
    %2819 = vmatprep.subr.mxu0 0.0
    %2820 = vmatpush1.msra.mxu0 0.0
    %2821 = vmatprep.subr.mxu0 0.0
    %2822 = vmatpush1.msra.mxu0 0.0
    %2823 = vmatprep.subr.mxu0 0.0
    %2824 = vmatpush1.msra.mxu0 0.0
    %2825 = vmatprep.subr.mxu0 0.0
    %2826 = vmatpush1.msra.mxu0 0.0
    %2827 = vmatprep.subr.mxu0 0.0
    %2828 = vmatpush1.msra.mxu0 0.0
    %2829 = vmatprep.subr.mxu0 0.0
    %2830 = vmatpush1.msra.mxu0 0.0
    %2831 = vmatprep.subr.mxu0 0.0
    %2832 = vmatpush1.msra.mxu0 0.0
    %2833 = vmatprep.subr.mxu0 0.0
    %2834 = vmatpush1.msra.mxu0 0.0
    %2835 = vmatprep.subr.mxu0 0.0
    %2836 = vmatpush1.msra.mxu0 0.0
    %2837 = vmatprep.subr.mxu0 0.0
    %2838 = vmatpush1.msra.mxu0 0.0
    %2839 = vmatprep.subr.mxu0 0.0
    %2840 = vmatpush1.msra.mxu0 0.0
    %2841 = vmatprep.subr.mxu0 0.0
    %2842 = vmatpush1.msra.mxu0 0.0
    %2843 = vmatprep.subr.mxu0 0.0
    %2844 = vmatpush1.msra.mxu0 0.0
    %2845 = vmatprep.subr.mxu0 0.0
    %2846 = vmatpush1.msra.mxu0 0.0
    %2847 = vmatprep.subr.mxu0 0.0
    %2848 = vmatpush1.msra.mxu0 0.0
    %2849 = vmatprep.subr.mxu0 0.0
    %2850 = vmatpush1.msra.mxu0 0.0
    %2851 = vmatprep.subr.mxu0 0.0
    %2852 = vmatpush1.msra.mxu0 0.0
    %2853 = vmatprep.subr.mxu0 0.0
    %2854 = vmatpush1.msra.mxu0 0.0
    %2855 = vmatprep.subr.mxu0 0.0
    %2856 = vmatpush1.msra.mxu0 0.0
    %2857 = vmatprep.subr.mxu0 0.0
    %2858 = vmatpush1.msra.mxu0 0.0
    %2859 = vmatprep.subr.mxu0 0.0
    %2860 = vmatpush1.msra.mxu0 0.0
    %2861 = vmatprep.subr.mxu0 0.0
    %2862 = vmatpush1.msra.mxu0 0.0
    %2863 = vmatprep.subr.mxu0 0.0
    %2864 = vmatpush1.msra.mxu0 0.0
    %2865 = vmatprep.subr.mxu0 0.0
    %2866 = vmatpush1.msra.mxu0 0.0
    %2867 = vmatprep.subr.mxu0 0.0
    %2868 = vmatpush1.msra.mxu0 0.0
    %2869 = vmatprep.mubr.f32.mxu0 0.0
    %2870 = vmatmul.mubr.f32.gmra.mrb[0].mxu0 %v2803
    %v2871 = vpop.f32.mrb[0].mxu0
    %v2872 = vadd.f32 %v2800, %v2871
    %v2873 = vpop.f32.mrb[0].mxu0
    %2874 = vdwg.mxu0
    %v2875 = vmax.f32 %v2872, 0.0
    %v2876 = vld [vmem:[%s15] sm:$0xff]
    %v2877 = vld [vmem:[%s15 + $0x8] sm:$0xff]
    %v2878 = vld [vmem:[%s15 + $0x10] sm:$0xff]
    %v2879 = vld [vmem:[%s15 + $0x18] sm:$0xff]
    %v2880 = vld [vmem:[%s16] sm:$0x1]
    %v2882 = vlaneseq
    %v2883 = vshrl.u32 %v2882, 7
    %v2884 = vsub.s32 0, %v2883
    %v2885 = vrot.slane %v2880, %v2884
    %v2888 = vsel %vm65, %v2875, 0
    %2890 = vmatprep.subr.mxu0 0.0
    %2891 = vmatpush1.msra.mxu0 %v2876
    %2892 = vmatprep.subr.mxu0 0.0
    %2893 = vmatpush1.msra.mxu0 %v2877
    %2894 = vmatprep.subr.mxu0 0.0
    %2895 = vmatpush1.msra.mxu0 %v2878
    %2896 = vmatprep.subr.mxu0 0.0
    %2897 = vmatpush1.msra.mxu0 %v2879
    %2898 = vmatprep.subr.mxu0 0.0
    %2899 = vmatpush1.msra.mxu0 0.0
    %2900 = vmatprep.subr.mxu0 0.0
    %2901 = vmatpush1.msra.mxu0 0.0
    %2902 = vmatprep.subr.mxu0 0.0
    %2903 = vmatpush1.msra.mxu0 0.0
    %2904 = vmatprep.subr.mxu0 0.0
    %2905 = vmatpush1.msra.mxu0 0.0
    %2906 = vmatprep.subr.mxu0 0.0
    %2907 = vmatpush1.msra.mxu0 0.0
    %2908 = vmatprep.subr.mxu0 0.0
    %2909 = vmatpush1.msra.mxu0 0.0
    %2910 = vmatprep.subr.mxu0 0.0
    %2911 = vmatpush1.msra.mxu0 0.0
    %2912 = vmatprep.subr.mxu0 0.0
    %2913 = vmatpush1.msra.mxu0 0.0
    %2914 = vmatprep.subr.mxu0 0.0
    %2915 = vmatpush1.msra.mxu0 0.0
    %2916 = vmatprep.subr.mxu0 0.0
    %2917 = vmatpush1.msra.mxu0 0.0
    %2918 = vmatprep.subr.mxu0 0.0
    %2919 = vmatpush1.msra.mxu0 0.0
    %2920 = vmatprep.subr.mxu0 0.0
    %2921 = vmatpush1.msra.mxu0 0.0
    %2922 = vmatprep.subr.mxu0 0.0
    %2923 = vmatpush1.msra.mxu0 0.0
    %2924 = vmatprep.subr.mxu0 0.0
    %2925 = vmatpush1.msra.mxu0 0.0
    %2926 = vmatprep.subr.mxu0 0.0
    %2927 = vmatpush1.msra.mxu0 0.0
    %2928 = vmatprep.subr.mxu0 0.0
    %2929 = vmatpush1.msra.mxu0 0.0
    %2930 = vmatprep.subr.mxu0 0.0
    %2931 = vmatpush1.msra.mxu0 0.0
    %2932 = vmatprep.subr.mxu0 0.0
    %2933 = vmatpush1.msra.mxu0 0.0
    %2934 = vmatprep.subr.mxu0 0.0
    %2935 = vmatpush1.msra.mxu0 0.0
    %2936 = vmatprep.subr.mxu0 0.0
    %2937 = vmatpush1.msra.mxu0 0.0
    %2938 = vmatprep.subr.mxu0 0.0
    %2939 = vmatpush1.msra.mxu0 0.0
    %2940 = vmatprep.subr.mxu0 0.0
    %2941 = vmatpush1.msra.mxu0 0.0
    %2942 = vmatprep.subr.mxu0 0.0
    %2943 = vmatpush1.msra.mxu0 0.0
    %2944 = vmatprep.subr.mxu0 0.0
    %2945 = vmatpush1.msra.mxu0 0.0
    %2946 = vmatprep.subr.mxu0 0.0
    %2947 = vmatpush1.msra.mxu0 0.0
    %2948 = vmatprep.subr.mxu0 0.0
    %2949 = vmatpush1.msra.mxu0 0.0
    %2950 = vmatprep.subr.mxu0 0.0
    %2951 = vmatpush1.msra.mxu0 0.0
    %2952 = vmatprep.subr.mxu0 0.0
    %2953 = vmatpush1.msra.mxu0 0.0
    %2954 = vmatprep.mubr.f32.mxu0 0.0
    %2955 = vmatmul.mubr.f32.gmra.mrb[0].mxu0 %v2888
    %v2956 = vpop.f32.mrb[0].mxu0
    %v2957 = vadd.f32 %v2885, %v2956
    %v2958 = vpop.f32.mrb[0].mxu0
    %2959 = vdwg.mxu0
    %v2960 = vtanh.pop %v2957
    %vm2961 = vcmask 123904
    %2962 = vst.msk [vmem:[#allocation2] sm:$0x3] %vm2961, %v2960
    // Predicated region
    $region70: #{tpu_custom_call.1} parent=1 // pred_check
      _
    $region71: #{tpu_custom_call.1} parent=1 // pred_check_branch
      %2964 = sbr.rel (0) target = $region73
    $region72: #{tpu_custom_call.1} parent=1 // pred_region
      %s2966 = ssub.s32 32, 32
      %2967 = vsyncadd [#allocation3], %s2966
      %s2969 = sshll.u32 [#allocation2], 4
      %s2970 = int_to_ptr.vmem [resolvable:$true] %s2969
      %2972 = dma.vmem_to_hbm [thread:$0]  %s2970, 32, %s17, [#allocation3]
    $region73: #{tpu_custom_call.1} parent=1 // pred_fallthru
      _
    // Predicated region
    $region74: #{tpu_custom_call.1} parent=1 // pred_check
      _
    $region75: #{tpu_custom_call.1} parent=1 // pred_check_branch
      %2974 = sbr.rel (0) target = $region77
    $region76: #{tpu_custom_call.1} parent=1 // pred_region
      %2975 = dma.done [#allocation3], 32
    $region77: #{tpu_custom_call.1} parent=1 // pred_fallthru
      _
    %2976 = vsyncpa [#allocation3], 1

</llo_original>
